<compile_context>
chip_gen: v6e
topology: v6e:2x2x1
jax: 0.10.0
libtpu: 0.0.40
codegen_flags: <defaults>
</compile_context>

<pallas_src>
import jax
import jax.numpy as jnp
from jax.experimental import pallas as pl

FINAL_TOTAL_CLASS = 101
IMG_FEATS = 2048
IN_FEATS = FINAL_TOTAL_CLASS + IMG_FEATS      # 2149
HIDDEN = 512
OUT_PAD = 128                                 # lane-dense output (true out = 1)


def _leaky_relu_02(x):
    return jnp.where(x > 0, x, 0.2 * x)


def _mlp_kernel(x_ref, rb_ref, w1_ref, b1_ref, w2_ref, b2_ref,
                w3_ref, b3_ref, w4_ref, b4_ref, out_ref):
    f32 = jnp.float32
    # Linear(2149 -> 512) + LeakyReLU(0.2); the embedding part of the matmul
    # arrives pre-contracted as the per-row bias rb_ref (see module comment).
    h = jnp.dot(x_ref[...], w1_ref[...].astype(f32), preferred_element_type=f32)
    h = _leaky_relu_02(h + rb_ref[...] + b1_ref[...])
    # Linear(512 -> 512) + Dropout(0.4) + LeakyReLU(0.2)
    # TODO(synk): Dropout(0.4) implemented as inference-mode identity
    # (train-mode dropout is stochastic; add pltpu.prng_* masking if needed).
    h = jnp.dot(h, w2_ref[...].astype(f32), preferred_element_type=f32)
    h = _leaky_relu_02(h + b2_ref[...])
    # Linear(512 -> 512) + Dropout(0.4) + LeakyReLU(0.2)
    h = jnp.dot(h, w3_ref[...].astype(f32), preferred_element_type=f32)
    h = _leaky_relu_02(h + b3_ref[...])
    # Linear(512 -> 1): VPU multiply + lane reduction (no zero-padded MXU dot).
    v = jnp.sum(h * w4_ref[...].astype(f32), axis=-1, keepdims=True)   # (B, 1)
    out_ref[...] = v + b4_ref[...]        # (B,1) + (1,128) -> lane-dense (B,128)


def prepare_discriminator(params):
    """One-time parameter preprocessing (outside the per-call hot path)."""
    emb_table, w1, b1, w2, b2, w3, b3, w4, b4 = params
    f32, bf16 = jnp.float32, jnp.bfloat16
    w1q = w1.astype(bf16)
    # Fold the embedding branch:  emb(labels) @ W1[2048:]  ==  T[labels]
    t_emb = jnp.dot(emb_table.astype(f32), w1q[IMG_FEATS:, :].astype(f32),
                    precision=jax.lax.Precision.HIGHEST)         # (101, 512) f32
    return dict(
        t_emb=t_emb,
        w1=w1q[:IMG_FEATS, :],                                   # (2048, 512) bf16
        b1=b1.reshape(1, HIDDEN).astype(f32),
        w2=w2.astype(bf16), b2=b2.reshape(1, HIDDEN).astype(f32),
        w3=w3.astype(bf16), b3=b3.reshape(1, HIDDEN).astype(f32),
        w4=w4.reshape(HIDDEN, 1).T.astype(bf16),                 # (1, 512) bf16
        b4=jnp.broadcast_to(b4.reshape(1, 1).astype(f32), (1, OUT_PAD)),
    )


def discriminator_forward(img, labels, prep):
    """img: (B, 2048) f32, labels: (B,) int32. Returns (B, 1) f32."""
    B = img.shape[0]
    x = img.reshape(B, IMG_FEATS).astype(jnp.float32)
    row_bias = jnp.take(prep["t_emb"], labels, axis=0)           # (B, 512) f32

    full = lambda shape: pl.BlockSpec(shape, lambda: (0,) * len(shape))
    out = pl.pallas_call(
        _mlp_kernel,
        out_shape=jax.ShapeDtypeStruct((B, OUT_PAD), jnp.float32),
        in_specs=[
            full((B, IMG_FEATS)), full((B, HIDDEN)),
            full((IMG_FEATS, HIDDEN)), full((1, HIDDEN)),
            full((HIDDEN, HIDDEN)), full((1, HIDDEN)),
            full((HIDDEN, HIDDEN)), full((1, HIDDEN)),
            full((1, HIDDEN)), full((1, OUT_PAD)),
        ],
        out_specs=full((B, OUT_PAD)),
    )(x, row_bias, prep["w1"], prep["b1"], prep["w2"], prep["b2"],
      prep["w3"], prep["b3"], prep["w4"], prep["b4"])

    return out[:, :1]


def init_params(key):
    """Deterministic parameter init (PyTorch-style uniform fan-in bounds)."""
    ks = jax.random.split(key, 9)

    def linear(kw, kb, fan_in, fan_out):
        bound = 1.0 / (fan_in ** 0.5)
        w = jax.random.uniform(kw, (fan_in, fan_out), jnp.float32, -bound, bound)
        b = jax.random.uniform(kb, (fan_out,), jnp.float32, -bound, bound)
        return w, b

    emb_table = jax.random.normal(ks[0], (FINAL_TOTAL_CLASS, FINAL_TOTAL_CLASS),
                                  jnp.float32)
    w1, b1 = linear(ks[1], ks[2], IN_FEATS, HIDDEN)
    w2, b2 = linear(ks[3], ks[4], HIDDEN, HIDDEN)
    w3, b3 = linear(ks[5], ks[6], HIDDEN, HIDDEN)
    w4, b4 = linear(ks[7], ks[8], HIDDEN, 1)
    return (emb_table, w1, b1, w2, b2, w3, b3, w4, b4)


if __name__ == "__main__":
    key = jax.random.PRNGKey(0)
    k_img, k_lab, k_par = jax.random.split(key, 3)

    B = 4
    img = jax.random.normal(k_img, (B, IMG_FEATS), jnp.float32)
    labels = jax.random.randint(k_lab, (B,), 0, FINAL_TOTAL_CLASS, jnp.int32)
    params = init_params(k_par)
    prep = prepare_discriminator(params)

    validity = discriminator_forward(img, labels, prep)
    jax.block_until_ready(validity)

    # pure-JAX reference using the same (bf16-quantized) weights
    emb_table, w1, b1, w2, b2, w3, b3, w4, b4 = params
    qb = lambda w: w.astype(jnp.bfloat16).astype(jnp.float32)
    hp = jax.lax.Precision.HIGHEST
    emb = jnp.take(emb_table, labels, axis=0)
    d_in = jnp.concatenate([img, emb], axis=-1)
    h = _leaky_relu_02(jnp.dot(d_in, qb(w1), precision=hp) + b1)
    h = _leaky_relu_02(jnp.dot(h, qb(w2), precision=hp) + b2)
    h = _leaky_relu_02(jnp.dot(h, qb(w3), precision=hp) + b3)
    ref = jnp.dot(h, qb(w4), precision=hp) + b4

    assert validity.shape == (B, 1)
    err = float(jnp.max(jnp.abs(validity - ref)))
    assert jnp.allclose(validity, ref, atol=1e-3, rtol=1e-3), err

    print("KERNEL_OK")
</pallas_src>

<mosaic_0001>
module attributes {stable_mosaic.version = 11 : i64} {
  func.func @_mlp_kernel(%arg0: memref<4x2048xf32, #tpu.memory_space<vmem>>, %arg1: memref<4x512xf32, #tpu.memory_space<vmem>>, %arg2: memref<2048x512xbf16, #tpu.memory_space<vmem>>, %arg3: memref<1x512xf32, #tpu.memory_space<vmem>>, %arg4: memref<512x512xbf16, #tpu.memory_space<vmem>>, %arg5: memref<1x512xf32, #tpu.memory_space<vmem>>, %arg6: memref<512x512xbf16, #tpu.memory_space<vmem>>, %arg7: memref<1x512xf32, #tpu.memory_space<vmem>>, %arg8: memref<1x512xbf16, #tpu.memory_space<vmem>>, %arg9: memref<1x128xf32, #tpu.memory_space<vmem>>, %arg10: memref<4x128xf32, #tpu.memory_space<vmem>>) attributes {dimension_semantics = [], scalar_prefetch = 0 : i64, scratch_operands = 0 : i64, tpu.core_type = #tpu.core_type<tc>} {
    %c0 = arith.constant 0 : index
    %c0_0 = arith.constant 0 : index
    %0 = vector.load %arg0[%c0, %c0_0] : memref<4x2048xf32, #tpu.memory_space<vmem>>, vector<4x2048xf32>
    %c0_1 = arith.constant 0 : index
    %c0_2 = arith.constant 0 : index
    %1 = vector.load %arg2[%c0_1, %c0_2] : memref<2048x512xbf16, #tpu.memory_space<vmem>>, vector<2048x512xbf16>
    %2 = arith.extf %1 : vector<2048x512xbf16> to vector<2048x512xf32>
    %cst = arith.constant dense<0.000000e+00> : vector<4x512xf32>
    %3 = tpu.matmul %0, %2, %cst {dimension_numbers = #tpu.dot_dimension_numbers<[1], [0], [0], [1], [0, 0, 1, 1], [], []>} : vector<4x2048xf32>, vector<2048x512xf32>, vector<4x512xf32> -> vector<4x512xf32>
    %c0_3 = arith.constant 0 : index
    %c0_4 = arith.constant 0 : index
    %4 = vector.load %arg1[%c0_3, %c0_4] : memref<4x512xf32, #tpu.memory_space<vmem>>, vector<4x512xf32>
    %5 = arith.addf %3, %4 : vector<4x512xf32>
    %c0_5 = arith.constant 0 : index
    %c0_6 = arith.constant 0 : index
    %6 = vector.load %arg3[%c0_5, %c0_6] : memref<1x512xf32, #tpu.memory_space<vmem>>, vector<1x512xf32>
    %7 = vector.broadcast %6 : vector<1x512xf32> to vector<4x512xf32>
    %8 = arith.addf %5, %7 : vector<4x512xf32>
    %cst_7 = arith.constant 0.000000e+00 : f32
    %9 = vector.broadcast %cst_7 : f32 to vector<4x512xf32>
    %10 = arith.cmpf ogt, %8, %9 : vector<4x512xf32>
    %cst_8 = arith.constant 2.000000e-01 : f32
    %11 = vector.broadcast %cst_8 : f32 to vector<4x512xf32>
    %12 = arith.mulf %11, %8 : vector<4x512xf32>
    %13 = arith.select %10, %8, %12 : vector<4x512xi1>, vector<4x512xf32>
    %c0_9 = arith.constant 0 : index
    %c0_10 = arith.constant 0 : index
    %14 = vector.load %arg4[%c0_9, %c0_10] : memref<512x512xbf16, #tpu.memory_space<vmem>>, vector<512x512xbf16>
    %15 = arith.extf %14 : vector<512x512xbf16> to vector<512x512xf32>
    %cst_11 = arith.constant dense<0.000000e+00> : vector<4x512xf32>
    %16 = tpu.matmul %13, %15, %cst_11 {dimension_numbers = #tpu.dot_dimension_numbers<[1], [0], [0], [1], [0, 0, 1, 1], [], []>} : vector<4x512xf32>, vector<512x512xf32>, vector<4x512xf32> -> vector<4x512xf32>
    %c0_12 = arith.constant 0 : index
    %c0_13 = arith.constant 0 : index
    %17 = vector.load %arg5[%c0_12, %c0_13] : memref<1x512xf32, #tpu.memory_space<vmem>>, vector<1x512xf32>
    %18 = vector.broadcast %17 : vector<1x512xf32> to vector<4x512xf32>
    %19 = arith.addf %16, %18 : vector<4x512xf32>
    %cst_14 = arith.constant 0.000000e+00 : f32
    %20 = vector.broadcast %cst_14 : f32 to vector<4x512xf32>
    %21 = arith.cmpf ogt, %19, %20 : vector<4x512xf32>
    %cst_15 = arith.constant 2.000000e-01 : f32
    %22 = vector.broadcast %cst_15 : f32 to vector<4x512xf32>
    %23 = arith.mulf %22, %19 : vector<4x512xf32>
    %24 = arith.select %21, %19, %23 : vector<4x512xi1>, vector<4x512xf32>
    %c0_16 = arith.constant 0 : index
    %c0_17 = arith.constant 0 : index
    %25 = vector.load %arg6[%c0_16, %c0_17] : memref<512x512xbf16, #tpu.memory_space<vmem>>, vector<512x512xbf16>
    %26 = arith.extf %25 : vector<512x512xbf16> to vector<512x512xf32>
    %cst_18 = arith.constant dense<0.000000e+00> : vector<4x512xf32>
    %27 = tpu.matmul %24, %26, %cst_18 {dimension_numbers = #tpu.dot_dimension_numbers<[1], [0], [0], [1], [0, 0, 1, 1], [], []>} : vector<4x512xf32>, vector<512x512xf32>, vector<4x512xf32> -> vector<4x512xf32>
    %c0_19 = arith.constant 0 : index
    %c0_20 = arith.constant 0 : index
    %28 = vector.load %arg7[%c0_19, %c0_20] : memref<1x512xf32, #tpu.memory_space<vmem>>, vector<1x512xf32>
    %29 = vector.broadcast %28 : vector<1x512xf32> to vector<4x512xf32>
    %30 = arith.addf %27, %29 : vector<4x512xf32>
    %cst_21 = arith.constant 0.000000e+00 : f32
    %31 = vector.broadcast %cst_21 : f32 to vector<4x512xf32>
    %32 = arith.cmpf ogt, %30, %31 : vector<4x512xf32>
    %cst_22 = arith.constant 2.000000e-01 : f32
    %33 = vector.broadcast %cst_22 : f32 to vector<4x512xf32>
    %34 = arith.mulf %33, %30 : vector<4x512xf32>
    %35 = arith.select %32, %30, %34 : vector<4x512xi1>, vector<4x512xf32>
    %c0_23 = arith.constant 0 : index
    %c0_24 = arith.constant 0 : index
    %36 = vector.load %arg8[%c0_23, %c0_24] : memref<1x512xbf16, #tpu.memory_space<vmem>>, vector<1x512xbf16>
    %37 = arith.extf %36 : vector<1x512xbf16> to vector<1x512xf32>
    %38 = vector.broadcast %37 : vector<1x512xf32> to vector<4x512xf32>
    %39 = arith.mulf %35, %38 : vector<4x512xf32>
    %cst_25 = arith.constant dense<0.000000e+00> : vector<4xf32>
    %40 = vector.multi_reduction <add>, %39, %cst_25 [1] : vector<4x512xf32> to vector<4xf32>
    %41 = vector.shape_cast %40 : vector<4xf32> to vector<4x1xf32>
    %c0_26 = arith.constant 0 : index
    %c0_27 = arith.constant 0 : index
    %42 = vector.load %arg9[%c0_26, %c0_27] : memref<1x128xf32, #tpu.memory_space<vmem>>, vector<1x128xf32>
    %43 = vector.broadcast %41 : vector<4x1xf32> to vector<4x128xf32>
    %44 = vector.broadcast %42 : vector<1x128xf32> to vector<4x128xf32>
    %45 = arith.addf %43, %44 : vector<4x128xf32>
    %c0_28 = arith.constant 0 : index
    %c0_29 = arith.constant 0 : index
    %46 = vector.load %arg10[%c0_28, %c0_29] : memref<4x128xf32, #tpu.memory_space<vmem>>, vector<4x128xf32>
    tpu.vector_store %arg10[%c0_28, %c0_29], %45 {strides = array<i32>} : memref<4x128xf32, #tpu.memory_space<vmem>>, vector<4x128xf32>,
    return
  }
}

</mosaic_0001>

<llo_original>
// kernel: tpu_custom_call.1
$region0: #{tpu_custom_call.1}
  #allocation0 [shape = 'u32[]', space=smem, size = 0x4, offset = 0x4, fixed_abs, tag = 'smem constant byte address 0x4 - core index']
  #allocation1 [shape = 'u32[144,128]{1,0:T(1,128)}', space=vmem, size = 0x12000, scoped, tag = 'internal scratch']
  %s0 = inlined_call_operand.hbm [shape: f32[4,2048], index: 0, kind: input, shape index: {}]
  %s1 = inlined_call_operand.hbm [shape: f32[4,512], index: 1, kind: input, shape index: {}]
  %s2 = inlined_call_operand.hbm [shape: bf16[2048,512], index: 2, kind: input, shape index: {}]
  %s3 = inlined_call_operand.hbm [shape: f32[1,512], index: 3, kind: input, shape index: {}]
  %s4 = inlined_call_operand.hbm [shape: bf16[512,512], index: 4, kind: input, shape index: {}]
  %s5 = inlined_call_operand.hbm [shape: f32[1,512], index: 5, kind: input, shape index: {}]
  %s6 = inlined_call_operand.hbm [shape: bf16[512,512], index: 6, kind: input, shape index: {}]
  %s7 = inlined_call_operand.hbm [shape: f32[1,512], index: 7, kind: input, shape index: {}]
  %s8 = inlined_call_operand.hbm [shape: bf16[1,512], index: 8, kind: input, shape index: {}]
  %s9 = inlined_call_operand.hbm [shape: f32[1,128], index: 9, kind: input, shape index: {}]
  %s10 = inlined_call_operand.hbm [shape: f32[4,128], index: 10, kind: output, shape index: {}]
  %s11 = sld [smem:[#allocation0]]
  $region90: #{tpu_custom_call.1} parent=0
    _
  %s13 = ssub.s32 1, %s11
  %s14 = scalar_select 0, %s13, %s11
  $region1: #{tpu_custom_call.1} parent=0
    #allocation2 [shape = 'u8[32768]{0}', space=vmem, size = 0x8000, scoped, tag = 'input window, operand 0, single buffered']
    #allocation3 [shape = 's32[1]{0}', space=sflag, size = 0x4, scoped, tag = 'scoped memory for tpu_custom_call.1']
    #allocation4 [shape = 's32[1]{0}', space=sflag, size = 0x4, scoped, tag = 'scoped memory for tpu_custom_call.1']
    #allocation5 [shape = 'u8[8192]{0}', space=vmem, size = 0x2000, scoped, tag = 'input window, operand 1, single buffered']
    #allocation6 [shape = 's32[1]{0}', space=sflag, size = 0x4, scoped, tag = 'scoped memory for tpu_custom_call.1']
    #allocation7 [shape = 'u8[2097152]{0}', space=vmem, size = 0x200000, scoped, tag = 'input window, operand 2, single buffered']
    #allocation8 [shape = 'u8[2048]{0}', space=vmem, size = 0x800, scoped, tag = 'input window, operand 3, single buffered']
    #allocation9 [shape = 's32[1]{0}', space=sflag, size = 0x4, scoped, tag = 'scoped memory for tpu_custom_call.1']
    #allocation10 [shape = 'u8[524288]{0}', space=vmem, size = 0x80000, scoped, tag = 'input window, operand 4, single buffered']
    #allocation11 [shape = 'u8[2048]{0}', space=vmem, size = 0x800, scoped, tag = 'input window, operand 5, single buffered']
    #allocation12 [shape = 's32[1]{0}', space=sflag, size = 0x4, scoped, tag = 'scoped memory for tpu_custom_call.1']
    #allocation13 [shape = 'u8[524288]{0}', space=vmem, size = 0x80000, scoped, tag = 'input window, operand 6, single buffered']
    #allocation14 [shape = 'u8[2048]{0}', space=vmem, size = 0x800, scoped, tag = 'input window, operand 7, single buffered']
    #allocation15 [shape = 's32[1]{0}', space=sflag, size = 0x4, scoped, tag = 'scoped memory for tpu_custom_call.1']
    #allocation16 [shape = 'u8[2048]{0}', space=vmem, size = 0x800, scoped, tag = 'input window, operand 8, single buffered']
    #allocation17 [shape = 'u8[512]{0}', space=vmem, size = 0x400, scoped, tag = 'input window, operand 9, single buffered']
    #allocation18 [shape = 's32[1]{0}', space=sflag, size = 0x4, scoped, tag = 'scoped memory for tpu_custom_call.1']
    #allocation19 [shape = 'u8[2048]{0}', space=vmem, size = 0x800, scoped, tag = 'output window, operand 0, single buffered']
    %15 = vsyncpa [#allocation3], 0
    %16 = vsyncpa [#allocation6], 0
    %17 = vsyncpa [#allocation9], 0
    %18 = vsyncpa [#allocation12], 0
    %19 = vsyncpa [#allocation15], 0
    %20 = vsyncpa [#allocation18], 0
    %21 = vsyncpa [#allocation4], 0
    // Predicated region
    $region2: #{tpu_custom_call.1} parent=1 // pred_check
      _
    $region3: #{tpu_custom_call.1} parent=1 // pred_check_branch
      %23 = sbr.rel (0) target = $region5
    $region4: #{tpu_custom_call.1} parent=1 // pred_region
      %s25 = ssub.s32 1024, 1024
      %26 = vsyncadd [#allocation3], %s25
      %s28 = sshll.u32 [#allocation2], 4
      %s29 = int_to_ptr.vmem [resolvable:$true] %s28
      %31 = dma.hbm_to_vmem [thread:$0]  %s0, 1024, %s29, [#allocation3]
    $region5: #{tpu_custom_call.1} parent=1 // pred_fallthru
      _
    // Predicated region
    $region6: #{tpu_custom_call.1} parent=1 // pred_check
      _
    $region7: #{tpu_custom_call.1} parent=1 // pred_check_branch
      %33 = sbr.rel (0) target = $region9
    $region8: #{tpu_custom_call.1} parent=1 // pred_region
      %s35 = ssub.s32 256, 256
      %36 = vsyncadd [#allocation6], %s35
      %s38 = sshll.u32 [#allocation5], 4
      %s39 = int_to_ptr.vmem [resolvable:$true] %s38
      %41 = dma.hbm_to_vmem [thread:$0]  %s1, 256, %s39, [#allocation6]
    $region9: #{tpu_custom_call.1} parent=1 // pred_fallthru
      _
    // Predicated region
    $region10: #{tpu_custom_call.1} parent=1 // pred_check
      _
    $region11: #{tpu_custom_call.1} parent=1 // pred_check_branch
      %43 = sbr.rel (0) target = $region13
    $region12: #{tpu_custom_call.1} parent=1 // pred_region
      %s45 = ssub.s32 65536, 65536
      %46 = vsyncadd [#allocation6], %s45
      %s47 = sshll.u32 [#allocation7], 4
      %s48 = int_to_ptr.vmem [resolvable:$true] %s47
      %53 = dma.hbm_to_vmem [thread:$0]  %s2, 65536, %s48, [#allocation6], 256, 256, 16
    $region13: #{tpu_custom_call.1} parent=1 // pred_fallthru
      _
    // Predicated region
    $region14: #{tpu_custom_call.1} parent=1 // pred_check
      _
    $region15: #{tpu_custom_call.1} parent=1 // pred_check_branch
      %55 = sbr.rel (0) target = $region17
    $region16: #{tpu_custom_call.1} parent=1 // pred_region
      %s57 = ssub.s32 64, 64
      %58 = vsyncadd [#allocation9], %s57
      %s60 = sshll.u32 [#allocation8], 4
      %s61 = int_to_ptr.vmem [resolvable:$true] %s60
      %63 = dma.hbm_to_vmem [thread:$0]  %s3, 64, %s61, [#allocation9]
    $region17: #{tpu_custom_call.1} parent=1 // pred_fallthru
      _
    // Predicated region
    $region18: #{tpu_custom_call.1} parent=1 // pred_check
      _
    $region19: #{tpu_custom_call.1} parent=1 // pred_check_branch
      %65 = sbr.rel (0) target = $region21
    $region20: #{tpu_custom_call.1} parent=1 // pred_region
      %s67 = ssub.s32 16384, 16384
      %68 = vsyncadd [#allocation9], %s67
      %s69 = sshll.u32 [#allocation10], 4
      %s70 = int_to_ptr.vmem [resolvable:$true] %s69
      %75 = dma.hbm_to_vmem [thread:$0]  %s4, 16384, %s70, [#allocation9], 256, 256, 16
    $region21: #{tpu_custom_call.1} parent=1 // pred_fallthru
      _
    // Predicated region
    $region22: #{tpu_custom_call.1} parent=1 // pred_check
      _
    $region23: #{tpu_custom_call.1} parent=1 // pred_check_branch
      %77 = sbr.rel (0) target = $region25
    $region24: #{tpu_custom_call.1} parent=1 // pred_region
      %s79 = ssub.s32 64, 64
      %80 = vsyncadd [#allocation12], %s79
      %s82 = sshll.u32 [#allocation11], 4
      %s83 = int_to_ptr.vmem [resolvable:$true] %s82
      %85 = dma.hbm_to_vmem [thread:$0]  %s5, 64, %s83, [#allocation12]
    $region25: #{tpu_custom_call.1} parent=1 // pred_fallthru
      _
    // Predicated region
    $region26: #{tpu_custom_call.1} parent=1 // pred_check
      _
    $region27: #{tpu_custom_call.1} parent=1 // pred_check_branch
      %87 = sbr.rel (0) target = $region29
    $region28: #{tpu_custom_call.1} parent=1 // pred_region
      %s89 = ssub.s32 16384, 16384
      %90 = vsyncadd [#allocation12], %s89
      %s91 = sshll.u32 [#allocation13], 4
      %s92 = int_to_ptr.vmem [resolvable:$true] %s91
      %97 = dma.hbm_to_vmem [thread:$0]  %s6, 16384, %s92, [#allocation12], 256, 256, 16
    $region29: #{tpu_custom_call.1} parent=1 // pred_fallthru
      _
    // Predicated region
    $region30: #{tpu_custom_call.1} parent=1 // pred_check
      _
    $region31: #{tpu_custom_call.1} parent=1 // pred_check_branch
      %99 = sbr.rel (0) target = $region33
    $region32: #{tpu_custom_call.1} parent=1 // pred_region
      %s101 = ssub.s32 64, 64
      %102 = vsyncadd [#allocation15], %s101
      %s104 = sshll.u32 [#allocation14], 4
      %s105 = int_to_ptr.vmem [resolvable:$true] %s104
      %107 = dma.hbm_to_vmem [thread:$0]  %s7, 64, %s105, [#allocation15]
    $region33: #{tpu_custom_call.1} parent=1 // pred_fallthru
      _
    // Predicated region
    $region34: #{tpu_custom_call.1} parent=1 // pred_check
      _
    $region35: #{tpu_custom_call.1} parent=1 // pred_check_branch
      %109 = sbr.rel (0) target = $region37
    $region36: #{tpu_custom_call.1} parent=1 // pred_region
      %s111 = ssub.s32 64, 64
      %112 = vsyncadd [#allocation15], %s111
      %s114 = sshll.u32 [#allocation16], 4
      %s115 = int_to_ptr.vmem [resolvable:$true] %s114
      %117 = dma.hbm_to_vmem [thread:$0]  %s8, 64, %s115, [#allocation15]
    $region37: #{tpu_custom_call.1} parent=1 // pred_fallthru
      _
    // Predicated region
    $region38: #{tpu_custom_call.1} parent=1 // pred_check
      _
    $region39: #{tpu_custom_call.1} parent=1 // pred_check_branch
      %119 = sbr.rel (0) target = $region41
    $region40: #{tpu_custom_call.1} parent=1 // pred_region
      %s121 = ssub.s32 16, 16
      %122 = vsyncadd [#allocation18], %s121
      %s124 = sshll.u32 [#allocation17], 4
      %s125 = int_to_ptr.vmem [resolvable:$true] %s124
      %127 = dma.hbm_to_vmem [thread:$0]  %s9, 16, %s125, [#allocation18]
    $region41: #{tpu_custom_call.1} parent=1 // pred_fallthru
      _
    // Predicated region
    $region42: #{tpu_custom_call.1} parent=1 // pred_check
      _
    $region43: #{tpu_custom_call.1} parent=1 // pred_check_branch
      %129 = sbr.rel (0) target = $region45
    $region44: #{tpu_custom_call.1} parent=1 // pred_region
      %130 = dma.done [#allocation3], 1024
    $region45: #{tpu_custom_call.1} parent=1 // pred_fallthru
      _
    // Predicated region
    $region46: #{tpu_custom_call.1} parent=1 // pred_check
      _
    $region47: #{tpu_custom_call.1} parent=1 // pred_check_branch
      %132 = sbr.rel (0) target = $region49
    $region48: #{tpu_custom_call.1} parent=1 // pred_region
      %133 = dma.done [#allocation6], 256
    $region49: #{tpu_custom_call.1} parent=1 // pred_fallthru
      _
    // Predicated region
    $region50: #{tpu_custom_call.1} parent=1 // pred_check
      _
    $region51: #{tpu_custom_call.1} parent=1 // pred_check_branch
      %135 = sbr.rel (0) target = $region53
    $region52: #{tpu_custom_call.1} parent=1 // pred_region
      %136 = dma.done [#allocation6], 65536
    $region53: #{tpu_custom_call.1} parent=1 // pred_fallthru
      _
    // Predicated region
    $region54: #{tpu_custom_call.1} parent=1 // pred_check
      _
    $region55: #{tpu_custom_call.1} parent=1 // pred_check_branch
      %138 = sbr.rel (0) target = $region57
    $region56: #{tpu_custom_call.1} parent=1 // pred_region
      %139 = dma.done [#allocation9], 64
    $region57: #{tpu_custom_call.1} parent=1 // pred_fallthru
      _
    // Predicated region
    $region58: #{tpu_custom_call.1} parent=1 // pred_check
      _
    $region59: #{tpu_custom_call.1} parent=1 // pred_check_branch
      %141 = sbr.rel (0) target = $region61
    $region60: #{tpu_custom_call.1} parent=1 // pred_region
      %142 = dma.done [#allocation9], 16384
    $region61: #{tpu_custom_call.1} parent=1 // pred_fallthru
      _
    // Predicated region
    $region62: #{tpu_custom_call.1} parent=1 // pred_check
      _
    $region63: #{tpu_custom_call.1} parent=1 // pred_check_branch
      %144 = sbr.rel (0) target = $region65
    $region64: #{tpu_custom_call.1} parent=1 // pred_region
      %145 = dma.done [#allocation12], 64
    $region65: #{tpu_custom_call.1} parent=1 // pred_fallthru
      _
    // Predicated region
    $region66: #{tpu_custom_call.1} parent=1 // pred_check
      _
    $region67: #{tpu_custom_call.1} parent=1 // pred_check_branch
      %147 = sbr.rel (0) target = $region69
    $region68: #{tpu_custom_call.1} parent=1 // pred_region
      %148 = dma.done [#allocation12], 16384
    $region69: #{tpu_custom_call.1} parent=1 // pred_fallthru
      _
    // Predicated region
    $region70: #{tpu_custom_call.1} parent=1 // pred_check
      _
    $region71: #{tpu_custom_call.1} parent=1 // pred_check_branch
      %150 = sbr.rel (0) target = $region73
    $region72: #{tpu_custom_call.1} parent=1 // pred_region
      %151 = dma.done [#allocation15], 64
    $region73: #{tpu_custom_call.1} parent=1 // pred_fallthru
      _
    // Predicated region
    $region74: #{tpu_custom_call.1} parent=1 // pred_check
      _
    $region75: #{tpu_custom_call.1} parent=1 // pred_check_branch
      %153 = sbr.rel (0) target = $region77
    $region76: #{tpu_custom_call.1} parent=1 // pred_region
      %154 = dma.done [#allocation15], 64
    $region77: #{tpu_custom_call.1} parent=1 // pred_fallthru
      _
    // Predicated region
    $region78: #{tpu_custom_call.1} parent=1 // pred_check
      _
    $region79: #{tpu_custom_call.1} parent=1 // pred_check_branch
      %156 = sbr.rel (0) target = $region81
    $region80: #{tpu_custom_call.1} parent=1 // pred_region
      %157 = dma.done [#allocation18], 16
    $region81: #{tpu_custom_call.1} parent=1 // pred_fallthru
      _
    %v158 = vld [vmem:[#allocation2] sm:$0xff]
    %v159 = vld [vmem:[#allocation2 + $0x8] sm:$0xff]
    %v160 = vld [vmem:[#allocation2 + $0x10] sm:$0xff]
    %v161 = vld [vmem:[#allocation2 + $0x18] sm:$0xff]
    %v162 = vld [vmem:[#allocation2 + $0x20] sm:$0xff]
    %v163 = vld [vmem:[#allocation2 + $0x28] sm:$0xff]
    %v164 = vld [vmem:[#allocation2 + $0x30] sm:$0xff]
    %v165 = vld [vmem:[#allocation2 + $0x38] sm:$0xff]
    %v166 = vld [vmem:[#allocation7] sm:$0xff]
    %v167 = vld [vmem:[#allocation7 + $0x8] sm:$0xff]
    %v168 = vld [vmem:[#allocation7 + $0x10] sm:$0xff]
    %v169 = vld [vmem:[#allocation7 + $0x18] sm:$0xff]
    %v170 = vld [vmem:[#allocation7 + $0x20] sm:$0xff]
    %v171 = vld [vmem:[#allocation7 + $0x28] sm:$0xff]
    %v172 = vld [vmem:[#allocation7 + $0x30] sm:$0xff]
    %v173 = vld [vmem:[#allocation7 + $0x38] sm:$0xff]
    %v174 = vld [vmem:[#allocation7 + $0x40] sm:$0xff]
    %v175 = vld [vmem:[#allocation7 + $0x48] sm:$0xff]
    %v176 = vld [vmem:[#allocation7 + $0x50] sm:$0xff]
    %v177 = vld [vmem:[#allocation7 + $0x58] sm:$0xff]
    %v178 = vld [vmem:[#allocation7 + $0x60] sm:$0xff]
    %v179 = vld [vmem:[#allocation7 + $0x68] sm:$0xff]
    %v180 = vld [vmem:[#allocation7 + $0x70] sm:$0xff]
    %v181 = vld [vmem:[#allocation7 + $0x78] sm:$0xff]
    %v182 = vld [vmem:[#allocation7 + $0x80] sm:$0xff]
    %v183 = vld [vmem:[#allocation7 + $0x88] sm:$0xff]
    %v184 = vld [vmem:[#allocation7 + $0x90] sm:$0xff]
    %v185 = vld [vmem:[#allocation7 + $0x98] sm:$0xff]
    %v186 = vld [vmem:[#allocation7 + $0xa0] sm:$0xff]
    %v187 = vld [vmem:[#allocation7 + $0xa8] sm:$0xff]
    %v188 = vld [vmem:[#allocation7 + $0xb0] sm:$0xff]
    %v189 = vld [vmem:[#allocation7 + $0xb8] sm:$0xff]
    %v190 = vld [vmem:[#allocation7 + $0xc0] sm:$0xff]
    %v191 = vld [vmem:[#allocation7 + $0xc8] sm:$0xff]
    %v192 = vld [vmem:[#allocation7 + $0xd0] sm:$0xff]
    %v193 = vld [vmem:[#allocation7 + $0xd8] sm:$0xff]
    %v194 = vld [vmem:[#allocation7 + $0xe0] sm:$0xff]
    %v195 = vld [vmem:[#allocation7 + $0xe8] sm:$0xff]
    %v196 = vld [vmem:[#allocation7 + $0xf0] sm:$0xff]
    %v197 = vld [vmem:[#allocation7 + $0xf8] sm:$0xff]
    %v198 = vld [vmem:[#allocation7 + $0x100] sm:$0xff]
    %v199 = vld [vmem:[#allocation7 + $0x108] sm:$0xff]
    %v200 = vld [vmem:[#allocation7 + $0x110] sm:$0xff]
    %v201 = vld [vmem:[#allocation7 + $0x118] sm:$0xff]
    %v202 = vld [vmem:[#allocation7 + $0x120] sm:$0xff]
    %v203 = vld [vmem:[#allocation7 + $0x128] sm:$0xff]
    %v204 = vld [vmem:[#allocation7 + $0x130] sm:$0xff]
    %v205 = vld [vmem:[#allocation7 + $0x138] sm:$0xff]
    %v206 = vld [vmem:[#allocation7 + $0x140] sm:$0xff]
    %v207 = vld [vmem:[#allocation7 + $0x148] sm:$0xff]
    %v208 = vld [vmem:[#allocation7 + $0x150] sm:$0xff]
    %v209 = vld [vmem:[#allocation7 + $0x158] sm:$0xff]
    %v210 = vld [vmem:[#allocation7 + $0x160] sm:$0xff]
    %v211 = vld [vmem:[#allocation7 + $0x168] sm:$0xff]
    %v212 = vld [vmem:[#allocation7 + $0x170] sm:$0xff]
    %v213 = vld [vmem:[#allocation7 + $0x178] sm:$0xff]
    %v214 = vld [vmem:[#allocation7 + $0x180] sm:$0xff]
    %v215 = vld [vmem:[#allocation7 + $0x188] sm:$0xff]
    %v216 = vld [vmem:[#allocation7 + $0x190] sm:$0xff]
    %v217 = vld [vmem:[#allocation7 + $0x198] sm:$0xff]
    %v218 = vld [vmem:[#allocation7 + $0x1a0] sm:$0xff]
    %v219 = vld [vmem:[#allocation7 + $0x1a8] sm:$0xff]
    %v220 = vld [vmem:[#allocation7 + $0x1b0] sm:$0xff]
    %v221 = vld [vmem:[#allocation7 + $0x1b8] sm:$0xff]
    %v222 = vld [vmem:[#allocation7 + $0x1c0] sm:$0xff]
    %v223 = vld [vmem:[#allocation7 + $0x1c8] sm:$0xff]
    %v224 = vld [vmem:[#allocation7 + $0x1d0] sm:$0xff]
    %v225 = vld [vmem:[#allocation7 + $0x1d8] sm:$0xff]
    %v226 = vld [vmem:[#allocation7 + $0x1e0] sm:$0xff]
    %v227 = vld [vmem:[#allocation7 + $0x1e8] sm:$0xff]
    %v228 = vld [vmem:[#allocation7 + $0x1f0] sm:$0xff]
    %v229 = vld [vmem:[#allocation7 + $0x1f8] sm:$0xff]
    %v230 = vld [vmem:[#allocation7 + $0x200] sm:$0xff]
    %v231 = vld [vmem:[#allocation7 + $0x208] sm:$0xff]
    %v232 = vld [vmem:[#allocation7 + $0x210] sm:$0xff]
    %v233 = vld [vmem:[#allocation7 + $0x218] sm:$0xff]
    %v234 = vld [vmem:[#allocation7 + $0x220] sm:$0xff]
    %v235 = vld [vmem:[#allocation7 + $0x228] sm:$0xff]
    %v236 = vld [vmem:[#allocation7 + $0x230] sm:$0xff]
    %v237 = vld [vmem:[#allocation7 + $0x238] sm:$0xff]
    %v238 = vld [vmem:[#allocation7 + $0x240] sm:$0xff]
    %v239 = vld [vmem:[#allocation7 + $0x248] sm:$0xff]
    %v240 = vld [vmem:[#allocation7 + $0x250] sm:$0xff]
    %v241 = vld [vmem:[#allocation7 + $0x258] sm:$0xff]
    %v242 = vld [vmem:[#allocation7 + $0x260] sm:$0xff]
    %v243 = vld [vmem:[#allocation7 + $0x268] sm:$0xff]
    %v244 = vld [vmem:[#allocation7 + $0x270] sm:$0xff]
    %v245 = vld [vmem:[#allocation7 + $0x278] sm:$0xff]
    %v246 = vld [vmem:[#allocation7 + $0x280] sm:$0xff]
    %v247 = vld [vmem:[#allocation7 + $0x288] sm:$0xff]
    %v248 = vld [vmem:[#allocation7 + $0x290] sm:$0xff]
    %v249 = vld [vmem:[#allocation7 + $0x298] sm:$0xff]
    %v250 = vld [vmem:[#allocation7 + $0x2a0] sm:$0xff]
    %v251 = vld [vmem:[#allocation7 + $0x2a8] sm:$0xff]
    %v252 = vld [vmem:[#allocation7 + $0x2b0] sm:$0xff]
    %v253 = vld [vmem:[#allocation7 + $0x2b8] sm:$0xff]
    %v254 = vld [vmem:[#allocation7 + $0x2c0] sm:$0xff]
    %v255 = vld [vmem:[#allocation7 + $0x2c8] sm:$0xff]
    %v256 = vld [vmem:[#allocation7 + $0x2d0] sm:$0xff]
    %v257 = vld [vmem:[#allocation7 + $0x2d8] sm:$0xff]
    %v258 = vld [vmem:[#allocation7 + $0x2e0] sm:$0xff]
    %v259 = vld [vmem:[#allocation7 + $0x2e8] sm:$0xff]
    %v260 = vld [vmem:[#allocation7 + $0x2f0] sm:$0xff]
    %v261 = vld [vmem:[#allocation7 + $0x2f8] sm:$0xff]
    %v262 = vld [vmem:[#allocation7 + $0x300] sm:$0xff]
    %v263 = vld [vmem:[#allocation7 + $0x308] sm:$0xff]
    %v264 = vld [vmem:[#allocation7 + $0x310] sm:$0xff]
    %v265 = vld [vmem:[#allocation7 + $0x318] sm:$0xff]
    %v266 = vld [vmem:[#allocation7 + $0x320] sm:$0xff]
    %v267 = vld [vmem:[#allocation7 + $0x328] sm:$0xff]
    %v268 = vld [vmem:[#allocation7 + $0x330] sm:$0xff]
    %v269 = vld [vmem:[#allocation7 + $0x338] sm:$0xff]
    %v270 = vld [vmem:[#allocation7 + $0x340] sm:$0xff]
    %v271 = vld [vmem:[#allocation7 + $0x348] sm:$0xff]
    %v272 = vld [vmem:[#allocation7 + $0x350] sm:$0xff]
    %v273 = vld [vmem:[#allocation7 + $0x358] sm:$0xff]
    %v274 = vld [vmem:[#allocation7 + $0x360] sm:$0xff]
    %v275 = vld [vmem:[#allocation7 + $0x368] sm:$0xff]
    %v276 = vld [vmem:[#allocation7 + $0x370] sm:$0xff]
    %v277 = vld [vmem:[#allocation7 + $0x378] sm:$0xff]
    %v278 = vld [vmem:[#allocation7 + $0x380] sm:$0xff]
    %v279 = vld [vmem:[#allocation7 + $0x388] sm:$0xff]
    %v280 = vld [vmem:[#allocation7 + $0x390] sm:$0xff]
    %v281 = vld [vmem:[#allocation7 + $0x398] sm:$0xff]
    %v282 = vld [vmem:[#allocation7 + $0x3a0] sm:$0xff]
    %v283 = vld [vmem:[#allocation7 + $0x3a8] sm:$0xff]
    %v284 = vld [vmem:[#allocation7 + $0x3b0] sm:$0xff]
    %v285 = vld [vmem:[#allocation7 + $0x3b8] sm:$0xff]
    %v286 = vld [vmem:[#allocation7 + $0x3c0] sm:$0xff]
    %v287 = vld [vmem:[#allocation7 + $0x3c8] sm:$0xff]
    %v288 = vld [vmem:[#allocation7 + $0x3d0] sm:$0xff]
    %v289 = vld [vmem:[#allocation7 + $0x3d8] sm:$0xff]
    %v290 = vld [vmem:[#allocation7 + $0x3e0] sm:$0xff]
    %v291 = vld [vmem:[#allocation7 + $0x3e8] sm:$0xff]
    %v292 = vld [vmem:[#allocation7 + $0x3f0] sm:$0xff]
    %v293 = vld [vmem:[#allocation7 + $0x3f8] sm:$0xff]
    %v294 = vld [vmem:[#allocation7 + $0x400] sm:$0xff]
    %v295 = vld [vmem:[#allocation7 + $0x408] sm:$0xff]
    %v296 = vld [vmem:[#allocation7 + $0x410] sm:$0xff]
    %v297 = vld [vmem:[#allocation7 + $0x418] sm:$0xff]
    %v298 = vld [vmem:[#allocation7 + $0x420] sm:$0xff]
    %v299 = vld [vmem:[#allocation7 + $0x428] sm:$0xff]
    %v300 = vld [vmem:[#allocation7 + $0x430] sm:$0xff]
    %v301 = vld [vmem:[#allocation7 + $0x438] sm:$0xff]
    %v302 = vld [vmem:[#allocation7 + $0x440] sm:$0xff]
    %v303 = vld [vmem:[#allocation7 + $0x448] sm:$0xff]
    %v304 = vld [vmem:[#allocation7 + $0x450] sm:$0xff]
    %v305 = vld [vmem:[#allocation7 + $0x458] sm:$0xff]
    %v306 = vld [vmem:[#allocation7 + $0x460] sm:$0xff]
    %v307 = vld [vmem:[#allocation7 + $0x468] sm:$0xff]
    %v308 = vld [vmem:[#allocation7 + $0x470] sm:$0xff]
    %v309 = vld [vmem:[#allocation7 + $0x478] sm:$0xff]
    %v310 = vld [vmem:[#allocation7 + $0x480] sm:$0xff]
    %v311 = vld [vmem:[#allocation7 + $0x488] sm:$0xff]
    %v312 = vld [vmem:[#allocation7 + $0x490] sm:$0xff]
    %v313 = vld [vmem:[#allocation7 + $0x498] sm:$0xff]
    %v314 = vld [vmem:[#allocation7 + $0x4a0] sm:$0xff]
    %v315 = vld [vmem:[#allocation7 + $0x4a8] sm:$0xff]
    %v316 = vld [vmem:[#allocation7 + $0x4b0] sm:$0xff]
    %v317 = vld [vmem:[#allocation7 + $0x4b8] sm:$0xff]
    %v318 = vld [vmem:[#allocation7 + $0x4c0] sm:$0xff]
    %v319 = vld [vmem:[#allocation7 + $0x4c8] sm:$0xff]
    %v320 = vld [vmem:[#allocation7 + $0x4d0] sm:$0xff]
    %v321 = vld [vmem:[#allocation7 + $0x4d8] sm:$0xff]
    %v322 = vld [vmem:[#allocation7 + $0x4e0] sm:$0xff]
    %v323 = vld [vmem:[#allocation7 + $0x4e8] sm:$0xff]
    %v324 = vld [vmem:[#allocation7 + $0x4f0] sm:$0xff]
    %v325 = vld [vmem:[#allocation7 + $0x4f8] sm:$0xff]
    %v326 = vld [vmem:[#allocation7 + $0x500] sm:$0xff]
    %v327 = vld [vmem:[#allocation7 + $0x508] sm:$0xff]
    %v328 = vld [vmem:[#allocation7 + $0x510] sm:$0xff]
    %v329 = vld [vmem:[#allocation7 + $0x518] sm:$0xff]
    %v330 = vld [vmem:[#allocation7 + $0x520] sm:$0xff]
    %v331 = vld [vmem:[#allocation7 + $0x528] sm:$0xff]
    %v332 = vld [vmem:[#allocation7 + $0x530] sm:$0xff]
    %v333 = vld [vmem:[#allocation7 + $0x538] sm:$0xff]
    %v334 = vld [vmem:[#allocation7 + $0x540] sm:$0xff]
    %v335 = vld [vmem:[#allocation7 + $0x548] sm:$0xff]
    %v336 = vld [vmem:[#allocation7 + $0x550] sm:$0xff]
    %v337 = vld [vmem:[#allocation7 + $0x558] sm:$0xff]
    %v338 = vld [vmem:[#allocation7 + $0x560] sm:$0xff]
    %v339 = vld [vmem:[#allocation7 + $0x568] sm:$0xff]
    %v340 = vld [vmem:[#allocation7 + $0x570] sm:$0xff]
    %v341 = vld [vmem:[#allocation7 + $0x578] sm:$0xff]
    %v342 = vld [vmem:[#allocation7 + $0x580] sm:$0xff]
    %v343 = vld [vmem:[#allocation7 + $0x588] sm:$0xff]
    %v344 = vld [vmem:[#allocation7 + $0x590] sm:$0xff]
    %v345 = vld [vmem:[#allocation7 + $0x598] sm:$0xff]
    %v346 = vld [vmem:[#allocation7 + $0x5a0] sm:$0xff]
    %v347 = vld [vmem:[#allocation7 + $0x5a8] sm:$0xff]
    %v348 = vld [vmem:[#allocation7 + $0x5b0] sm:$0xff]
    %v349 = vld [vmem:[#allocation7 + $0x5b8] sm:$0xff]
    %v350 = vld [vmem:[#allocation7 + $0x5c0] sm:$0xff]
    %v351 = vld [vmem:[#allocation7 + $0x5c8] sm:$0xff]
    %v352 = vld [vmem:[#allocation7 + $0x5d0] sm:$0xff]
    %v353 = vld [vmem:[#allocation7 + $0x5d8] sm:$0xff]
    %v354 = vld [vmem:[#allocation7 + $0x5e0] sm:$0xff]
    %v355 = vld [vmem:[#allocation7 + $0x5e8] sm:$0xff]
    %v356 = vld [vmem:[#allocation7 + $0x5f0] sm:$0xff]
    %v357 = vld [vmem:[#allocation7 + $0x5f8] sm:$0xff]
    %v358 = vld [vmem:[#allocation7 + $0x600] sm:$0xff]
    %v359 = vld [vmem:[#allocation7 + $0x608] sm:$0xff]
    %v360 = vld [vmem:[#allocation7 + $0x610] sm:$0xff]
    %v361 = vld [vmem:[#allocation7 + $0x618] sm:$0xff]
    %v362 = vld [vmem:[#allocation7 + $0x620] sm:$0xff]
    %v363 = vld [vmem:[#allocation7 + $0x628] sm:$0xff]
    %v364 = vld [vmem:[#allocation7 + $0x630] sm:$0xff]
    %v365 = vld [vmem:[#allocation7 + $0x638] sm:$0xff]
    %v366 = vld [vmem:[#allocation7 + $0x640] sm:$0xff]
    %v367 = vld [vmem:[#allocation7 + $0x648] sm:$0xff]
    %v368 = vld [vmem:[#allocation7 + $0x650] sm:$0xff]
    %v369 = vld [vmem:[#allocation7 + $0x658] sm:$0xff]
    %v370 = vld [vmem:[#allocation7 + $0x660] sm:$0xff]
    %v371 = vld [vmem:[#allocation7 + $0x668] sm:$0xff]
    %v372 = vld [vmem:[#allocation7 + $0x670] sm:$0xff]
    %v373 = vld [vmem:[#allocation7 + $0x678] sm:$0xff]
    %v374 = vld [vmem:[#allocation7 + $0x680] sm:$0xff]
    %v375 = vld [vmem:[#allocation7 + $0x688] sm:$0xff]
    %v376 = vld [vmem:[#allocation7 + $0x690] sm:$0xff]
    %v377 = vld [vmem:[#allocation7 + $0x698] sm:$0xff]
    %v378 = vld [vmem:[#allocation7 + $0x6a0] sm:$0xff]
    %v379 = vld [vmem:[#allocation7 + $0x6a8] sm:$0xff]
    %v380 = vld [vmem:[#allocation7 + $0x6b0] sm:$0xff]
    %v381 = vld [vmem:[#allocation7 + $0x6b8] sm:$0xff]
    %v382 = vld [vmem:[#allocation7 + $0x6c0] sm:$0xff]
    %v383 = vld [vmem:[#allocation7 + $0x6c8] sm:$0xff]
    %v384 = vld [vmem:[#allocation7 + $0x6d0] sm:$0xff]
    %v385 = vld [vmem:[#allocation7 + $0x6d8] sm:$0xff]
    %v386 = vld [vmem:[#allocation7 + $0x6e0] sm:$0xff]
    %v387 = vld [vmem:[#allocation7 + $0x6e8] sm:$0xff]
    %v388 = vld [vmem:[#allocation7 + $0x6f0] sm:$0xff]
    %v389 = vld [vmem:[#allocation7 + $0x6f8] sm:$0xff]
    %v390 = vld [vmem:[#allocation7 + $0x700] sm:$0xff]
    %v391 = vld [vmem:[#allocation7 + $0x708] sm:$0xff]
    %v392 = vld [vmem:[#allocation7 + $0x710] sm:$0xff]
    %v393 = vld [vmem:[#allocation7 + $0x718] sm:$0xff]
    %v394 = vld [vmem:[#allocation7 + $0x720] sm:$0xff]
    %v395 = vld [vmem:[#allocation7 + $0x728] sm:$0xff]
    %v396 = vld [vmem:[#allocation7 + $0x730] sm:$0xff]
    %v397 = vld [vmem:[#allocation7 + $0x738] sm:$0xff]
    %v398 = vld [vmem:[#allocation7 + $0x740] sm:$0xff]
    %v399 = vld [vmem:[#allocation7 + $0x748] sm:$0xff]
    %v400 = vld [vmem:[#allocation7 + $0x750] sm:$0xff]
    %v401 = vld [vmem:[#allocation7 + $0x758] sm:$0xff]
    %v402 = vld [vmem:[#allocation7 + $0x760] sm:$0xff]
    %v403 = vld [vmem:[#allocation7 + $0x768] sm:$0xff]
    %v404 = vld [vmem:[#allocation7 + $0x770] sm:$0xff]
    %v405 = vld [vmem:[#allocation7 + $0x778] sm:$0xff]
    %v406 = vld [vmem:[#allocation7 + $0x780] sm:$0xff]
    %v407 = vld [vmem:[#allocation7 + $0x788] sm:$0xff]
    %v408 = vld [vmem:[#allocation7 + $0x790] sm:$0xff]
    %v409 = vld [vmem:[#allocation7 + $0x798] sm:$0xff]
    %v410 = vld [vmem:[#allocation7 + $0x7a0] sm:$0xff]
    %v411 = vld [vmem:[#allocation7 + $0x7a8] sm:$0xff]
    %v412 = vld [vmem:[#allocation7 + $0x7b0] sm:$0xff]
    %v413 = vld [vmem:[#allocation7 + $0x7b8] sm:$0xff]
    %v414 = vld [vmem:[#allocation7 + $0x7c0] sm:$0xff]
    %v415 = vld [vmem:[#allocation7 + $0x7c8] sm:$0xff]
    %v416 = vld [vmem:[#allocation7 + $0x7d0] sm:$0xff]
    %v417 = vld [vmem:[#allocation7 + $0x7d8] sm:$0xff]
    %v418 = vld [vmem:[#allocation7 + $0x7e0] sm:$0xff]
    %v419 = vld [vmem:[#allocation7 + $0x7e8] sm:$0xff]
    %v420 = vld [vmem:[#allocation7 + $0x7f0] sm:$0xff]
    %v421 = vld [vmem:[#allocation7 + $0x7f8] sm:$0xff]
    %v422 = vld [vmem:[#allocation7 + $0x800] sm:$0xff]
    %v423 = vld [vmem:[#allocation7 + $0x808] sm:$0xff]
    %v424 = vld [vmem:[#allocation7 + $0x810] sm:$0xff]
    %v425 = vld [vmem:[#allocation7 + $0x818] sm:$0xff]
    %v426 = vld [vmem:[#allocation7 + $0x820] sm:$0xff]
    %v427 = vld [vmem:[#allocation7 + $0x828] sm:$0xff]
    %v428 = vld [vmem:[#allocation7 + $0x830] sm:$0xff]
    %v429 = vld [vmem:[#allocation7 + $0x838] sm:$0xff]
    %v430 = vld [vmem:[#allocation7 + $0x840] sm:$0xff]
    %v431 = vld [vmem:[#allocation7 + $0x848] sm:$0xff]
    %v432 = vld [vmem:[#allocation7 + $0x850] sm:$0xff]
    %v433 = vld [vmem:[#allocation7 + $0x858] sm:$0xff]
    %v434 = vld [vmem:[#allocation7 + $0x860] sm:$0xff]
    %v435 = vld [vmem:[#allocation7 + $0x868] sm:$0xff]
    %v436 = vld [vmem:[#allocation7 + $0x870] sm:$0xff]
    %v437 = vld [vmem:[#allocation7 + $0x878] sm:$0xff]
    %v438 = vld [vmem:[#allocation7 + $0x880] sm:$0xff]
    %v439 = vld [vmem:[#allocation7 + $0x888] sm:$0xff]
    %v440 = vld [vmem:[#allocation7 + $0x890] sm:$0xff]
    %v441 = vld [vmem:[#allocation7 + $0x898] sm:$0xff]
    %v442 = vld [vmem:[#allocation7 + $0x8a0] sm:$0xff]
    %v443 = vld [vmem:[#allocation7 + $0x8a8] sm:$0xff]
    %v444 = vld [vmem:[#allocation7 + $0x8b0] sm:$0xff]
    %v445 = vld [vmem:[#allocation7 + $0x8b8] sm:$0xff]
    %v446 = vld [vmem:[#allocation7 + $0x8c0] sm:$0xff]
    %v447 = vld [vmem:[#allocation7 + $0x8c8] sm:$0xff]
    %v448 = vld [vmem:[#allocation7 + $0x8d0] sm:$0xff]
    %v449 = vld [vmem:[#allocation7 + $0x8d8] sm:$0xff]
    %v450 = vld [vmem:[#allocation7 + $0x8e0] sm:$0xff]
    %v451 = vld [vmem:[#allocation7 + $0x8e8] sm:$0xff]
    %v452 = vld [vmem:[#allocation7 + $0x8f0] sm:$0xff]
    %v453 = vld [vmem:[#allocation7 + $0x8f8] sm:$0xff]
    %v454 = vld [vmem:[#allocation7 + $0x900] sm:$0xff]
    %v455 = vld [vmem:[#allocation7 + $0x908] sm:$0xff]
    %v456 = vld [vmem:[#allocation7 + $0x910] sm:$0xff]
    %v457 = vld [vmem:[#allocation7 + $0x918] sm:$0xff]
    %v458 = vld [vmem:[#allocation7 + $0x920] sm:$0xff]
    %v459 = vld [vmem:[#allocation7 + $0x928] sm:$0xff]
    %v460 = vld [vmem:[#allocation7 + $0x930] sm:$0xff]
    %v461 = vld [vmem:[#allocation7 + $0x938] sm:$0xff]
    %v462 = vld [vmem:[#allocation7 + $0x940] sm:$0xff]
    %v463 = vld [vmem:[#allocation7 + $0x948] sm:$0xff]
    %v464 = vld [vmem:[#allocation7 + $0x950] sm:$0xff]
    %v465 = vld [vmem:[#allocation7 + $0x958] sm:$0xff]
    %v466 = vld [vmem:[#allocation7 + $0x960] sm:$0xff]
    %v467 = vld [vmem:[#allocation7 + $0x968] sm:$0xff]
    %v468 = vld [vmem:[#allocation7 + $0x970] sm:$0xff]
    %v469 = vld [vmem:[#allocation7 + $0x978] sm:$0xff]
    %v470 = vld [vmem:[#allocation7 + $0x980] sm:$0xff]
    %v471 = vld [vmem:[#allocation7 + $0x988] sm:$0xff]
    %v472 = vld [vmem:[#allocation7 + $0x990] sm:$0xff]
    %v473 = vld [vmem:[#allocation7 + $0x998] sm:$0xff]
    %v474 = vld [vmem:[#allocation7 + $0x9a0] sm:$0xff]
    %v475 = vld [vmem:[#allocation7 + $0x9a8] sm:$0xff]
    %v476 = vld [vmem:[#allocation7 + $0x9b0] sm:$0xff]
    %v477 = vld [vmem:[#allocation7 + $0x9b8] sm:$0xff]
    %v478 = vld [vmem:[#allocation7 + $0x9c0] sm:$0xff]
    %v479 = vld [vmem:[#allocation7 + $0x9c8] sm:$0xff]
    %v480 = vld [vmem:[#allocation7 + $0x9d0] sm:$0xff]
    %v481 = vld [vmem:[#allocation7 + $0x9d8] sm:$0xff]
    %v482 = vld [vmem:[#allocation7 + $0x9e0] sm:$0xff]
    %v483 = vld [vmem:[#allocation7 + $0x9e8] sm:$0xff]
    %v484 = vld [vmem:[#allocation7 + $0x9f0] sm:$0xff]
    %v485 = vld [vmem:[#allocation7 + $0x9f8] sm:$0xff]
    %v486 = vld [vmem:[#allocation7 + $0xa00] sm:$0xff]
    %v487 = vld [vmem:[#allocation7 + $0xa08] sm:$0xff]
    %v488 = vld [vmem:[#allocation7 + $0xa10] sm:$0xff]
    %v489 = vld [vmem:[#allocation7 + $0xa18] sm:$0xff]
    %v490 = vld [vmem:[#allocation7 + $0xa20] sm:$0xff]
    %v491 = vld [vmem:[#allocation7 + $0xa28] sm:$0xff]
    %v492 = vld [vmem:[#allocation7 + $0xa30] sm:$0xff]
    %v493 = vld [vmem:[#allocation7 + $0xa38] sm:$0xff]
    %v494 = vld [vmem:[#allocation7 + $0xa40] sm:$0xff]
    %v495 = vld [vmem:[#allocation7 + $0xa48] sm:$0xff]
    %v496 = vld [vmem:[#allocation7 + $0xa50] sm:$0xff]
    %v497 = vld [vmem:[#allocation7 + $0xa58] sm:$0xff]
    %v498 = vld [vmem:[#allocation7 + $0xa60] sm:$0xff]
    %v499 = vld [vmem:[#allocation7 + $0xa68] sm:$0xff]
    %v500 = vld [vmem:[#allocation7 + $0xa70] sm:$0xff]
    %v501 = vld [vmem:[#allocation7 + $0xa78] sm:$0xff]
    %v502 = vld [vmem:[#allocation7 + $0xa80] sm:$0xff]
    %v503 = vld [vmem:[#allocation7 + $0xa88] sm:$0xff]
    %v504 = vld [vmem:[#allocation7 + $0xa90] sm:$0xff]
    %v505 = vld [vmem:[#allocation7 + $0xa98] sm:$0xff]
    %v506 = vld [vmem:[#allocation7 + $0xaa0] sm:$0xff]
    %v507 = vld [vmem:[#allocation7 + $0xaa8] sm:$0xff]
    %v508 = vld [vmem:[#allocation7 + $0xab0] sm:$0xff]
    %v509 = vld [vmem:[#allocation7 + $0xab8] sm:$0xff]
    %v510 = vld [vmem:[#allocation7 + $0xac0] sm:$0xff]
    %v511 = vld [vmem:[#allocation7 + $0xac8] sm:$0xff]
    %v512 = vld [vmem:[#allocation7 + $0xad0] sm:$0xff]
    %v513 = vld [vmem:[#allocation7 + $0xad8] sm:$0xff]
    %v514 = vld [vmem:[#allocation7 + $0xae0] sm:$0xff]
    %v515 = vld [vmem:[#allocation7 + $0xae8] sm:$0xff]
    %v516 = vld [vmem:[#allocation7 + $0xaf0] sm:$0xff]
    %v517 = vld [vmem:[#allocation7 + $0xaf8] sm:$0xff]
    %v518 = vld [vmem:[#allocation7 + $0xb00] sm:$0xff]
    %v519 = vld [vmem:[#allocation7 + $0xb08] sm:$0xff]
    %v520 = vld [vmem:[#allocation7 + $0xb10] sm:$0xff]
    %v521 = vld [vmem:[#allocation7 + $0xb18] sm:$0xff]
    %v522 = vld [vmem:[#allocation7 + $0xb20] sm:$0xff]
    %v523 = vld [vmem:[#allocation7 + $0xb28] sm:$0xff]
    %v524 = vld [vmem:[#allocation7 + $0xb30] sm:$0xff]
    %v525 = vld [vmem:[#allocation7 + $0xb38] sm:$0xff]
    %v526 = vld [vmem:[#allocation7 + $0xb40] sm:$0xff]
    %v527 = vld [vmem:[#allocation7 + $0xb48] sm:$0xff]
    %v528 = vld [vmem:[#allocation7 + $0xb50] sm:$0xff]
    %v529 = vld [vmem:[#allocation7 + $0xb58] sm:$0xff]
    %v530 = vld [vmem:[#allocation7 + $0xb60] sm:$0xff]
    %v531 = vld [vmem:[#allocation7 + $0xb68] sm:$0xff]
    %v532 = vld [vmem:[#allocation7 + $0xb70] sm:$0xff]
    %v533 = vld [vmem:[#allocation7 + $0xb78] sm:$0xff]
    %v534 = vld [vmem:[#allocation7 + $0xb80] sm:$0xff]
    %v535 = vld [vmem:[#allocation7 + $0xb88] sm:$0xff]
    %v536 = vld [vmem:[#allocation7 + $0xb90] sm:$0xff]
    %v537 = vld [vmem:[#allocation7 + $0xb98] sm:$0xff]
    %v538 = vld [vmem:[#allocation7 + $0xba0] sm:$0xff]
    %v539 = vld [vmem:[#allocation7 + $0xba8] sm:$0xff]
    %v540 = vld [vmem:[#allocation7 + $0xbb0] sm:$0xff]
    %v541 = vld [vmem:[#allocation7 + $0xbb8] sm:$0xff]
    %v542 = vld [vmem:[#allocation7 + $0xbc0] sm:$0xff]
    %v543 = vld [vmem:[#allocation7 + $0xbc8] sm:$0xff]
    %v544 = vld [vmem:[#allocation7 + $0xbd0] sm:$0xff]
    %v545 = vld [vmem:[#allocation7 + $0xbd8] sm:$0xff]
    %v546 = vld [vmem:[#allocation7 + $0xbe0] sm:$0xff]
    %v547 = vld [vmem:[#allocation7 + $0xbe8] sm:$0xff]
    %v548 = vld [vmem:[#allocation7 + $0xbf0] sm:$0xff]
    %v549 = vld [vmem:[#allocation7 + $0xbf8] sm:$0xff]
    %v550 = vld [vmem:[#allocation7 + $0xc00] sm:$0xff]
    %v551 = vld [vmem:[#allocation7 + $0xc08] sm:$0xff]
    %v552 = vld [vmem:[#allocation7 + $0xc10] sm:$0xff]
    %v553 = vld [vmem:[#allocation7 + $0xc18] sm:$0xff]
    %v554 = vld [vmem:[#allocation7 + $0xc20] sm:$0xff]
    %v555 = vld [vmem:[#allocation7 + $0xc28] sm:$0xff]
    %v556 = vld [vmem:[#allocation7 + $0xc30] sm:$0xff]
    %v557 = vld [vmem:[#allocation7 + $0xc38] sm:$0xff]
    %v558 = vld [vmem:[#allocation7 + $0xc40] sm:$0xff]
    %v559 = vld [vmem:[#allocation7 + $0xc48] sm:$0xff]
    %v560 = vld [vmem:[#allocation7 + $0xc50] sm:$0xff]
    %v561 = vld [vmem:[#allocation7 + $0xc58] sm:$0xff]
    %v562 = vld [vmem:[#allocation7 + $0xc60] sm:$0xff]
    %v563 = vld [vmem:[#allocation7 + $0xc68] sm:$0xff]
    %v564 = vld [vmem:[#allocation7 + $0xc70] sm:$0xff]
    %v565 = vld [vmem:[#allocation7 + $0xc78] sm:$0xff]
    %v566 = vld [vmem:[#allocation7 + $0xc80] sm:$0xff]
    %v567 = vld [vmem:[#allocation7 + $0xc88] sm:$0xff]
    %v568 = vld [vmem:[#allocation7 + $0xc90] sm:$0xff]
    %v569 = vld [vmem:[#allocation7 + $0xc98] sm:$0xff]
    %v570 = vld [vmem:[#allocation7 + $0xca0] sm:$0xff]
    %v571 = vld [vmem:[#allocation7 + $0xca8] sm:$0xff]
    %v572 = vld [vmem:[#allocation7 + $0xcb0] sm:$0xff]
    %v573 = vld [vmem:[#allocation7 + $0xcb8] sm:$0xff]
    %v574 = vld [vmem:[#allocation7 + $0xcc0] sm:$0xff]
    %v575 = vld [vmem:[#allocation7 + $0xcc8] sm:$0xff]
    %v576 = vld [vmem:[#allocation7 + $0xcd0] sm:$0xff]
    %v577 = vld [vmem:[#allocation7 + $0xcd8] sm:$0xff]
    %v578 = vld [vmem:[#allocation7 + $0xce0] sm:$0xff]
    %v579 = vld [vmem:[#allocation7 + $0xce8] sm:$0xff]
    %v580 = vld [vmem:[#allocation7 + $0xcf0] sm:$0xff]
    %v581 = vld [vmem:[#allocation7 + $0xcf8] sm:$0xff]
    %v582 = vld [vmem:[#allocation7 + $0xd00] sm:$0xff]
    %v583 = vld [vmem:[#allocation7 + $0xd08] sm:$0xff]
    %v584 = vld [vmem:[#allocation7 + $0xd10] sm:$0xff]
    %v585 = vld [vmem:[#allocation7 + $0xd18] sm:$0xff]
    %v586 = vld [vmem:[#allocation7 + $0xd20] sm:$0xff]
    %v587 = vld [vmem:[#allocation7 + $0xd28] sm:$0xff]
    %v588 = vld [vmem:[#allocation7 + $0xd30] sm:$0xff]
    %v589 = vld [vmem:[#allocation7 + $0xd38] sm:$0xff]
    %v590 = vld [vmem:[#allocation7 + $0xd40] sm:$0xff]
    %v591 = vld [vmem:[#allocation7 + $0xd48] sm:$0xff]
    %v592 = vld [vmem:[#allocation7 + $0xd50] sm:$0xff]
    %v593 = vld [vmem:[#allocation7 + $0xd58] sm:$0xff]
    %v594 = vld [vmem:[#allocation7 + $0xd60] sm:$0xff]
    %v595 = vld [vmem:[#allocation7 + $0xd68] sm:$0xff]
    %v596 = vld [vmem:[#allocation7 + $0xd70] sm:$0xff]
    %v597 = vld [vmem:[#allocation7 + $0xd78] sm:$0xff]
    %v598 = vld [vmem:[#allocation7 + $0xd80] sm:$0xff]
    %v599 = vld [vmem:[#allocation7 + $0xd88] sm:$0xff]
    %v600 = vld [vmem:[#allocation7 + $0xd90] sm:$0xff]
    %v601 = vld [vmem:[#allocation7 + $0xd98] sm:$0xff]
    %v602 = vld [vmem:[#allocation7 + $0xda0] sm:$0xff]
    %v603 = vld [vmem:[#allocation7 + $0xda8] sm:$0xff]
    %v604 = vld [vmem:[#allocation7 + $0xdb0] sm:$0xff]
    %v605 = vld [vmem:[#allocation7 + $0xdb8] sm:$0xff]
    %v606 = vld [vmem:[#allocation7 + $0xdc0] sm:$0xff]
    %v607 = vld [vmem:[#allocation7 + $0xdc8] sm:$0xff]
    %v608 = vld [vmem:[#allocation7 + $0xdd0] sm:$0xff]
    %v609 = vld [vmem:[#allocation7 + $0xdd8] sm:$0xff]
    %v610 = vld [vmem:[#allocation7 + $0xde0] sm:$0xff]
    %v611 = vld [vmem:[#allocation7 + $0xde8] sm:$0xff]
    %v612 = vld [vmem:[#allocation7 + $0xdf0] sm:$0xff]
    %v613 = vld [vmem:[#allocation7 + $0xdf8] sm:$0xff]
    %v614 = vld [vmem:[#allocation7 + $0xe00] sm:$0xff]
    %v615 = vld [vmem:[#allocation7 + $0xe08] sm:$0xff]
    %v616 = vld [vmem:[#allocation7 + $0xe10] sm:$0xff]
    %v617 = vld [vmem:[#allocation7 + $0xe18] sm:$0xff]
    %v618 = vld [vmem:[#allocation7 + $0xe20] sm:$0xff]
    %v619 = vld [vmem:[#allocation7 + $0xe28] sm:$0xff]
    %v620 = vld [vmem:[#allocation7 + $0xe30] sm:$0xff]
    %v621 = vld [vmem:[#allocation7 + $0xe38] sm:$0xff]
    %v622 = vld [vmem:[#allocation7 + $0xe40] sm:$0xff]
    %v623 = vld [vmem:[#allocation7 + $0xe48] sm:$0xff]
    %v624 = vld [vmem:[#allocation7 + $0xe50] sm:$0xff]
    %v625 = vld [vmem:[#allocation7 + $0xe58] sm:$0xff]
    %v626 = vld [vmem:[#allocation7 + $0xe60] sm:$0xff]
    %v627 = vld [vmem:[#allocation7 + $0xe68] sm:$0xff]
    %v628 = vld [vmem:[#allocation7 + $0xe70] sm:$0xff]
    %v629 = vld [vmem:[#allocation7 + $0xe78] sm:$0xff]
    %v630 = vld [vmem:[#allocation7 + $0xe80] sm:$0xff]
    %v631 = vld [vmem:[#allocation7 + $0xe88] sm:$0xff]
    %v632 = vld [vmem:[#allocation7 + $0xe90] sm:$0xff]
    %v633 = vld [vmem:[#allocation7 + $0xe98] sm:$0xff]
    %v634 = vld [vmem:[#allocation7 + $0xea0] sm:$0xff]
    %v635 = vld [vmem:[#allocation7 + $0xea8] sm:$0xff]
    %v636 = vld [vmem:[#allocation7 + $0xeb0] sm:$0xff]
    %v637 = vld [vmem:[#allocation7 + $0xeb8] sm:$0xff]
    %v638 = vld [vmem:[#allocation7 + $0xec0] sm:$0xff]
    %v639 = vld [vmem:[#allocation7 + $0xec8] sm:$0xff]
    %v640 = vld [vmem:[#allocation7 + $0xed0] sm:$0xff]
    %v641 = vld [vmem:[#allocation7 + $0xed8] sm:$0xff]
    %v642 = vld [vmem:[#allocation7 + $0xee0] sm:$0xff]
    %v643 = vld [vmem:[#allocation7 + $0xee8] sm:$0xff]
    %v644 = vld [vmem:[#allocation7 + $0xef0] sm:$0xff]
    %v645 = vld [vmem:[#allocation7 + $0xef8] sm:$0xff]
    %v646 = vld [vmem:[#allocation7 + $0xf00] sm:$0xff]
    %v647 = vld [vmem:[#allocation7 + $0xf08] sm:$0xff]
    %v648 = vld [vmem:[#allocation7 + $0xf10] sm:$0xff]
    %v649 = vld [vmem:[#allocation7 + $0xf18] sm:$0xff]
    %v650 = vld [vmem:[#allocation7 + $0xf20] sm:$0xff]
    %v651 = vld [vmem:[#allocation7 + $0xf28] sm:$0xff]
    %v652 = vld [vmem:[#allocation7 + $0xf30] sm:$0xff]
    %v653 = vld [vmem:[#allocation7 + $0xf38] sm:$0xff]
    %v654 = vld [vmem:[#allocation7 + $0xf40] sm:$0xff]
    %v655 = vld [vmem:[#allocation7 + $0xf48] sm:$0xff]
    %v656 = vld [vmem:[#allocation7 + $0xf50] sm:$0xff]
    %v657 = vld [vmem:[#allocation7 + $0xf58] sm:$0xff]
    %v658 = vld [vmem:[#allocation7 + $0xf60] sm:$0xff]
    %v659 = vld [vmem:[#allocation7 + $0xf68] sm:$0xff]
    %v660 = vld [vmem:[#allocation7 + $0xf70] sm:$0xff]
    %v661 = vld [vmem:[#allocation7 + $0xf78] sm:$0xff]
    %v662 = vld [vmem:[#allocation7 + $0xf80] sm:$0xff]
    %v663 = vld [vmem:[#allocation7 + $0xf88] sm:$0xff]
    %v664 = vld [vmem:[#allocation7 + $0xf90] sm:$0xff]
    %v665 = vld [vmem:[#allocation7 + $0xf98] sm:$0xff]
    %v666 = vld [vmem:[#allocation7 + $0xfa0] sm:$0xff]
    %v667 = vld [vmem:[#allocation7 + $0xfa8] sm:$0xff]
    %v668 = vld [vmem:[#allocation7 + $0xfb0] sm:$0xff]
    %v669 = vld [vmem:[#allocation7 + $0xfb8] sm:$0xff]
    %v670 = vld [vmem:[#allocation7 + $0xfc0] sm:$0xff]
    %v671 = vld [vmem:[#allocation7 + $0xfc8] sm:$0xff]
    %v672 = vld [vmem:[#allocation7 + $0xfd0] sm:$0xff]
    %v673 = vld [vmem:[#allocation7 + $0xfd8] sm:$0xff]
    %v674 = vld [vmem:[#allocation7 + $0xfe0] sm:$0xff]
    %v675 = vld [vmem:[#allocation7 + $0xfe8] sm:$0xff]
    %v676 = vld [vmem:[#allocation7 + $0xff0] sm:$0xff]
    %v677 = vld [vmem:[#allocation7 + $0xff8] sm:$0xff]
    %v678 = vunpack.c.l.bf16 %v166
    %v679 = vunpack.c.h.bf16 %v166
    %v680 = vunpack.c.l.bf16 %v167
    %v681 = vunpack.c.h.bf16 %v167
    %v682 = vunpack.c.l.bf16 %v168
    %v683 = vunpack.c.h.bf16 %v168
    %v684 = vunpack.c.l.bf16 %v169
    %v685 = vunpack.c.h.bf16 %v169
    %v686 = vunpack.c.l.bf16 %v170
    %v687 = vunpack.c.h.bf16 %v170
    %v688 = vunpack.c.l.bf16 %v171
    %v689 = vunpack.c.h.bf16 %v171
    %v690 = vunpack.c.l.bf16 %v172
    %v691 = vunpack.c.h.bf16 %v172
    %v692 = vunpack.c.l.bf16 %v173
    %v693 = vunpack.c.h.bf16 %v173
    %v694 = vunpack.c.l.bf16 %v174
    %v695 = vunpack.c.h.bf16 %v174
    %v696 = vunpack.c.l.bf16 %v175
    %v697 = vunpack.c.h.bf16 %v175
    %v698 = vunpack.c.l.bf16 %v176
    %v699 = vunpack.c.h.bf16 %v176
    %v700 = vunpack.c.l.bf16 %v177
    %v701 = vunpack.c.h.bf16 %v177
    %v702 = vunpack.c.l.bf16 %v178
    %v703 = vunpack.c.h.bf16 %v178
    %v704 = vunpack.c.l.bf16 %v179
    %v705 = vunpack.c.h.bf16 %v179
    %v706 = vunpack.c.l.bf16 %v180
    %v707 = vunpack.c.h.bf16 %v180
    %v708 = vunpack.c.l.bf16 %v181
    %v709 = vunpack.c.h.bf16 %v181
    %v710 = vunpack.c.l.bf16 %v182
    %v711 = vunpack.c.h.bf16 %v182
    %v712 = vunpack.c.l.bf16 %v183
    %v713 = vunpack.c.h.bf16 %v183
    %v714 = vunpack.c.l.bf16 %v184
    %v715 = vunpack.c.h.bf16 %v184
    %v716 = vunpack.c.l.bf16 %v185
    %v717 = vunpack.c.h.bf16 %v185
    %v718 = vunpack.c.l.bf16 %v186
    %v719 = vunpack.c.h.bf16 %v186
    %v720 = vunpack.c.l.bf16 %v187
    %v721 = vunpack.c.h.bf16 %v187
    %v722 = vunpack.c.l.bf16 %v188
    %v723 = vunpack.c.h.bf16 %v188
    %v724 = vunpack.c.l.bf16 %v189
    %v725 = vunpack.c.h.bf16 %v189
    %v726 = vunpack.c.l.bf16 %v190
    %v727 = vunpack.c.h.bf16 %v190
    %v728 = vunpack.c.l.bf16 %v191
    %v729 = vunpack.c.h.bf16 %v191
    %v730 = vunpack.c.l.bf16 %v192
    %v731 = vunpack.c.h.bf16 %v192
    %v732 = vunpack.c.l.bf16 %v193
    %v733 = vunpack.c.h.bf16 %v193
    %v734 = vunpack.c.l.bf16 %v194
    %v735 = vunpack.c.h.bf16 %v194
    %v736 = vunpack.c.l.bf16 %v195
    %v737 = vunpack.c.h.bf16 %v195
    %v738 = vunpack.c.l.bf16 %v196
    %v739 = vunpack.c.h.bf16 %v196
    %v740 = vunpack.c.l.bf16 %v197
    %v741 = vunpack.c.h.bf16 %v197
    %v742 = vunpack.c.l.bf16 %v198
    %v743 = vunpack.c.h.bf16 %v198
    %v744 = vunpack.c.l.bf16 %v199
    %v745 = vunpack.c.h.bf16 %v199
    %v746 = vunpack.c.l.bf16 %v200
    %v747 = vunpack.c.h.bf16 %v200
    %v748 = vunpack.c.l.bf16 %v201
    %v749 = vunpack.c.h.bf16 %v201
    %v750 = vunpack.c.l.bf16 %v202
    %v751 = vunpack.c.h.bf16 %v202
    %v752 = vunpack.c.l.bf16 %v203
    %v753 = vunpack.c.h.bf16 %v203
    %v754 = vunpack.c.l.bf16 %v204
    %v755 = vunpack.c.h.bf16 %v204
    %v756 = vunpack.c.l.bf16 %v205
    %v757 = vunpack.c.h.bf16 %v205
    %v758 = vunpack.c.l.bf16 %v206
    %v759 = vunpack.c.h.bf16 %v206
    %v760 = vunpack.c.l.bf16 %v207
    %v761 = vunpack.c.h.bf16 %v207
    %v762 = vunpack.c.l.bf16 %v208
    %v763 = vunpack.c.h.bf16 %v208
    %v764 = vunpack.c.l.bf16 %v209
    %v765 = vunpack.c.h.bf16 %v209
    %v766 = vunpack.c.l.bf16 %v210
    %v767 = vunpack.c.h.bf16 %v210
    %v768 = vunpack.c.l.bf16 %v211
    %v769 = vunpack.c.h.bf16 %v211
    %v770 = vunpack.c.l.bf16 %v212
    %v771 = vunpack.c.h.bf16 %v212
    %v772 = vunpack.c.l.bf16 %v213
    %v773 = vunpack.c.h.bf16 %v213
    %v774 = vunpack.c.l.bf16 %v214
    %v775 = vunpack.c.h.bf16 %v214
    %v776 = vunpack.c.l.bf16 %v215
    %v777 = vunpack.c.h.bf16 %v215
    %v778 = vunpack.c.l.bf16 %v216
    %v779 = vunpack.c.h.bf16 %v216
    %v780 = vunpack.c.l.bf16 %v217
    %v781 = vunpack.c.h.bf16 %v217
    %v782 = vunpack.c.l.bf16 %v218
    %v783 = vunpack.c.h.bf16 %v218
    %v784 = vunpack.c.l.bf16 %v219
    %v785 = vunpack.c.h.bf16 %v219
    %v786 = vunpack.c.l.bf16 %v220
    %v787 = vunpack.c.h.bf16 %v220
    %v788 = vunpack.c.l.bf16 %v221
    %v789 = vunpack.c.h.bf16 %v221
    %v790 = vunpack.c.l.bf16 %v222
    %v791 = vunpack.c.h.bf16 %v222
    %v792 = vunpack.c.l.bf16 %v223
    %v793 = vunpack.c.h.bf16 %v223
    %v794 = vunpack.c.l.bf16 %v224
    %v795 = vunpack.c.h.bf16 %v224
    %v796 = vunpack.c.l.bf16 %v225
    %v797 = vunpack.c.h.bf16 %v225
    %v798 = vunpack.c.l.bf16 %v226
    %v799 = vunpack.c.h.bf16 %v226
    %v800 = vunpack.c.l.bf16 %v227
    %v801 = vunpack.c.h.bf16 %v227
    %v802 = vunpack.c.l.bf16 %v228
    %v803 = vunpack.c.h.bf16 %v228
    %v804 = vunpack.c.l.bf16 %v229
    %v805 = vunpack.c.h.bf16 %v229
    %v806 = vunpack.c.l.bf16 %v230
    %v807 = vunpack.c.h.bf16 %v230
    %v808 = vunpack.c.l.bf16 %v231
    %v809 = vunpack.c.h.bf16 %v231
    %v810 = vunpack.c.l.bf16 %v232
    %v811 = vunpack.c.h.bf16 %v232
    %v812 = vunpack.c.l.bf16 %v233
    %v813 = vunpack.c.h.bf16 %v233
    %v814 = vunpack.c.l.bf16 %v234
    %v815 = vunpack.c.h.bf16 %v234
    %v816 = vunpack.c.l.bf16 %v235
    %v817 = vunpack.c.h.bf16 %v235
    %v818 = vunpack.c.l.bf16 %v236
    %v819 = vunpack.c.h.bf16 %v236
    %v820 = vunpack.c.l.bf16 %v237
    %v821 = vunpack.c.h.bf16 %v237
    %v822 = vunpack.c.l.bf16 %v238
    %v823 = vunpack.c.h.bf16 %v238
    %v824 = vunpack.c.l.bf16 %v239
    %v825 = vunpack.c.h.bf16 %v239
    %v826 = vunpack.c.l.bf16 %v240
    %v827 = vunpack.c.h.bf16 %v240
    %v828 = vunpack.c.l.bf16 %v241
    %v829 = vunpack.c.h.bf16 %v241
    %v830 = vunpack.c.l.bf16 %v242
    %v831 = vunpack.c.h.bf16 %v242
    %v832 = vunpack.c.l.bf16 %v243
    %v833 = vunpack.c.h.bf16 %v243
    %v834 = vunpack.c.l.bf16 %v244
    %v835 = vunpack.c.h.bf16 %v244
    %v836 = vunpack.c.l.bf16 %v245
    %v837 = vunpack.c.h.bf16 %v245
    %v838 = vunpack.c.l.bf16 %v246
    %v839 = vunpack.c.h.bf16 %v246
    %v840 = vunpack.c.l.bf16 %v247
    %v841 = vunpack.c.h.bf16 %v247
    %v842 = vunpack.c.l.bf16 %v248
    %v843 = vunpack.c.h.bf16 %v248
    %v844 = vunpack.c.l.bf16 %v249
    %v845 = vunpack.c.h.bf16 %v249
    %v846 = vunpack.c.l.bf16 %v250
    %v847 = vunpack.c.h.bf16 %v250
    %v848 = vunpack.c.l.bf16 %v251
    %v849 = vunpack.c.h.bf16 %v251
    %v850 = vunpack.c.l.bf16 %v252
    %v851 = vunpack.c.h.bf16 %v252
    %v852 = vunpack.c.l.bf16 %v253
    %v853 = vunpack.c.h.bf16 %v253
    %v854 = vunpack.c.l.bf16 %v254
    %v855 = vunpack.c.h.bf16 %v254
    %v856 = vunpack.c.l.bf16 %v255
    %v857 = vunpack.c.h.bf16 %v255
    %v858 = vunpack.c.l.bf16 %v256
    %v859 = vunpack.c.h.bf16 %v256
    %v860 = vunpack.c.l.bf16 %v257
    %v861 = vunpack.c.h.bf16 %v257
    %v862 = vunpack.c.l.bf16 %v258
    %v863 = vunpack.c.h.bf16 %v258
    %v864 = vunpack.c.l.bf16 %v259
    %v865 = vunpack.c.h.bf16 %v259
    %v866 = vunpack.c.l.bf16 %v260
    %v867 = vunpack.c.h.bf16 %v260
    %v868 = vunpack.c.l.bf16 %v261
    %v869 = vunpack.c.h.bf16 %v261
    %v870 = vunpack.c.l.bf16 %v262
    %v871 = vunpack.c.h.bf16 %v262
    %v872 = vunpack.c.l.bf16 %v263
    %v873 = vunpack.c.h.bf16 %v263
    %v874 = vunpack.c.l.bf16 %v264
    %v875 = vunpack.c.h.bf16 %v264
    %v876 = vunpack.c.l.bf16 %v265
    %v877 = vunpack.c.h.bf16 %v265
    %v878 = vunpack.c.l.bf16 %v266
    %v879 = vunpack.c.h.bf16 %v266
    %v880 = vunpack.c.l.bf16 %v267
    %v881 = vunpack.c.h.bf16 %v267
    %v882 = vunpack.c.l.bf16 %v268
    %v883 = vunpack.c.h.bf16 %v268
    %v884 = vunpack.c.l.bf16 %v269
    %v885 = vunpack.c.h.bf16 %v269
    %v886 = vunpack.c.l.bf16 %v270
    %v887 = vunpack.c.h.bf16 %v270
    %v888 = vunpack.c.l.bf16 %v271
    %v889 = vunpack.c.h.bf16 %v271
    %v890 = vunpack.c.l.bf16 %v272
    %v891 = vunpack.c.h.bf16 %v272
    %v892 = vunpack.c.l.bf16 %v273
    %v893 = vunpack.c.h.bf16 %v273
    %v894 = vunpack.c.l.bf16 %v274
    %v895 = vunpack.c.h.bf16 %v274
    %v896 = vunpack.c.l.bf16 %v275
    %v897 = vunpack.c.h.bf16 %v275
    %v898 = vunpack.c.l.bf16 %v276
    %v899 = vunpack.c.h.bf16 %v276
    %v900 = vunpack.c.l.bf16 %v277
    %v901 = vunpack.c.h.bf16 %v277
    %v902 = vunpack.c.l.bf16 %v278
    %v903 = vunpack.c.h.bf16 %v278
    %v904 = vunpack.c.l.bf16 %v279
    %v905 = vunpack.c.h.bf16 %v279
    %v906 = vunpack.c.l.bf16 %v280
    %v907 = vunpack.c.h.bf16 %v280
    %v908 = vunpack.c.l.bf16 %v281
    %v909 = vunpack.c.h.bf16 %v281
    %v910 = vunpack.c.l.bf16 %v282
    %v911 = vunpack.c.h.bf16 %v282
    %v912 = vunpack.c.l.bf16 %v283
    %v913 = vunpack.c.h.bf16 %v283
    %v914 = vunpack.c.l.bf16 %v284
    %v915 = vunpack.c.h.bf16 %v284
    %v916 = vunpack.c.l.bf16 %v285
    %v917 = vunpack.c.h.bf16 %v285
    %v918 = vunpack.c.l.bf16 %v286
    %v919 = vunpack.c.h.bf16 %v286
    %v920 = vunpack.c.l.bf16 %v287
    %v921 = vunpack.c.h.bf16 %v287
    %v922 = vunpack.c.l.bf16 %v288
    %v923 = vunpack.c.h.bf16 %v288
    %v924 = vunpack.c.l.bf16 %v289
    %v925 = vunpack.c.h.bf16 %v289
    %v926 = vunpack.c.l.bf16 %v290
    %v927 = vunpack.c.h.bf16 %v290
    %v928 = vunpack.c.l.bf16 %v291
    %v929 = vunpack.c.h.bf16 %v291
    %v930 = vunpack.c.l.bf16 %v292
    %v931 = vunpack.c.h.bf16 %v292
    %v932 = vunpack.c.l.bf16 %v293
    %v933 = vunpack.c.h.bf16 %v293
    %v934 = vunpack.c.l.bf16 %v294
    %v935 = vunpack.c.h.bf16 %v294
    %v936 = vunpack.c.l.bf16 %v295
    %v937 = vunpack.c.h.bf16 %v295
    %v938 = vunpack.c.l.bf16 %v296
    %v939 = vunpack.c.h.bf16 %v296
    %v940 = vunpack.c.l.bf16 %v297
    %v941 = vunpack.c.h.bf16 %v297
    %v942 = vunpack.c.l.bf16 %v298
    %v943 = vunpack.c.h.bf16 %v298
    %v944 = vunpack.c.l.bf16 %v299
    %v945 = vunpack.c.h.bf16 %v299
    %v946 = vunpack.c.l.bf16 %v300
    %v947 = vunpack.c.h.bf16 %v300
    %v948 = vunpack.c.l.bf16 %v301
    %v949 = vunpack.c.h.bf16 %v301
    %v950 = vunpack.c.l.bf16 %v302
    %v951 = vunpack.c.h.bf16 %v302
    %v952 = vunpack.c.l.bf16 %v303
    %v953 = vunpack.c.h.bf16 %v303
    %v954 = vunpack.c.l.bf16 %v304
    %v955 = vunpack.c.h.bf16 %v304
    %v956 = vunpack.c.l.bf16 %v305
    %v957 = vunpack.c.h.bf16 %v305
    %v958 = vunpack.c.l.bf16 %v306
    %v959 = vunpack.c.h.bf16 %v306
    %v960 = vunpack.c.l.bf16 %v307
    %v961 = vunpack.c.h.bf16 %v307
    %v962 = vunpack.c.l.bf16 %v308
    %v963 = vunpack.c.h.bf16 %v308
    %v964 = vunpack.c.l.bf16 %v309
    %v965 = vunpack.c.h.bf16 %v309
    %v966 = vunpack.c.l.bf16 %v310
    %v967 = vunpack.c.h.bf16 %v310
    %v968 = vunpack.c.l.bf16 %v311
    %v969 = vunpack.c.h.bf16 %v311
    %v970 = vunpack.c.l.bf16 %v312
    %v971 = vunpack.c.h.bf16 %v312
    %v972 = vunpack.c.l.bf16 %v313
    %v973 = vunpack.c.h.bf16 %v313
    %v974 = vunpack.c.l.bf16 %v314
    %v975 = vunpack.c.h.bf16 %v314
    %v976 = vunpack.c.l.bf16 %v315
    %v977 = vunpack.c.h.bf16 %v315
    %v978 = vunpack.c.l.bf16 %v316
    %v979 = vunpack.c.h.bf16 %v316
    %v980 = vunpack.c.l.bf16 %v317
    %v981 = vunpack.c.h.bf16 %v317
    %v982 = vunpack.c.l.bf16 %v318
    %v983 = vunpack.c.h.bf16 %v318
    %v984 = vunpack.c.l.bf16 %v319
    %v985 = vunpack.c.h.bf16 %v319
    %v986 = vunpack.c.l.bf16 %v320
    %v987 = vunpack.c.h.bf16 %v320
    %v988 = vunpack.c.l.bf16 %v321
    %v989 = vunpack.c.h.bf16 %v321
    %v990 = vunpack.c.l.bf16 %v322
    %v991 = vunpack.c.h.bf16 %v322
    %v992 = vunpack.c.l.bf16 %v323
    %v993 = vunpack.c.h.bf16 %v323
    %v994 = vunpack.c.l.bf16 %v324
    %v995 = vunpack.c.h.bf16 %v324
    %v996 = vunpack.c.l.bf16 %v325
    %v997 = vunpack.c.h.bf16 %v325
    %v998 = vunpack.c.l.bf16 %v326
    %v999 = vunpack.c.h.bf16 %v326
    %v1000 = vunpack.c.l.bf16 %v327
    %v1001 = vunpack.c.h.bf16 %v327
    %v1002 = vunpack.c.l.bf16 %v328
    %v1003 = vunpack.c.h.bf16 %v328
    %v1004 = vunpack.c.l.bf16 %v329
    %v1005 = vunpack.c.h.bf16 %v329
    %v1006 = vunpack.c.l.bf16 %v330
    %v1007 = vunpack.c.h.bf16 %v330
    %v1008 = vunpack.c.l.bf16 %v331
    %v1009 = vunpack.c.h.bf16 %v331
    %v1010 = vunpack.c.l.bf16 %v332
    %v1011 = vunpack.c.h.bf16 %v332
    %v1012 = vunpack.c.l.bf16 %v333
    %v1013 = vunpack.c.h.bf16 %v333
    %v1014 = vunpack.c.l.bf16 %v334
    %v1015 = vunpack.c.h.bf16 %v334
    %v1016 = vunpack.c.l.bf16 %v335
    %v1017 = vunpack.c.h.bf16 %v335
    %v1018 = vunpack.c.l.bf16 %v336
    %v1019 = vunpack.c.h.bf16 %v336
    %v1020 = vunpack.c.l.bf16 %v337
    %v1021 = vunpack.c.h.bf16 %v337
    %v1022 = vunpack.c.l.bf16 %v338
    %v1023 = vunpack.c.h.bf16 %v338
    %v1024 = vunpack.c.l.bf16 %v339
    %v1025 = vunpack.c.h.bf16 %v339
    %v1026 = vunpack.c.l.bf16 %v340
    %v1027 = vunpack.c.h.bf16 %v340
    %v1028 = vunpack.c.l.bf16 %v341
    %v1029 = vunpack.c.h.bf16 %v341
    %v1030 = vunpack.c.l.bf16 %v342
    %v1031 = vunpack.c.h.bf16 %v342
    %v1032 = vunpack.c.l.bf16 %v343
    %v1033 = vunpack.c.h.bf16 %v343
    %v1034 = vunpack.c.l.bf16 %v344
    %v1035 = vunpack.c.h.bf16 %v344
    %v1036 = vunpack.c.l.bf16 %v345
    %v1037 = vunpack.c.h.bf16 %v345
    %v1038 = vunpack.c.l.bf16 %v346
    %v1039 = vunpack.c.h.bf16 %v346
    %v1040 = vunpack.c.l.bf16 %v347
    %v1041 = vunpack.c.h.bf16 %v347
    %v1042 = vunpack.c.l.bf16 %v348
    %v1043 = vunpack.c.h.bf16 %v348
    %v1044 = vunpack.c.l.bf16 %v349
    %v1045 = vunpack.c.h.bf16 %v349
    %v1046 = vunpack.c.l.bf16 %v350
    %v1047 = vunpack.c.h.bf16 %v350
    %v1048 = vunpack.c.l.bf16 %v351
    %v1049 = vunpack.c.h.bf16 %v351
    %v1050 = vunpack.c.l.bf16 %v352
    %v1051 = vunpack.c.h.bf16 %v352
    %v1052 = vunpack.c.l.bf16 %v353
    %v1053 = vunpack.c.h.bf16 %v353
    %v1054 = vunpack.c.l.bf16 %v354
    %v1055 = vunpack.c.h.bf16 %v354
    %v1056 = vunpack.c.l.bf16 %v355
    %v1057 = vunpack.c.h.bf16 %v355
    %v1058 = vunpack.c.l.bf16 %v356
    %v1059 = vunpack.c.h.bf16 %v356
    %v1060 = vunpack.c.l.bf16 %v357
    %v1061 = vunpack.c.h.bf16 %v357
    %v1062 = vunpack.c.l.bf16 %v358
    %v1063 = vunpack.c.h.bf16 %v358
    %v1064 = vunpack.c.l.bf16 %v359
    %v1065 = vunpack.c.h.bf16 %v359
    %v1066 = vunpack.c.l.bf16 %v360
    %v1067 = vunpack.c.h.bf16 %v360
    %v1068 = vunpack.c.l.bf16 %v361
    %v1069 = vunpack.c.h.bf16 %v361
    %v1070 = vunpack.c.l.bf16 %v362
    %v1071 = vunpack.c.h.bf16 %v362
    %v1072 = vunpack.c.l.bf16 %v363
    %v1073 = vunpack.c.h.bf16 %v363
    %v1074 = vunpack.c.l.bf16 %v364
    %v1075 = vunpack.c.h.bf16 %v364
    %v1076 = vunpack.c.l.bf16 %v365
    %v1077 = vunpack.c.h.bf16 %v365
    %v1078 = vunpack.c.l.bf16 %v366
    %v1079 = vunpack.c.h.bf16 %v366
    %v1080 = vunpack.c.l.bf16 %v367
    %v1081 = vunpack.c.h.bf16 %v367
    %v1082 = vunpack.c.l.bf16 %v368
    %v1083 = vunpack.c.h.bf16 %v368
    %v1084 = vunpack.c.l.bf16 %v369
    %v1085 = vunpack.c.h.bf16 %v369
    %v1086 = vunpack.c.l.bf16 %v370
    %v1087 = vunpack.c.h.bf16 %v370
    %v1088 = vunpack.c.l.bf16 %v371
    %v1089 = vunpack.c.h.bf16 %v371
    %v1090 = vunpack.c.l.bf16 %v372
    %v1091 = vunpack.c.h.bf16 %v372
    %v1092 = vunpack.c.l.bf16 %v373
    %v1093 = vunpack.c.h.bf16 %v373
    %v1094 = vunpack.c.l.bf16 %v374
    %v1095 = vunpack.c.h.bf16 %v374
    %v1096 = vunpack.c.l.bf16 %v375
    %v1097 = vunpack.c.h.bf16 %v375
    %v1098 = vunpack.c.l.bf16 %v376
    %v1099 = vunpack.c.h.bf16 %v376
    %v1100 = vunpack.c.l.bf16 %v377
    %v1101 = vunpack.c.h.bf16 %v377
    %v1102 = vunpack.c.l.bf16 %v378
    %v1103 = vunpack.c.h.bf16 %v378
    %v1104 = vunpack.c.l.bf16 %v379
    %v1105 = vunpack.c.h.bf16 %v379
    %v1106 = vunpack.c.l.bf16 %v380
    %v1107 = vunpack.c.h.bf16 %v380
    %v1108 = vunpack.c.l.bf16 %v381
    %v1109 = vunpack.c.h.bf16 %v381
    %v1110 = vunpack.c.l.bf16 %v382
    %v1111 = vunpack.c.h.bf16 %v382
    %v1112 = vunpack.c.l.bf16 %v383
    %v1113 = vunpack.c.h.bf16 %v383
    %v1114 = vunpack.c.l.bf16 %v384
    %v1115 = vunpack.c.h.bf16 %v384
    %v1116 = vunpack.c.l.bf16 %v385
    %v1117 = vunpack.c.h.bf16 %v385
    %v1118 = vunpack.c.l.bf16 %v386
    %v1119 = vunpack.c.h.bf16 %v386
    %v1120 = vunpack.c.l.bf16 %v387
    %v1121 = vunpack.c.h.bf16 %v387
    %v1122 = vunpack.c.l.bf16 %v388
    %v1123 = vunpack.c.h.bf16 %v388
    %v1124 = vunpack.c.l.bf16 %v389
    %v1125 = vunpack.c.h.bf16 %v389
    %v1126 = vunpack.c.l.bf16 %v390
    %v1127 = vunpack.c.h.bf16 %v390
    %v1128 = vunpack.c.l.bf16 %v391
    %v1129 = vunpack.c.h.bf16 %v391
    %v1130 = vunpack.c.l.bf16 %v392
    %v1131 = vunpack.c.h.bf16 %v392
    %v1132 = vunpack.c.l.bf16 %v393
    %v1133 = vunpack.c.h.bf16 %v393
    %v1134 = vunpack.c.l.bf16 %v394
    %v1135 = vunpack.c.h.bf16 %v394
    %v1136 = vunpack.c.l.bf16 %v395
    %v1137 = vunpack.c.h.bf16 %v395
    %v1138 = vunpack.c.l.bf16 %v396
    %v1139 = vunpack.c.h.bf16 %v396
    %v1140 = vunpack.c.l.bf16 %v397
    %v1141 = vunpack.c.h.bf16 %v397
    %v1142 = vunpack.c.l.bf16 %v398
    %v1143 = vunpack.c.h.bf16 %v398
    %v1144 = vunpack.c.l.bf16 %v399
    %v1145 = vunpack.c.h.bf16 %v399
    %v1146 = vunpack.c.l.bf16 %v400
    %v1147 = vunpack.c.h.bf16 %v400
    %v1148 = vunpack.c.l.bf16 %v401
    %v1149 = vunpack.c.h.bf16 %v401
    %v1150 = vunpack.c.l.bf16 %v402
    %v1151 = vunpack.c.h.bf16 %v402
    %v1152 = vunpack.c.l.bf16 %v403
    %v1153 = vunpack.c.h.bf16 %v403
    %v1154 = vunpack.c.l.bf16 %v404
    %v1155 = vunpack.c.h.bf16 %v404
    %v1156 = vunpack.c.l.bf16 %v405
    %v1157 = vunpack.c.h.bf16 %v405
    %v1158 = vunpack.c.l.bf16 %v406
    %v1159 = vunpack.c.h.bf16 %v406
    %v1160 = vunpack.c.l.bf16 %v407
    %v1161 = vunpack.c.h.bf16 %v407
    %v1162 = vunpack.c.l.bf16 %v408
    %v1163 = vunpack.c.h.bf16 %v408
    %v1164 = vunpack.c.l.bf16 %v409
    %v1165 = vunpack.c.h.bf16 %v409
    %v1166 = vunpack.c.l.bf16 %v410
    %v1167 = vunpack.c.h.bf16 %v410
    %v1168 = vunpack.c.l.bf16 %v411
    %v1169 = vunpack.c.h.bf16 %v411
    %v1170 = vunpack.c.l.bf16 %v412
    %v1171 = vunpack.c.h.bf16 %v412
    %v1172 = vunpack.c.l.bf16 %v413
    %v1173 = vunpack.c.h.bf16 %v413
    %v1174 = vunpack.c.l.bf16 %v414
    %v1175 = vunpack.c.h.bf16 %v414
    %v1176 = vunpack.c.l.bf16 %v415
    %v1177 = vunpack.c.h.bf16 %v415
    %v1178 = vunpack.c.l.bf16 %v416
    %v1179 = vunpack.c.h.bf16 %v416
    %v1180 = vunpack.c.l.bf16 %v417
    %v1181 = vunpack.c.h.bf16 %v417
    %v1182 = vunpack.c.l.bf16 %v418
    %v1183 = vunpack.c.h.bf16 %v418
    %v1184 = vunpack.c.l.bf16 %v419
    %v1185 = vunpack.c.h.bf16 %v419
    %v1186 = vunpack.c.l.bf16 %v420
    %v1187 = vunpack.c.h.bf16 %v420
    %v1188 = vunpack.c.l.bf16 %v421
    %v1189 = vunpack.c.h.bf16 %v421
    %v1190 = vunpack.c.l.bf16 %v422
    %v1191 = vunpack.c.h.bf16 %v422
    %v1192 = vunpack.c.l.bf16 %v423
    %v1193 = vunpack.c.h.bf16 %v423
    %v1194 = vunpack.c.l.bf16 %v424
    %v1195 = vunpack.c.h.bf16 %v424
    %v1196 = vunpack.c.l.bf16 %v425
    %v1197 = vunpack.c.h.bf16 %v425
    %v1198 = vunpack.c.l.bf16 %v426
    %v1199 = vunpack.c.h.bf16 %v426
    %v1200 = vunpack.c.l.bf16 %v427
    %v1201 = vunpack.c.h.bf16 %v427
    %v1202 = vunpack.c.l.bf16 %v428
    %v1203 = vunpack.c.h.bf16 %v428
    %v1204 = vunpack.c.l.bf16 %v429
    %v1205 = vunpack.c.h.bf16 %v429
    %v1206 = vunpack.c.l.bf16 %v430
    %v1207 = vunpack.c.h.bf16 %v430
    %v1208 = vunpack.c.l.bf16 %v431
    %v1209 = vunpack.c.h.bf16 %v431
    %v1210 = vunpack.c.l.bf16 %v432
    %v1211 = vunpack.c.h.bf16 %v432
    %v1212 = vunpack.c.l.bf16 %v433
    %v1213 = vunpack.c.h.bf16 %v433
    %v1214 = vunpack.c.l.bf16 %v434
    %v1215 = vunpack.c.h.bf16 %v434
    %v1216 = vunpack.c.l.bf16 %v435
    %v1217 = vunpack.c.h.bf16 %v435
    %v1218 = vunpack.c.l.bf16 %v436
    %v1219 = vunpack.c.h.bf16 %v436
    %v1220 = vunpack.c.l.bf16 %v437
    %v1221 = vunpack.c.h.bf16 %v437
    %v1222 = vunpack.c.l.bf16 %v438
    %v1223 = vunpack.c.h.bf16 %v438
    %v1224 = vunpack.c.l.bf16 %v439
    %v1225 = vunpack.c.h.bf16 %v439
    %v1226 = vunpack.c.l.bf16 %v440
    %v1227 = vunpack.c.h.bf16 %v440
    %v1228 = vunpack.c.l.bf16 %v441
    %v1229 = vunpack.c.h.bf16 %v441
    %v1230 = vunpack.c.l.bf16 %v442
    %v1231 = vunpack.c.h.bf16 %v442
    %v1232 = vunpack.c.l.bf16 %v443
    %v1233 = vunpack.c.h.bf16 %v443
    %v1234 = vunpack.c.l.bf16 %v444
    %v1235 = vunpack.c.h.bf16 %v444
    %v1236 = vunpack.c.l.bf16 %v445
    %v1237 = vunpack.c.h.bf16 %v445
    %v1238 = vunpack.c.l.bf16 %v446
    %v1239 = vunpack.c.h.bf16 %v446
    %v1240 = vunpack.c.l.bf16 %v447
    %v1241 = vunpack.c.h.bf16 %v447
    %v1242 = vunpack.c.l.bf16 %v448
    %v1243 = vunpack.c.h.bf16 %v448
    %v1244 = vunpack.c.l.bf16 %v449
    %v1245 = vunpack.c.h.bf16 %v449
    %v1246 = vunpack.c.l.bf16 %v450
    %v1247 = vunpack.c.h.bf16 %v450
    %v1248 = vunpack.c.l.bf16 %v451
    %v1249 = vunpack.c.h.bf16 %v451
    %v1250 = vunpack.c.l.bf16 %v452
    %v1251 = vunpack.c.h.bf16 %v452
    %v1252 = vunpack.c.l.bf16 %v453
    %v1253 = vunpack.c.h.bf16 %v453
    %v1254 = vunpack.c.l.bf16 %v454
    %v1255 = vunpack.c.h.bf16 %v454
    %v1256 = vunpack.c.l.bf16 %v455
    %v1257 = vunpack.c.h.bf16 %v455
    %v1258 = vunpack.c.l.bf16 %v456
    %v1259 = vunpack.c.h.bf16 %v456
    %v1260 = vunpack.c.l.bf16 %v457
    %v1261 = vunpack.c.h.bf16 %v457
    %v1262 = vunpack.c.l.bf16 %v458
    %v1263 = vunpack.c.h.bf16 %v458
    %v1264 = vunpack.c.l.bf16 %v459
    %v1265 = vunpack.c.h.bf16 %v459
    %v1266 = vunpack.c.l.bf16 %v460
    %v1267 = vunpack.c.h.bf16 %v460
    %v1268 = vunpack.c.l.bf16 %v461
    %v1269 = vunpack.c.h.bf16 %v461
    %v1270 = vunpack.c.l.bf16 %v462
    %v1271 = vunpack.c.h.bf16 %v462
    %v1272 = vunpack.c.l.bf16 %v463
    %v1273 = vunpack.c.h.bf16 %v463
    %v1274 = vunpack.c.l.bf16 %v464
    %v1275 = vunpack.c.h.bf16 %v464
    %v1276 = vunpack.c.l.bf16 %v465
    %v1277 = vunpack.c.h.bf16 %v465
    %v1278 = vunpack.c.l.bf16 %v466
    %v1279 = vunpack.c.h.bf16 %v466
    %v1280 = vunpack.c.l.bf16 %v467
    %v1281 = vunpack.c.h.bf16 %v467
    %v1282 = vunpack.c.l.bf16 %v468
    %v1283 = vunpack.c.h.bf16 %v468
    %v1284 = vunpack.c.l.bf16 %v469
    %v1285 = vunpack.c.h.bf16 %v469
    %v1286 = vunpack.c.l.bf16 %v470
    %v1287 = vunpack.c.h.bf16 %v470
    %v1288 = vunpack.c.l.bf16 %v471
    %v1289 = vunpack.c.h.bf16 %v471
    %v1290 = vunpack.c.l.bf16 %v472
    %v1291 = vunpack.c.h.bf16 %v472
    %v1292 = vunpack.c.l.bf16 %v473
    %v1293 = vunpack.c.h.bf16 %v473
    %v1294 = vunpack.c.l.bf16 %v474
    %v1295 = vunpack.c.h.bf16 %v474
    %v1296 = vunpack.c.l.bf16 %v475
    %v1297 = vunpack.c.h.bf16 %v475
    %v1298 = vunpack.c.l.bf16 %v476
    %v1299 = vunpack.c.h.bf16 %v476
    %v1300 = vunpack.c.l.bf16 %v477
    %v1301 = vunpack.c.h.bf16 %v477
    %v1302 = vunpack.c.l.bf16 %v478
    %v1303 = vunpack.c.h.bf16 %v478
    %v1304 = vunpack.c.l.bf16 %v479
    %v1305 = vunpack.c.h.bf16 %v479
    %v1306 = vunpack.c.l.bf16 %v480
    %v1307 = vunpack.c.h.bf16 %v480
    %v1308 = vunpack.c.l.bf16 %v481
    %v1309 = vunpack.c.h.bf16 %v481
    %v1310 = vunpack.c.l.bf16 %v482
    %v1311 = vunpack.c.h.bf16 %v482
    %v1312 = vunpack.c.l.bf16 %v483
    %v1313 = vunpack.c.h.bf16 %v483
    %v1314 = vunpack.c.l.bf16 %v484
    %v1315 = vunpack.c.h.bf16 %v484
    %v1316 = vunpack.c.l.bf16 %v485
    %v1317 = vunpack.c.h.bf16 %v485
    %v1318 = vunpack.c.l.bf16 %v486
    %v1319 = vunpack.c.h.bf16 %v486
    %v1320 = vunpack.c.l.bf16 %v487
    %v1321 = vunpack.c.h.bf16 %v487
    %v1322 = vunpack.c.l.bf16 %v488
    %v1323 = vunpack.c.h.bf16 %v488
    %v1324 = vunpack.c.l.bf16 %v489
    %v1325 = vunpack.c.h.bf16 %v489
    %v1326 = vunpack.c.l.bf16 %v490
    %v1327 = vunpack.c.h.bf16 %v490
    %v1328 = vunpack.c.l.bf16 %v491
    %v1329 = vunpack.c.h.bf16 %v491
    %v1330 = vunpack.c.l.bf16 %v492
    %v1331 = vunpack.c.h.bf16 %v492
    %v1332 = vunpack.c.l.bf16 %v493
    %v1333 = vunpack.c.h.bf16 %v493
    %v1334 = vunpack.c.l.bf16 %v494
    %v1335 = vunpack.c.h.bf16 %v494
    %v1336 = vunpack.c.l.bf16 %v495
    %v1337 = vunpack.c.h.bf16 %v495
    %v1338 = vunpack.c.l.bf16 %v496
    %v1339 = vunpack.c.h.bf16 %v496
    %v1340 = vunpack.c.l.bf16 %v497
    %v1341 = vunpack.c.h.bf16 %v497
    %v1342 = vunpack.c.l.bf16 %v498
    %v1343 = vunpack.c.h.bf16 %v498
    %v1344 = vunpack.c.l.bf16 %v499
    %v1345 = vunpack.c.h.bf16 %v499
    %v1346 = vunpack.c.l.bf16 %v500
    %v1347 = vunpack.c.h.bf16 %v500
    %v1348 = vunpack.c.l.bf16 %v501
    %v1349 = vunpack.c.h.bf16 %v501
    %v1350 = vunpack.c.l.bf16 %v502
    %v1351 = vunpack.c.h.bf16 %v502
    %v1352 = vunpack.c.l.bf16 %v503
    %v1353 = vunpack.c.h.bf16 %v503
    %v1354 = vunpack.c.l.bf16 %v504
    %v1355 = vunpack.c.h.bf16 %v504
    %v1356 = vunpack.c.l.bf16 %v505
    %v1357 = vunpack.c.h.bf16 %v505
    %v1358 = vunpack.c.l.bf16 %v506
    %v1359 = vunpack.c.h.bf16 %v506
    %v1360 = vunpack.c.l.bf16 %v507
    %v1361 = vunpack.c.h.bf16 %v507
    %v1362 = vunpack.c.l.bf16 %v508
    %v1363 = vunpack.c.h.bf16 %v508
    %v1364 = vunpack.c.l.bf16 %v509
    %v1365 = vunpack.c.h.bf16 %v509
    %v1366 = vunpack.c.l.bf16 %v510
    %v1367 = vunpack.c.h.bf16 %v510
    %v1368 = vunpack.c.l.bf16 %v511
    %v1369 = vunpack.c.h.bf16 %v511
    %v1370 = vunpack.c.l.bf16 %v512
    %v1371 = vunpack.c.h.bf16 %v512
    %v1372 = vunpack.c.l.bf16 %v513
    %v1373 = vunpack.c.h.bf16 %v513
    %v1374 = vunpack.c.l.bf16 %v514
    %v1375 = vunpack.c.h.bf16 %v514
    %v1376 = vunpack.c.l.bf16 %v515
    %v1377 = vunpack.c.h.bf16 %v515
    %v1378 = vunpack.c.l.bf16 %v516
    %v1379 = vunpack.c.h.bf16 %v516
    %v1380 = vunpack.c.l.bf16 %v517
    %v1381 = vunpack.c.h.bf16 %v517
    %v1382 = vunpack.c.l.bf16 %v518
    %v1383 = vunpack.c.h.bf16 %v518
    %v1384 = vunpack.c.l.bf16 %v519
    %v1385 = vunpack.c.h.bf16 %v519
    %v1386 = vunpack.c.l.bf16 %v520
    %v1387 = vunpack.c.h.bf16 %v520
    %v1388 = vunpack.c.l.bf16 %v521
    %v1389 = vunpack.c.h.bf16 %v521
    %v1390 = vunpack.c.l.bf16 %v522
    %v1391 = vunpack.c.h.bf16 %v522
    %v1392 = vunpack.c.l.bf16 %v523
    %v1393 = vunpack.c.h.bf16 %v523
    %v1394 = vunpack.c.l.bf16 %v524
    %v1395 = vunpack.c.h.bf16 %v524
    %v1396 = vunpack.c.l.bf16 %v525
    %v1397 = vunpack.c.h.bf16 %v525
    %v1398 = vunpack.c.l.bf16 %v526
    %v1399 = vunpack.c.h.bf16 %v526
    %v1400 = vunpack.c.l.bf16 %v527
    %v1401 = vunpack.c.h.bf16 %v527
    %v1402 = vunpack.c.l.bf16 %v528
    %v1403 = vunpack.c.h.bf16 %v528
    %v1404 = vunpack.c.l.bf16 %v529
    %v1405 = vunpack.c.h.bf16 %v529
    %v1406 = vunpack.c.l.bf16 %v530
    %v1407 = vunpack.c.h.bf16 %v530
    %v1408 = vunpack.c.l.bf16 %v531
    %v1409 = vunpack.c.h.bf16 %v531
    %v1410 = vunpack.c.l.bf16 %v532
    %v1411 = vunpack.c.h.bf16 %v532
    %v1412 = vunpack.c.l.bf16 %v533
    %v1413 = vunpack.c.h.bf16 %v533
    %v1414 = vunpack.c.l.bf16 %v534
    %v1415 = vunpack.c.h.bf16 %v534
    %v1416 = vunpack.c.l.bf16 %v535
    %v1417 = vunpack.c.h.bf16 %v535
    %v1418 = vunpack.c.l.bf16 %v536
    %v1419 = vunpack.c.h.bf16 %v536
    %v1420 = vunpack.c.l.bf16 %v537
    %v1421 = vunpack.c.h.bf16 %v537
    %v1422 = vunpack.c.l.bf16 %v538
    %v1423 = vunpack.c.h.bf16 %v538
    %v1424 = vunpack.c.l.bf16 %v539
    %v1425 = vunpack.c.h.bf16 %v539
    %v1426 = vunpack.c.l.bf16 %v540
    %v1427 = vunpack.c.h.bf16 %v540
    %v1428 = vunpack.c.l.bf16 %v541
    %v1429 = vunpack.c.h.bf16 %v541
    %v1430 = vunpack.c.l.bf16 %v542
    %v1431 = vunpack.c.h.bf16 %v542
    %v1432 = vunpack.c.l.bf16 %v543
    %v1433 = vunpack.c.h.bf16 %v543
    %v1434 = vunpack.c.l.bf16 %v544
    %v1435 = vunpack.c.h.bf16 %v544
    %v1436 = vunpack.c.l.bf16 %v545
    %v1437 = vunpack.c.h.bf16 %v545
    %v1438 = vunpack.c.l.bf16 %v546
    %v1439 = vunpack.c.h.bf16 %v546
    %v1440 = vunpack.c.l.bf16 %v547
    %v1441 = vunpack.c.h.bf16 %v547
    %v1442 = vunpack.c.l.bf16 %v548
    %v1443 = vunpack.c.h.bf16 %v548
    %v1444 = vunpack.c.l.bf16 %v549
    %v1445 = vunpack.c.h.bf16 %v549
    %v1446 = vunpack.c.l.bf16 %v550
    %v1447 = vunpack.c.h.bf16 %v550
    %v1448 = vunpack.c.l.bf16 %v551
    %v1449 = vunpack.c.h.bf16 %v551
    %v1450 = vunpack.c.l.bf16 %v552
    %v1451 = vunpack.c.h.bf16 %v552
    %v1452 = vunpack.c.l.bf16 %v553
    %v1453 = vunpack.c.h.bf16 %v553
    %v1454 = vunpack.c.l.bf16 %v554
    %v1455 = vunpack.c.h.bf16 %v554
    %v1456 = vunpack.c.l.bf16 %v555
    %v1457 = vunpack.c.h.bf16 %v555
    %v1458 = vunpack.c.l.bf16 %v556
    %v1459 = vunpack.c.h.bf16 %v556
    %v1460 = vunpack.c.l.bf16 %v557
    %v1461 = vunpack.c.h.bf16 %v557
    %v1462 = vunpack.c.l.bf16 %v558
    %v1463 = vunpack.c.h.bf16 %v558
    %v1464 = vunpack.c.l.bf16 %v559
    %v1465 = vunpack.c.h.bf16 %v559
    %v1466 = vunpack.c.l.bf16 %v560
    %v1467 = vunpack.c.h.bf16 %v560
    %v1468 = vunpack.c.l.bf16 %v561
    %v1469 = vunpack.c.h.bf16 %v561
    %v1470 = vunpack.c.l.bf16 %v562
    %v1471 = vunpack.c.h.bf16 %v562
    %v1472 = vunpack.c.l.bf16 %v563
    %v1473 = vunpack.c.h.bf16 %v563
    %v1474 = vunpack.c.l.bf16 %v564
    %v1475 = vunpack.c.h.bf16 %v564
    %v1476 = vunpack.c.l.bf16 %v565
    %v1477 = vunpack.c.h.bf16 %v565
    %v1478 = vunpack.c.l.bf16 %v566
    %v1479 = vunpack.c.h.bf16 %v566
    %v1480 = vunpack.c.l.bf16 %v567
    %v1481 = vunpack.c.h.bf16 %v567
    %v1482 = vunpack.c.l.bf16 %v568
    %v1483 = vunpack.c.h.bf16 %v568
    %v1484 = vunpack.c.l.bf16 %v569
    %v1485 = vunpack.c.h.bf16 %v569
    %v1486 = vunpack.c.l.bf16 %v570
    %v1487 = vunpack.c.h.bf16 %v570
    %v1488 = vunpack.c.l.bf16 %v571
    %v1489 = vunpack.c.h.bf16 %v571
    %v1490 = vunpack.c.l.bf16 %v572
    %v1491 = vunpack.c.h.bf16 %v572
    %v1492 = vunpack.c.l.bf16 %v573
    %v1493 = vunpack.c.h.bf16 %v573
    %v1494 = vunpack.c.l.bf16 %v574
    %v1495 = vunpack.c.h.bf16 %v574
    %v1496 = vunpack.c.l.bf16 %v575
    %v1497 = vunpack.c.h.bf16 %v575
    %v1498 = vunpack.c.l.bf16 %v576
    %v1499 = vunpack.c.h.bf16 %v576
    %v1500 = vunpack.c.l.bf16 %v577
    %v1501 = vunpack.c.h.bf16 %v577
    %v1502 = vunpack.c.l.bf16 %v578
    %v1503 = vunpack.c.h.bf16 %v578
    %v1504 = vunpack.c.l.bf16 %v579
    %v1505 = vunpack.c.h.bf16 %v579
    %v1506 = vunpack.c.l.bf16 %v580
    %v1507 = vunpack.c.h.bf16 %v580
    %v1508 = vunpack.c.l.bf16 %v581
    %v1509 = vunpack.c.h.bf16 %v581
    %v1510 = vunpack.c.l.bf16 %v582
    %v1511 = vunpack.c.h.bf16 %v582
    %v1512 = vunpack.c.l.bf16 %v583
    %v1513 = vunpack.c.h.bf16 %v583
    %v1514 = vunpack.c.l.bf16 %v584
    %v1515 = vunpack.c.h.bf16 %v584
    %v1516 = vunpack.c.l.bf16 %v585
    %v1517 = vunpack.c.h.bf16 %v585
    %v1518 = vunpack.c.l.bf16 %v586
    %v1519 = vunpack.c.h.bf16 %v586
    %v1520 = vunpack.c.l.bf16 %v587
    %v1521 = vunpack.c.h.bf16 %v587
    %v1522 = vunpack.c.l.bf16 %v588
    %v1523 = vunpack.c.h.bf16 %v588
    %v1524 = vunpack.c.l.bf16 %v589
    %v1525 = vunpack.c.h.bf16 %v589
    %v1526 = vunpack.c.l.bf16 %v590
    %v1527 = vunpack.c.h.bf16 %v590
    %v1528 = vunpack.c.l.bf16 %v591
    %v1529 = vunpack.c.h.bf16 %v591
    %v1530 = vunpack.c.l.bf16 %v592
    %v1531 = vunpack.c.h.bf16 %v592
    %v1532 = vunpack.c.l.bf16 %v593
    %v1533 = vunpack.c.h.bf16 %v593
    %v1534 = vunpack.c.l.bf16 %v594
    %v1535 = vunpack.c.h.bf16 %v594
    %v1536 = vunpack.c.l.bf16 %v595
    %v1537 = vunpack.c.h.bf16 %v595
    %v1538 = vunpack.c.l.bf16 %v596
    %v1539 = vunpack.c.h.bf16 %v596
    %v1540 = vunpack.c.l.bf16 %v597
    %v1541 = vunpack.c.h.bf16 %v597
    %v1542 = vunpack.c.l.bf16 %v598
    %v1543 = vunpack.c.h.bf16 %v598
    %v1544 = vunpack.c.l.bf16 %v599
    %v1545 = vunpack.c.h.bf16 %v599
    %v1546 = vunpack.c.l.bf16 %v600
    %v1547 = vunpack.c.h.bf16 %v600
    %v1548 = vunpack.c.l.bf16 %v601
    %v1549 = vunpack.c.h.bf16 %v601
    %v1550 = vunpack.c.l.bf16 %v602
    %v1551 = vunpack.c.h.bf16 %v602
    %v1552 = vunpack.c.l.bf16 %v603
    %v1553 = vunpack.c.h.bf16 %v603
    %v1554 = vunpack.c.l.bf16 %v604
    %v1555 = vunpack.c.h.bf16 %v604
    %v1556 = vunpack.c.l.bf16 %v605
    %v1557 = vunpack.c.h.bf16 %v605
    %v1558 = vunpack.c.l.bf16 %v606
    %v1559 = vunpack.c.h.bf16 %v606
    %v1560 = vunpack.c.l.bf16 %v607
    %v1561 = vunpack.c.h.bf16 %v607
    %v1562 = vunpack.c.l.bf16 %v608
    %v1563 = vunpack.c.h.bf16 %v608
    %v1564 = vunpack.c.l.bf16 %v609
    %v1565 = vunpack.c.h.bf16 %v609
    %v1566 = vunpack.c.l.bf16 %v610
    %v1567 = vunpack.c.h.bf16 %v610
    %v1568 = vunpack.c.l.bf16 %v611
    %v1569 = vunpack.c.h.bf16 %v611
    %v1570 = vunpack.c.l.bf16 %v612
    %v1571 = vunpack.c.h.bf16 %v612
    %v1572 = vunpack.c.l.bf16 %v613
    %v1573 = vunpack.c.h.bf16 %v613
    %v1574 = vunpack.c.l.bf16 %v614
    %v1575 = vunpack.c.h.bf16 %v614
    %v1576 = vunpack.c.l.bf16 %v615
    %v1577 = vunpack.c.h.bf16 %v615
    %v1578 = vunpack.c.l.bf16 %v616
    %v1579 = vunpack.c.h.bf16 %v616
    %v1580 = vunpack.c.l.bf16 %v617
    %v1581 = vunpack.c.h.bf16 %v617
    %v1582 = vunpack.c.l.bf16 %v618
    %v1583 = vunpack.c.h.bf16 %v618
    %v1584 = vunpack.c.l.bf16 %v619
    %v1585 = vunpack.c.h.bf16 %v619
    %v1586 = vunpack.c.l.bf16 %v620
    %v1587 = vunpack.c.h.bf16 %v620
    %v1588 = vunpack.c.l.bf16 %v621
    %v1589 = vunpack.c.h.bf16 %v621
    %v1590 = vunpack.c.l.bf16 %v622
    %v1591 = vunpack.c.h.bf16 %v622
    %v1592 = vunpack.c.l.bf16 %v623
    %v1593 = vunpack.c.h.bf16 %v623
    %v1594 = vunpack.c.l.bf16 %v624
    %v1595 = vunpack.c.h.bf16 %v624
    %v1596 = vunpack.c.l.bf16 %v625
    %v1597 = vunpack.c.h.bf16 %v625
    %v1598 = vunpack.c.l.bf16 %v626
    %v1599 = vunpack.c.h.bf16 %v626
    %v1600 = vunpack.c.l.bf16 %v627
    %v1601 = vunpack.c.h.bf16 %v627
    %v1602 = vunpack.c.l.bf16 %v628
    %v1603 = vunpack.c.h.bf16 %v628
    %v1604 = vunpack.c.l.bf16 %v629
    %v1605 = vunpack.c.h.bf16 %v629
    %v1606 = vunpack.c.l.bf16 %v630
    %v1607 = vunpack.c.h.bf16 %v630
    %v1608 = vunpack.c.l.bf16 %v631
    %v1609 = vunpack.c.h.bf16 %v631
    %v1610 = vunpack.c.l.bf16 %v632
    %v1611 = vunpack.c.h.bf16 %v632
    %v1612 = vunpack.c.l.bf16 %v633
    %v1613 = vunpack.c.h.bf16 %v633
    %v1614 = vunpack.c.l.bf16 %v634
    %v1615 = vunpack.c.h.bf16 %v634
    %v1616 = vunpack.c.l.bf16 %v635
    %v1617 = vunpack.c.h.bf16 %v635
    %v1618 = vunpack.c.l.bf16 %v636
    %v1619 = vunpack.c.h.bf16 %v636
    %v1620 = vunpack.c.l.bf16 %v637
    %v1621 = vunpack.c.h.bf16 %v637
    %v1622 = vunpack.c.l.bf16 %v638
    %v1623 = vunpack.c.h.bf16 %v638
    %v1624 = vunpack.c.l.bf16 %v639
    %v1625 = vunpack.c.h.bf16 %v639
    %v1626 = vunpack.c.l.bf16 %v640
    %v1627 = vunpack.c.h.bf16 %v640
    %v1628 = vunpack.c.l.bf16 %v641
    %v1629 = vunpack.c.h.bf16 %v641
    %v1630 = vunpack.c.l.bf16 %v642
    %v1631 = vunpack.c.h.bf16 %v642
    %v1632 = vunpack.c.l.bf16 %v643
    %v1633 = vunpack.c.h.bf16 %v643
    %v1634 = vunpack.c.l.bf16 %v644
    %v1635 = vunpack.c.h.bf16 %v644
    %v1636 = vunpack.c.l.bf16 %v645
    %v1637 = vunpack.c.h.bf16 %v645
    %v1638 = vunpack.c.l.bf16 %v646
    %v1639 = vunpack.c.h.bf16 %v646
    %v1640 = vunpack.c.l.bf16 %v647
    %v1641 = vunpack.c.h.bf16 %v647
    %v1642 = vunpack.c.l.bf16 %v648
    %v1643 = vunpack.c.h.bf16 %v648
    %v1644 = vunpack.c.l.bf16 %v649
    %v1645 = vunpack.c.h.bf16 %v649
    %v1646 = vunpack.c.l.bf16 %v650
    %v1647 = vunpack.c.h.bf16 %v650
    %v1648 = vunpack.c.l.bf16 %v651
    %v1649 = vunpack.c.h.bf16 %v651
    %v1650 = vunpack.c.l.bf16 %v652
    %v1651 = vunpack.c.h.bf16 %v652
    %v1652 = vunpack.c.l.bf16 %v653
    %v1653 = vunpack.c.h.bf16 %v653
    %v1654 = vunpack.c.l.bf16 %v654
    %v1655 = vunpack.c.h.bf16 %v654
    %v1656 = vunpack.c.l.bf16 %v655
    %v1657 = vunpack.c.h.bf16 %v655
    %v1658 = vunpack.c.l.bf16 %v656
    %v1659 = vunpack.c.h.bf16 %v656
    %v1660 = vunpack.c.l.bf16 %v657
    %v1661 = vunpack.c.h.bf16 %v657
    %v1662 = vunpack.c.l.bf16 %v658
    %v1663 = vunpack.c.h.bf16 %v658
    %v1664 = vunpack.c.l.bf16 %v659
    %v1665 = vunpack.c.h.bf16 %v659
    %v1666 = vunpack.c.l.bf16 %v660
    %v1667 = vunpack.c.h.bf16 %v660
    %v1668 = vunpack.c.l.bf16 %v661
    %v1669 = vunpack.c.h.bf16 %v661
    %v1670 = vunpack.c.l.bf16 %v662
    %v1671 = vunpack.c.h.bf16 %v662
    %v1672 = vunpack.c.l.bf16 %v663
    %v1673 = vunpack.c.h.bf16 %v663
    %v1674 = vunpack.c.l.bf16 %v664
    %v1675 = vunpack.c.h.bf16 %v664
    %v1676 = vunpack.c.l.bf16 %v665
    %v1677 = vunpack.c.h.bf16 %v665
    %v1678 = vunpack.c.l.bf16 %v666
    %v1679 = vunpack.c.h.bf16 %v666
    %v1680 = vunpack.c.l.bf16 %v667
    %v1681 = vunpack.c.h.bf16 %v667
    %v1682 = vunpack.c.l.bf16 %v668
    %v1683 = vunpack.c.h.bf16 %v668
    %v1684 = vunpack.c.l.bf16 %v669
    %v1685 = vunpack.c.h.bf16 %v669
    %v1686 = vunpack.c.l.bf16 %v670
    %v1687 = vunpack.c.h.bf16 %v670
    %v1688 = vunpack.c.l.bf16 %v671
    %v1689 = vunpack.c.h.bf16 %v671
    %v1690 = vunpack.c.l.bf16 %v672
    %v1691 = vunpack.c.h.bf16 %v672
    %v1692 = vunpack.c.l.bf16 %v673
    %v1693 = vunpack.c.h.bf16 %v673
    %v1694 = vunpack.c.l.bf16 %v674
    %v1695 = vunpack.c.h.bf16 %v674
    %v1696 = vunpack.c.l.bf16 %v675
    %v1697 = vunpack.c.h.bf16 %v675
    %v1698 = vunpack.c.l.bf16 %v676
    %v1699 = vunpack.c.h.bf16 %v676
    %v1700 = vunpack.c.l.bf16 %v677
    %v1701 = vunpack.c.h.bf16 %v677
    %v1702 = vld [vmem:[#allocation5] sm:$0xff]
    %v1703 = vld [vmem:[#allocation5 + $0x8] sm:$0xff]
    %v1712 = vcombine.high %v158, %v158
    %v1713 = vcombine.high %v159, %v159
    %v1714 = vcombine.high %v160, %v160
    %v1715 = vcombine.high %v161, %v161
    %v1716 = vcombine.high %v162, %v162
    %v1717 = vcombine.high %v163, %v163
    %v1718 = vcombine.high %v164, %v164
    %v1719 = vcombine.high %v165, %v165
    %v1730 = vcombine.high %v1702, %v1702
    %v1731 = vcombine.high %v1703, %v1703
    %1734 = vmatprep.subr.mxu0 %v739
    %1735 = vmatpush1.msra.mxu0 %v738
    %1736 = vmatprep.subr.mxu0 %v735
    %1737 = vmatpush1.msra.mxu0 %v734
    %1738 = vmatprep.subr.mxu0 %v731
    %1739 = vmatpush1.msra.mxu0 %v730
    %1740 = vmatprep.subr.mxu0 %v727
    %1741 = vmatpush1.msra.mxu0 %v726
    %1742 = vmatprep.subr.mxu0 %v723
    %1743 = vmatpush1.msra.mxu0 %v722
    %1744 = vmatprep.subr.mxu0 %v719
    %1745 = vmatpush1.msra.mxu0 %v718
    %1746 = vmatprep.subr.mxu0 %v715
    %1747 = vmatpush1.msra.mxu0 %v714
    %1748 = vmatprep.subr.mxu0 %v711
    %1749 = vmatpush1.msra.mxu0 %v710
    %1750 = vmatprep.subr.mxu0 %v707
    %1751 = vmatpush1.msra.mxu0 %v706
    %1752 = vmatprep.subr.mxu0 %v703
    %1753 = vmatpush1.msra.mxu0 %v702
    %1754 = vmatprep.subr.mxu0 %v699
    %1755 = vmatpush1.msra.mxu0 %v698
    %1756 = vmatprep.subr.mxu0 %v695
    %1757 = vmatpush1.msra.mxu0 %v694
    %1758 = vmatprep.subr.mxu0 %v691
    %1759 = vmatpush1.msra.mxu0 %v690
    %1760 = vmatprep.subr.mxu0 %v687
    %1761 = vmatpush1.msra.mxu0 %v686
    %1762 = vmatprep.subr.mxu0 %v683
    %1763 = vmatpush1.msra.mxu0 %v682
    %1764 = vmatprep.subr.mxu0 %v679
    %1765 = vmatpush1.msra.mxu0 %v678
    %1766 = vmatprep.subr.mxu0 %v803
    %1767 = vmatpush2.msra.mxu0 %v802
    %1768 = vmatprep.subr.mxu0 %v799
    %1769 = vmatpush2.msra.mxu0 %v798
    %1770 = vmatprep.subr.mxu0 %v795
    %1771 = vmatpush2.msra.mxu0 %v794
    %1772 = vmatprep.subr.mxu0 %v791
    %1773 = vmatpush2.msra.mxu0 %v790
    %1774 = vmatprep.subr.mxu0 %v787
    %1775 = vmatpush2.msra.mxu0 %v786
    %1776 = vmatprep.subr.mxu0 %v783
    %1777 = vmatpush2.msra.mxu0 %v782
    %1778 = vmatprep.subr.mxu0 %v779
    %1779 = vmatpush2.msra.mxu0 %v778
    %1780 = vmatprep.subr.mxu0 %v775
    %1781 = vmatpush2.msra.mxu0 %v774
    %1782 = vmatprep.subr.mxu0 %v771
    %1783 = vmatpush2.msra.mxu0 %v770
    %1784 = vmatprep.subr.mxu0 %v767
    %1785 = vmatpush2.msra.mxu0 %v766
    %1786 = vmatprep.subr.mxu0 %v763
    %1787 = vmatpush2.msra.mxu0 %v762
    %1788 = vmatprep.subr.mxu0 %v759
    %1789 = vmatpush2.msra.mxu0 %v758
    %1790 = vmatprep.subr.mxu0 %v755
    %1791 = vmatpush2.msra.mxu0 %v754
    %1792 = vmatprep.subr.mxu0 %v751
    %1793 = vmatpush2.msra.mxu0 %v750
    %1794 = vmatprep.subr.mxu0 %v747
    %1795 = vmatpush2.msra.mxu0 %v746
    %1796 = vmatprep.subr.mxu0 %v743
    %1797 = vmatpush2.msra.mxu0 %v742
    %1798 = vmatprep.mubr.f32.mxu0 %v1712
    %1799 = vmatmul.mubr.f32.gmra.mxu0 %v158
    %v1800 = vpop.f32.mrf.mxu0
    %v1801 = vadd.f32 %v1702, %v1800
    %v1802 = vpop.f32.mrf.mxu0
    %v1803 = vadd.f32 %v1730, %v1802
    %1804 = vdwg.mxu0
    %1805 = vmatprep.subr.mxu0 %v867
    %1806 = vmatpush1.msra.mxu0 %v866
    %1807 = vmatprep.subr.mxu0 %v863
    %1808 = vmatpush1.msra.mxu0 %v862
    %1809 = vmatprep.subr.mxu0 %v859
    %1810 = vmatpush1.msra.mxu0 %v858
    %1811 = vmatprep.subr.mxu0 %v855
    %1812 = vmatpush1.msra.mxu0 %v854
    %1813 = vmatprep.subr.mxu0 %v851
    %1814 = vmatpush1.msra.mxu0 %v850
    %1815 = vmatprep.subr.mxu0 %v847
    %1816 = vmatpush1.msra.mxu0 %v846
    %1817 = vmatprep.subr.mxu0 %v843
    %1818 = vmatpush1.msra.mxu0 %v842
    %1819 = vmatprep.subr.mxu0 %v839
    %1820 = vmatpush1.msra.mxu0 %v838
    %1821 = vmatprep.subr.mxu0 %v835
    %1822 = vmatpush1.msra.mxu0 %v834
    %1823 = vmatprep.subr.mxu0 %v831
    %1824 = vmatpush1.msra.mxu0 %v830
    %1825 = vmatprep.subr.mxu0 %v827
    %1826 = vmatpush1.msra.mxu0 %v826
    %1827 = vmatprep.subr.mxu0 %v823
    %1828 = vmatpush1.msra.mxu0 %v822
    %1829 = vmatprep.subr.mxu0 %v819
    %1830 = vmatpush1.msra.mxu0 %v818
    %1831 = vmatprep.subr.mxu0 %v815
    %1832 = vmatpush1.msra.mxu0 %v814
    %1833 = vmatprep.subr.mxu0 %v811
    %1834 = vmatpush1.msra.mxu0 %v810
    %1835 = vmatprep.subr.mxu0 %v807
    %1836 = vmatpush1.msra.mxu0 %v806
    %1837 = vmatprep.subr.mxu0 %v931
    %1838 = vmatpush2.msra.mxu0 %v930
    %1839 = vmatprep.subr.mxu0 %v927
    %1840 = vmatpush2.msra.mxu0 %v926
    %1841 = vmatprep.subr.mxu0 %v923
    %1842 = vmatpush2.msra.mxu0 %v922
    %1843 = vmatprep.subr.mxu0 %v919
    %1844 = vmatpush2.msra.mxu0 %v918
    %1845 = vmatprep.subr.mxu0 %v915
    %1846 = vmatpush2.msra.mxu0 %v914
    %1847 = vmatprep.subr.mxu0 %v911
    %1848 = vmatpush2.msra.mxu0 %v910
    %1849 = vmatprep.subr.mxu0 %v907
    %1850 = vmatpush2.msra.mxu0 %v906
    %1851 = vmatprep.subr.mxu0 %v903
    %1852 = vmatpush2.msra.mxu0 %v902
    %1853 = vmatprep.subr.mxu0 %v899
    %1854 = vmatpush2.msra.mxu0 %v898
    %1855 = vmatprep.subr.mxu0 %v895
    %1856 = vmatpush2.msra.mxu0 %v894
    %1857 = vmatprep.subr.mxu0 %v891
    %1858 = vmatpush2.msra.mxu0 %v890
    %1859 = vmatprep.subr.mxu0 %v887
    %1860 = vmatpush2.msra.mxu0 %v886
    %1861 = vmatprep.subr.mxu0 %v883
    %1862 = vmatpush2.msra.mxu0 %v882
    %1863 = vmatprep.subr.mxu0 %v879
    %1864 = vmatpush2.msra.mxu0 %v878
    %1865 = vmatprep.subr.mxu0 %v875
    %1866 = vmatpush2.msra.mxu0 %v874
    %1867 = vmatprep.subr.mxu0 %v871
    %1868 = vmatpush2.msra.mxu0 %v870
    %1869 = vmatprep.mubr.f32.mxu0 %v1713
    %1870 = vmatmul.mubr.f32.gmra.mxu0 %v159
    %v1871 = vpop.f32.mrf.mxu0
    %v1872 = vadd.f32 %v1801, %v1871
    %v1873 = vpop.f32.mrf.mxu0
    %v1874 = vadd.f32 %v1803, %v1873
    %1875 = vdwg.mxu0
    %1876 = vmatprep.subr.mxu0 %v995
    %1877 = vmatpush1.msra.mxu0 %v994
    %1878 = vmatprep.subr.mxu0 %v991
    %1879 = vmatpush1.msra.mxu0 %v990
    %1880 = vmatprep.subr.mxu0 %v987
    %1881 = vmatpush1.msra.mxu0 %v986
    %1882 = vmatprep.subr.mxu0 %v983
    %1883 = vmatpush1.msra.mxu0 %v982
    %1884 = vmatprep.subr.mxu0 %v979
    %1885 = vmatpush1.msra.mxu0 %v978
    %1886 = vmatprep.subr.mxu0 %v975
    %1887 = vmatpush1.msra.mxu0 %v974
    %1888 = vmatprep.subr.mxu0 %v971
    %1889 = vmatpush1.msra.mxu0 %v970
    %1890 = vmatprep.subr.mxu0 %v967
    %1891 = vmatpush1.msra.mxu0 %v966
    %1892 = vmatprep.subr.mxu0 %v963
    %1893 = vmatpush1.msra.mxu0 %v962
    %1894 = vmatprep.subr.mxu0 %v959
    %1895 = vmatpush1.msra.mxu0 %v958
    %1896 = vmatprep.subr.mxu0 %v955
    %1897 = vmatpush1.msra.mxu0 %v954
    %1898 = vmatprep.subr.mxu0 %v951
    %1899 = vmatpush1.msra.mxu0 %v950
    %1900 = vmatprep.subr.mxu0 %v947
    %1901 = vmatpush1.msra.mxu0 %v946
    %1902 = vmatprep.subr.mxu0 %v943
    %1903 = vmatpush1.msra.mxu0 %v942
    %1904 = vmatprep.subr.mxu0 %v939
    %1905 = vmatpush1.msra.mxu0 %v938
    %1906 = vmatprep.subr.mxu0 %v935
    %1907 = vmatpush1.msra.mxu0 %v934
    %1908 = vmatprep.subr.mxu0 %v1059
    %1909 = vmatpush2.msra.mxu0 %v1058
    %1910 = vmatprep.subr.mxu0 %v1055
    %1911 = vmatpush2.msra.mxu0 %v1054
    %1912 = vmatprep.subr.mxu0 %v1051
    %1913 = vmatpush2.msra.mxu0 %v1050
    %1914 = vmatprep.subr.mxu0 %v1047
    %1915 = vmatpush2.msra.mxu0 %v1046
    %1916 = vmatprep.subr.mxu0 %v1043
    %1917 = vmatpush2.msra.mxu0 %v1042
    %1918 = vmatprep.subr.mxu0 %v1039
    %1919 = vmatpush2.msra.mxu0 %v1038
    %1920 = vmatprep.subr.mxu0 %v1035
    %1921 = vmatpush2.msra.mxu0 %v1034
    %1922 = vmatprep.subr.mxu0 %v1031
    %1923 = vmatpush2.msra.mxu0 %v1030
    %1924 = vmatprep.subr.mxu0 %v1027
    %1925 = vmatpush2.msra.mxu0 %v1026
    %1926 = vmatprep.subr.mxu0 %v1023
    %1927 = vmatpush2.msra.mxu0 %v1022
    %1928 = vmatprep.subr.mxu0 %v1019
    %1929 = vmatpush2.msra.mxu0 %v1018
    %1930 = vmatprep.subr.mxu0 %v1015
    %1931 = vmatpush2.msra.mxu0 %v1014
    %1932 = vmatprep.subr.mxu0 %v1011
    %1933 = vmatpush2.msra.mxu0 %v1010
    %1934 = vmatprep.subr.mxu0 %v1007
    %1935 = vmatpush2.msra.mxu0 %v1006
    %1936 = vmatprep.subr.mxu0 %v1003
    %1937 = vmatpush2.msra.mxu0 %v1002
    %1938 = vmatprep.subr.mxu0 %v999
    %1939 = vmatpush2.msra.mxu0 %v998
    %1940 = vmatprep.mubr.f32.mxu0 %v1714
    %1941 = vmatmul.mubr.f32.gmra.mxu0 %v160
    %v1942 = vpop.f32.mrf.mxu0
    %v1943 = vadd.f32 %v1872, %v1942
    %v1944 = vpop.f32.mrf.mxu0
    %v1945 = vadd.f32 %v1874, %v1944
    %1946 = vdwg.mxu0
    %1947 = vmatprep.subr.mxu0 %v1123
    %1948 = vmatpush1.msra.mxu0 %v1122
    %1949 = vmatprep.subr.mxu0 %v1119
    %1950 = vmatpush1.msra.mxu0 %v1118
    %1951 = vmatprep.subr.mxu0 %v1115
    %1952 = vmatpush1.msra.mxu0 %v1114
    %1953 = vmatprep.subr.mxu0 %v1111
    %1954 = vmatpush1.msra.mxu0 %v1110
    %1955 = vmatprep.subr.mxu0 %v1107
    %1956 = vmatpush1.msra.mxu0 %v1106
    %1957 = vmatprep.subr.mxu0 %v1103
    %1958 = vmatpush1.msra.mxu0 %v1102
    %1959 = vmatprep.subr.mxu0 %v1099
    %1960 = vmatpush1.msra.mxu0 %v1098
    %1961 = vmatprep.subr.mxu0 %v1095
    %1962 = vmatpush1.msra.mxu0 %v1094
    %1963 = vmatprep.subr.mxu0 %v1091
    %1964 = vmatpush1.msra.mxu0 %v1090
    %1965 = vmatprep.subr.mxu0 %v1087
    %1966 = vmatpush1.msra.mxu0 %v1086
    %1967 = vmatprep.subr.mxu0 %v1083
    %1968 = vmatpush1.msra.mxu0 %v1082
    %1969 = vmatprep.subr.mxu0 %v1079
    %1970 = vmatpush1.msra.mxu0 %v1078
    %1971 = vmatprep.subr.mxu0 %v1075
    %1972 = vmatpush1.msra.mxu0 %v1074
    %1973 = vmatprep.subr.mxu0 %v1071
    %1974 = vmatpush1.msra.mxu0 %v1070
    %1975 = vmatprep.subr.mxu0 %v1067
    %1976 = vmatpush1.msra.mxu0 %v1066
    %1977 = vmatprep.subr.mxu0 %v1063
    %1978 = vmatpush1.msra.mxu0 %v1062
    %1979 = vmatprep.subr.mxu0 %v1187
    %1980 = vmatpush2.msra.mxu0 %v1186
    %1981 = vmatprep.subr.mxu0 %v1183
    %1982 = vmatpush2.msra.mxu0 %v1182
    %1983 = vmatprep.subr.mxu0 %v1179
    %1984 = vmatpush2.msra.mxu0 %v1178
    %1985 = vmatprep.subr.mxu0 %v1175
    %1986 = vmatpush2.msra.mxu0 %v1174
    %1987 = vmatprep.subr.mxu0 %v1171
    %1988 = vmatpush2.msra.mxu0 %v1170
    %1989 = vmatprep.subr.mxu0 %v1167
    %1990 = vmatpush2.msra.mxu0 %v1166
    %1991 = vmatprep.subr.mxu0 %v1163
    %1992 = vmatpush2.msra.mxu0 %v1162
    %1993 = vmatprep.subr.mxu0 %v1159
    %1994 = vmatpush2.msra.mxu0 %v1158
    %1995 = vmatprep.subr.mxu0 %v1155
    %1996 = vmatpush2.msra.mxu0 %v1154
    %1997 = vmatprep.subr.mxu0 %v1151
    %1998 = vmatpush2.msra.mxu0 %v1150
    %1999 = vmatprep.subr.mxu0 %v1147
    %2000 = vmatpush2.msra.mxu0 %v1146
    %2001 = vmatprep.subr.mxu0 %v1143
    %2002 = vmatpush2.msra.mxu0 %v1142
    %2003 = vmatprep.subr.mxu0 %v1139
    %2004 = vmatpush2.msra.mxu0 %v1138
    %2005 = vmatprep.subr.mxu0 %v1135
    %2006 = vmatpush2.msra.mxu0 %v1134
    %2007 = vmatprep.subr.mxu0 %v1131
    %2008 = vmatpush2.msra.mxu0 %v1130
    %2009 = vmatprep.subr.mxu0 %v1127
    %2010 = vmatpush2.msra.mxu0 %v1126
    %2011 = vmatprep.mubr.f32.mxu0 %v1715
    %2012 = vmatmul.mubr.f32.gmra.mxu0 %v161
    %v2013 = vpop.f32.mrf.mxu0
    %v2014 = vadd.f32 %v1943, %v2013
    %v2015 = vpop.f32.mrf.mxu0
    %v2016 = vadd.f32 %v1945, %v2015
    %2017 = vdwg.mxu0
    %2018 = vmatprep.subr.mxu0 %v1251
    %2019 = vmatpush1.msra.mxu0 %v1250
    %2020 = vmatprep.subr.mxu0 %v1247
    %2021 = vmatpush1.msra.mxu0 %v1246
    %2022 = vmatprep.subr.mxu0 %v1243
    %2023 = vmatpush1.msra.mxu0 %v1242
    %2024 = vmatprep.subr.mxu0 %v1239
    %2025 = vmatpush1.msra.mxu0 %v1238
    %2026 = vmatprep.subr.mxu0 %v1235
    %2027 = vmatpush1.msra.mxu0 %v1234
    %2028 = vmatprep.subr.mxu0 %v1231
    %2029 = vmatpush1.msra.mxu0 %v1230
    %2030 = vmatprep.subr.mxu0 %v1227
    %2031 = vmatpush1.msra.mxu0 %v1226
    %2032 = vmatprep.subr.mxu0 %v1223
    %2033 = vmatpush1.msra.mxu0 %v1222
    %2034 = vmatprep.subr.mxu0 %v1219
    %2035 = vmatpush1.msra.mxu0 %v1218
    %2036 = vmatprep.subr.mxu0 %v1215
    %2037 = vmatpush1.msra.mxu0 %v1214
    %2038 = vmatprep.subr.mxu0 %v1211
    %2039 = vmatpush1.msra.mxu0 %v1210
    %2040 = vmatprep.subr.mxu0 %v1207
    %2041 = vmatpush1.msra.mxu0 %v1206
    %2042 = vmatprep.subr.mxu0 %v1203
    %2043 = vmatpush1.msra.mxu0 %v1202
    %2044 = vmatprep.subr.mxu0 %v1199
    %2045 = vmatpush1.msra.mxu0 %v1198
    %2046 = vmatprep.subr.mxu0 %v1195
    %2047 = vmatpush1.msra.mxu0 %v1194
    %2048 = vmatprep.subr.mxu0 %v1191
    %2049 = vmatpush1.msra.mxu0 %v1190
    %2050 = vmatprep.subr.mxu0 %v1315
    %2051 = vmatpush2.msra.mxu0 %v1314
    %2052 = vmatprep.subr.mxu0 %v1311
    %2053 = vmatpush2.msra.mxu0 %v1310
    %2054 = vmatprep.subr.mxu0 %v1307
    %2055 = vmatpush2.msra.mxu0 %v1306
    %2056 = vmatprep.subr.mxu0 %v1303
    %2057 = vmatpush2.msra.mxu0 %v1302
    %2058 = vmatprep.subr.mxu0 %v1299
    %2059 = vmatpush2.msra.mxu0 %v1298
    %2060 = vmatprep.subr.mxu0 %v1295
    %2061 = vmatpush2.msra.mxu0 %v1294
    %2062 = vmatprep.subr.mxu0 %v1291
    %2063 = vmatpush2.msra.mxu0 %v1290
    %2064 = vmatprep.subr.mxu0 %v1287
    %2065 = vmatpush2.msra.mxu0 %v1286
    %2066 = vmatprep.subr.mxu0 %v1283
    %2067 = vmatpush2.msra.mxu0 %v1282
    %2068 = vmatprep.subr.mxu0 %v1279
    %2069 = vmatpush2.msra.mxu0 %v1278
    %2070 = vmatprep.subr.mxu0 %v1275
    %2071 = vmatpush2.msra.mxu0 %v1274
    %2072 = vmatprep.subr.mxu0 %v1271
    %2073 = vmatpush2.msra.mxu0 %v1270
    %2074 = vmatprep.subr.mxu0 %v1267
    %2075 = vmatpush2.msra.mxu0 %v1266
    %2076 = vmatprep.subr.mxu0 %v1263
    %2077 = vmatpush2.msra.mxu0 %v1262
    %2078 = vmatprep.subr.mxu0 %v1259
    %2079 = vmatpush2.msra.mxu0 %v1258
    %2080 = vmatprep.subr.mxu0 %v1255
    %2081 = vmatpush2.msra.mxu0 %v1254
    %2082 = vmatprep.mubr.f32.mxu0 %v1716
    %2083 = vmatmul.mubr.f32.gmra.mxu0 %v162
    %v2084 = vpop.f32.mrf.mxu0
    %v2085 = vadd.f32 %v2014, %v2084
    %v2086 = vpop.f32.mrf.mxu0
    %v2087 = vadd.f32 %v2016, %v2086
    %2088 = vdwg.mxu0
    %2089 = vmatprep.subr.mxu0 %v1379
    %2090 = vmatpush1.msra.mxu0 %v1378
    %2091 = vmatprep.subr.mxu0 %v1375
    %2092 = vmatpush1.msra.mxu0 %v1374
    %2093 = vmatprep.subr.mxu0 %v1371
    %2094 = vmatpush1.msra.mxu0 %v1370
    %2095 = vmatprep.subr.mxu0 %v1367
    %2096 = vmatpush1.msra.mxu0 %v1366
    %2097 = vmatprep.subr.mxu0 %v1363
    %2098 = vmatpush1.msra.mxu0 %v1362
    %2099 = vmatprep.subr.mxu0 %v1359
    %2100 = vmatpush1.msra.mxu0 %v1358
    %2101 = vmatprep.subr.mxu0 %v1355
    %2102 = vmatpush1.msra.mxu0 %v1354
    %2103 = vmatprep.subr.mxu0 %v1351
    %2104 = vmatpush1.msra.mxu0 %v1350
    %2105 = vmatprep.subr.mxu0 %v1347
    %2106 = vmatpush1.msra.mxu0 %v1346
    %2107 = vmatprep.subr.mxu0 %v1343
    %2108 = vmatpush1.msra.mxu0 %v1342
    %2109 = vmatprep.subr.mxu0 %v1339
    %2110 = vmatpush1.msra.mxu0 %v1338
    %2111 = vmatprep.subr.mxu0 %v1335
    %2112 = vmatpush1.msra.mxu0 %v1334
    %2113 = vmatprep.subr.mxu0 %v1331
    %2114 = vmatpush1.msra.mxu0 %v1330
    %2115 = vmatprep.subr.mxu0 %v1327
    %2116 = vmatpush1.msra.mxu0 %v1326
    %2117 = vmatprep.subr.mxu0 %v1323
    %2118 = vmatpush1.msra.mxu0 %v1322
    %2119 = vmatprep.subr.mxu0 %v1319
    %2120 = vmatpush1.msra.mxu0 %v1318
    %2121 = vmatprep.subr.mxu0 %v1443
    %2122 = vmatpush2.msra.mxu0 %v1442
    %2123 = vmatprep.subr.mxu0 %v1439
    %2124 = vmatpush2.msra.mxu0 %v1438
    %2125 = vmatprep.subr.mxu0 %v1435
    %2126 = vmatpush2.msra.mxu0 %v1434
    %2127 = vmatprep.subr.mxu0 %v1431
    %2128 = vmatpush2.msra.mxu0 %v1430
    %2129 = vmatprep.subr.mxu0 %v1427
    %2130 = vmatpush2.msra.mxu0 %v1426
    %2131 = vmatprep.subr.mxu0 %v1423
    %2132 = vmatpush2.msra.mxu0 %v1422
    %2133 = vmatprep.subr.mxu0 %v1419
    %2134 = vmatpush2.msra.mxu0 %v1418
    %2135 = vmatprep.subr.mxu0 %v1415
    %2136 = vmatpush2.msra.mxu0 %v1414
    %2137 = vmatprep.subr.mxu0 %v1411
    %2138 = vmatpush2.msra.mxu0 %v1410
    %2139 = vmatprep.subr.mxu0 %v1407
    %2140 = vmatpush2.msra.mxu0 %v1406
    %2141 = vmatprep.subr.mxu0 %v1403
    %2142 = vmatpush2.msra.mxu0 %v1402
    %2143 = vmatprep.subr.mxu0 %v1399
    %2144 = vmatpush2.msra.mxu0 %v1398
    %2145 = vmatprep.subr.mxu0 %v1395
    %2146 = vmatpush2.msra.mxu0 %v1394
    %2147 = vmatprep.subr.mxu0 %v1391
    %2148 = vmatpush2.msra.mxu0 %v1390
    %2149 = vmatprep.subr.mxu0 %v1387
    %2150 = vmatpush2.msra.mxu0 %v1386
    %2151 = vmatprep.subr.mxu0 %v1383
    %2152 = vmatpush2.msra.mxu0 %v1382
    %2153 = vmatprep.mubr.f32.mxu0 %v1717
    %2154 = vmatmul.mubr.f32.gmra.mxu0 %v163
    %v2155 = vpop.f32.mrf.mxu0
    %v2156 = vadd.f32 %v2085, %v2155
    %v2157 = vpop.f32.mrf.mxu0
    %v2158 = vadd.f32 %v2087, %v2157
    %2159 = vdwg.mxu0
    %2160 = vmatprep.subr.mxu0 %v1507
    %2161 = vmatpush1.msra.mxu0 %v1506
    %2162 = vmatprep.subr.mxu0 %v1503
    %2163 = vmatpush1.msra.mxu0 %v1502
    %2164 = vmatprep.subr.mxu0 %v1499
    %2165 = vmatpush1.msra.mxu0 %v1498
    %2166 = vmatprep.subr.mxu0 %v1495
    %2167 = vmatpush1.msra.mxu0 %v1494
    %2168 = vmatprep.subr.mxu0 %v1491
    %2169 = vmatpush1.msra.mxu0 %v1490
    %2170 = vmatprep.subr.mxu0 %v1487
    %2171 = vmatpush1.msra.mxu0 %v1486
    %2172 = vmatprep.subr.mxu0 %v1483
    %2173 = vmatpush1.msra.mxu0 %v1482
    %2174 = vmatprep.subr.mxu0 %v1479
    %2175 = vmatpush1.msra.mxu0 %v1478
    %2176 = vmatprep.subr.mxu0 %v1475
    %2177 = vmatpush1.msra.mxu0 %v1474
    %2178 = vmatprep.subr.mxu0 %v1471
    %2179 = vmatpush1.msra.mxu0 %v1470
    %2180 = vmatprep.subr.mxu0 %v1467
    %2181 = vmatpush1.msra.mxu0 %v1466
    %2182 = vmatprep.subr.mxu0 %v1463
    %2183 = vmatpush1.msra.mxu0 %v1462
    %2184 = vmatprep.subr.mxu0 %v1459
    %2185 = vmatpush1.msra.mxu0 %v1458
    %2186 = vmatprep.subr.mxu0 %v1455
    %2187 = vmatpush1.msra.mxu0 %v1454
    %2188 = vmatprep.subr.mxu0 %v1451
    %2189 = vmatpush1.msra.mxu0 %v1450
    %2190 = vmatprep.subr.mxu0 %v1447
    %2191 = vmatpush1.msra.mxu0 %v1446
    %2192 = vmatprep.subr.mxu0 %v1571
    %2193 = vmatpush2.msra.mxu0 %v1570
    %2194 = vmatprep.subr.mxu0 %v1567
    %2195 = vmatpush2.msra.mxu0 %v1566
    %2196 = vmatprep.subr.mxu0 %v1563
    %2197 = vmatpush2.msra.mxu0 %v1562
    %2198 = vmatprep.subr.mxu0 %v1559
    %2199 = vmatpush2.msra.mxu0 %v1558
    %2200 = vmatprep.subr.mxu0 %v1555
    %2201 = vmatpush2.msra.mxu0 %v1554
    %2202 = vmatprep.subr.mxu0 %v1551
    %2203 = vmatpush2.msra.mxu0 %v1550
    %2204 = vmatprep.subr.mxu0 %v1547
    %2205 = vmatpush2.msra.mxu0 %v1546
    %2206 = vmatprep.subr.mxu0 %v1543
    %2207 = vmatpush2.msra.mxu0 %v1542
    %2208 = vmatprep.subr.mxu0 %v1539
    %2209 = vmatpush2.msra.mxu0 %v1538
    %2210 = vmatprep.subr.mxu0 %v1535
    %2211 = vmatpush2.msra.mxu0 %v1534
    %2212 = vmatprep.subr.mxu0 %v1531
    %2213 = vmatpush2.msra.mxu0 %v1530
    %2214 = vmatprep.subr.mxu0 %v1527
    %2215 = vmatpush2.msra.mxu0 %v1526
    %2216 = vmatprep.subr.mxu0 %v1523
    %2217 = vmatpush2.msra.mxu0 %v1522
    %2218 = vmatprep.subr.mxu0 %v1519
    %2219 = vmatpush2.msra.mxu0 %v1518
    %2220 = vmatprep.subr.mxu0 %v1515
    %2221 = vmatpush2.msra.mxu0 %v1514
    %2222 = vmatprep.subr.mxu0 %v1511
    %2223 = vmatpush2.msra.mxu0 %v1510
    %2224 = vmatprep.mubr.f32.mxu0 %v1718
    %2225 = vmatmul.mubr.f32.gmra.mxu0 %v164
    %v2226 = vpop.f32.mrf.mxu0
    %v2227 = vadd.f32 %v2156, %v2226
    %v2228 = vpop.f32.mrf.mxu0
    %v2229 = vadd.f32 %v2158, %v2228
    %2230 = vdwg.mxu0
    %2231 = vmatprep.subr.mxu0 %v1635
    %2232 = vmatpush1.msra.mxu0 %v1634
    %2233 = vmatprep.subr.mxu0 %v1631
    %2234 = vmatpush1.msra.mxu0 %v1630
    %2235 = vmatprep.subr.mxu0 %v1627
    %2236 = vmatpush1.msra.mxu0 %v1626
    %2237 = vmatprep.subr.mxu0 %v1623
    %2238 = vmatpush1.msra.mxu0 %v1622
    %2239 = vmatprep.subr.mxu0 %v1619
    %2240 = vmatpush1.msra.mxu0 %v1618
    %2241 = vmatprep.subr.mxu0 %v1615
    %2242 = vmatpush1.msra.mxu0 %v1614
    %2243 = vmatprep.subr.mxu0 %v1611
    %2244 = vmatpush1.msra.mxu0 %v1610
    %2245 = vmatprep.subr.mxu0 %v1607
    %2246 = vmatpush1.msra.mxu0 %v1606
    %2247 = vmatprep.subr.mxu0 %v1603
    %2248 = vmatpush1.msra.mxu0 %v1602
    %2249 = vmatprep.subr.mxu0 %v1599
    %2250 = vmatpush1.msra.mxu0 %v1598
    %2251 = vmatprep.subr.mxu0 %v1595
    %2252 = vmatpush1.msra.mxu0 %v1594
    %2253 = vmatprep.subr.mxu0 %v1591
    %2254 = vmatpush1.msra.mxu0 %v1590
    %2255 = vmatprep.subr.mxu0 %v1587
    %2256 = vmatpush1.msra.mxu0 %v1586
    %2257 = vmatprep.subr.mxu0 %v1583
    %2258 = vmatpush1.msra.mxu0 %v1582
    %2259 = vmatprep.subr.mxu0 %v1579
    %2260 = vmatpush1.msra.mxu0 %v1578
    %2261 = vmatprep.subr.mxu0 %v1575
    %2262 = vmatpush1.msra.mxu0 %v1574
    %2263 = vmatprep.subr.mxu0 %v1699
    %2264 = vmatpush2.msra.mxu0 %v1698
    %2265 = vmatprep.subr.mxu0 %v1695
    %2266 = vmatpush2.msra.mxu0 %v1694
    %2267 = vmatprep.subr.mxu0 %v1691
    %2268 = vmatpush2.msra.mxu0 %v1690
    %2269 = vmatprep.subr.mxu0 %v1687
    %2270 = vmatpush2.msra.mxu0 %v1686
    %2271 = vmatprep.subr.mxu0 %v1683
    %2272 = vmatpush2.msra.mxu0 %v1682
    %2273 = vmatprep.subr.mxu0 %v1679
    %2274 = vmatpush2.msra.mxu0 %v1678
    %2275 = vmatprep.subr.mxu0 %v1675
    %2276 = vmatpush2.msra.mxu0 %v1674
    %2277 = vmatprep.subr.mxu0 %v1671
    %2278 = vmatpush2.msra.mxu0 %v1670
    %2279 = vmatprep.subr.mxu0 %v1667
    %2280 = vmatpush2.msra.mxu0 %v1666
    %2281 = vmatprep.subr.mxu0 %v1663
    %2282 = vmatpush2.msra.mxu0 %v1662
    %2283 = vmatprep.subr.mxu0 %v1659
    %2284 = vmatpush2.msra.mxu0 %v1658
    %2285 = vmatprep.subr.mxu0 %v1655
    %2286 = vmatpush2.msra.mxu0 %v1654
    %2287 = vmatprep.subr.mxu0 %v1651
    %2288 = vmatpush2.msra.mxu0 %v1650
    %2289 = vmatprep.subr.mxu0 %v1647
    %2290 = vmatpush2.msra.mxu0 %v1646
    %2291 = vmatprep.subr.mxu0 %v1643
    %2292 = vmatpush2.msra.mxu0 %v1642
    %2293 = vmatprep.subr.mxu0 %v1639
    %2294 = vmatpush2.msra.mxu0 %v1638
    %2295 = vmatprep.mubr.f32.mxu0 %v1719
    %2296 = vmatmul.mubr.f32.gmra.mxu0 %v165
    %v2297 = vpop.f32.mrf.mxu0
    %v2298 = vadd.f32 %v2227, %v2297
    %v2299 = vpop.f32.mrf.mxu0
    %v2300 = vadd.f32 %v2229, %v2299
    %2301 = vdwg.mxu0
    %2302 = vmatprep.subr.mxu0 %v741
    %2303 = vmatpush1.msra.mxu0 %v740
    %2304 = vmatprep.subr.mxu0 %v737
    %2305 = vmatpush1.msra.mxu0 %v736
    %2306 = vmatprep.subr.mxu0 %v733
    %2307 = vmatpush1.msra.mxu0 %v732
    %2308 = vmatprep.subr.mxu0 %v729
    %2309 = vmatpush1.msra.mxu0 %v728
    %2310 = vmatprep.subr.mxu0 %v725
    %2311 = vmatpush1.msra.mxu0 %v724
    %2312 = vmatprep.subr.mxu0 %v721
    %2313 = vmatpush1.msra.mxu0 %v720
    %2314 = vmatprep.subr.mxu0 %v717
    %2315 = vmatpush1.msra.mxu0 %v716
    %2316 = vmatprep.subr.mxu0 %v713
    %2317 = vmatpush1.msra.mxu0 %v712
    %2318 = vmatprep.subr.mxu0 %v709
    %2319 = vmatpush1.msra.mxu0 %v708
    %2320 = vmatprep.subr.mxu0 %v705
    %2321 = vmatpush1.msra.mxu0 %v704
    %2322 = vmatprep.subr.mxu0 %v701
    %2323 = vmatpush1.msra.mxu0 %v700
    %2324 = vmatprep.subr.mxu0 %v697
    %2325 = vmatpush1.msra.mxu0 %v696
    %2326 = vmatprep.subr.mxu0 %v693
    %2327 = vmatpush1.msra.mxu0 %v692
    %2328 = vmatprep.subr.mxu0 %v689
    %2329 = vmatpush1.msra.mxu0 %v688
    %2330 = vmatprep.subr.mxu0 %v685
    %2331 = vmatpush1.msra.mxu0 %v684
    %2332 = vmatprep.subr.mxu0 %v681
    %2333 = vmatpush1.msra.mxu0 %v680
    %2334 = vmatprep.subr.mxu0 %v805
    %2335 = vmatpush2.msra.mxu0 %v804
    %2336 = vmatprep.subr.mxu0 %v801
    %2337 = vmatpush2.msra.mxu0 %v800
    %2338 = vmatprep.subr.mxu0 %v797
    %2339 = vmatpush2.msra.mxu0 %v796
    %2340 = vmatprep.subr.mxu0 %v793
    %2341 = vmatpush2.msra.mxu0 %v792
    %2342 = vmatprep.subr.mxu0 %v789
    %2343 = vmatpush2.msra.mxu0 %v788
    %2344 = vmatprep.subr.mxu0 %v785
    %2345 = vmatpush2.msra.mxu0 %v784
    %2346 = vmatprep.subr.mxu0 %v781
    %2347 = vmatpush2.msra.mxu0 %v780
    %2348 = vmatprep.subr.mxu0 %v777
    %2349 = vmatpush2.msra.mxu0 %v776
    %2350 = vmatprep.subr.mxu0 %v773
    %2351 = vmatpush2.msra.mxu0 %v772
    %2352 = vmatprep.subr.mxu0 %v769
    %2353 = vmatpush2.msra.mxu0 %v768
    %2354 = vmatprep.subr.mxu0 %v765
    %2355 = vmatpush2.msra.mxu0 %v764
    %2356 = vmatprep.subr.mxu0 %v761
    %2357 = vmatpush2.msra.mxu0 %v760
    %2358 = vmatprep.subr.mxu0 %v757
    %2359 = vmatpush2.msra.mxu0 %v756
    %2360 = vmatprep.subr.mxu0 %v753
    %2361 = vmatpush2.msra.mxu0 %v752
    %2362 = vmatprep.subr.mxu0 %v749
    %2363 = vmatpush2.msra.mxu0 %v748
    %2364 = vmatprep.subr.mxu0 %v745
    %2365 = vmatpush2.msra.mxu0 %v744
    %2366 = vmatprep.mubr.f32.mxu0 %v1712
    %2367 = vmatmul.mubr.f32.gmra.mxu0 %v158
    %v2368 = vpop.f32.mrf.mxu0
    %v2369 = vadd.f32 %v1703, %v2368
    %v2370 = vpop.f32.mrf.mxu0
    %v2371 = vadd.f32 %v1731, %v2370
    %2372 = vdwg.mxu0
    %2373 = vmatprep.subr.mxu0 %v869
    %2374 = vmatpush1.msra.mxu0 %v868
    %2375 = vmatprep.subr.mxu0 %v865
    %2376 = vmatpush1.msra.mxu0 %v864
    %2377 = vmatprep.subr.mxu0 %v861
    %2378 = vmatpush1.msra.mxu0 %v860
    %2379 = vmatprep.subr.mxu0 %v857
    %2380 = vmatpush1.msra.mxu0 %v856
    %2381 = vmatprep.subr.mxu0 %v853
    %2382 = vmatpush1.msra.mxu0 %v852
    %2383 = vmatprep.subr.mxu0 %v849
    %2384 = vmatpush1.msra.mxu0 %v848
    %2385 = vmatprep.subr.mxu0 %v845
    %2386 = vmatpush1.msra.mxu0 %v844
    %2387 = vmatprep.subr.mxu0 %v841
    %2388 = vmatpush1.msra.mxu0 %v840
    %2389 = vmatprep.subr.mxu0 %v837
    %2390 = vmatpush1.msra.mxu0 %v836
    %2391 = vmatprep.subr.mxu0 %v833
    %2392 = vmatpush1.msra.mxu0 %v832
    %2393 = vmatprep.subr.mxu0 %v829
    %2394 = vmatpush1.msra.mxu0 %v828
    %2395 = vmatprep.subr.mxu0 %v825
    %2396 = vmatpush1.msra.mxu0 %v824
    %2397 = vmatprep.subr.mxu0 %v821
    %2398 = vmatpush1.msra.mxu0 %v820
    %2399 = vmatprep.subr.mxu0 %v817
    %2400 = vmatpush1.msra.mxu0 %v816
    %2401 = vmatprep.subr.mxu0 %v813
    %2402 = vmatpush1.msra.mxu0 %v812
    %2403 = vmatprep.subr.mxu0 %v809
    %2404 = vmatpush1.msra.mxu0 %v808
    %2405 = vmatprep.subr.mxu0 %v933
    %2406 = vmatpush2.msra.mxu0 %v932
    %2407 = vmatprep.subr.mxu0 %v929
    %2408 = vmatpush2.msra.mxu0 %v928
    %2409 = vmatprep.subr.mxu0 %v925
    %2410 = vmatpush2.msra.mxu0 %v924
    %2411 = vmatprep.subr.mxu0 %v921
    %2412 = vmatpush2.msra.mxu0 %v920
    %2413 = vmatprep.subr.mxu0 %v917
    %2414 = vmatpush2.msra.mxu0 %v916
    %2415 = vmatprep.subr.mxu0 %v913
    %2416 = vmatpush2.msra.mxu0 %v912
    %2417 = vmatprep.subr.mxu0 %v909
    %2418 = vmatpush2.msra.mxu0 %v908
    %2419 = vmatprep.subr.mxu0 %v905
    %2420 = vmatpush2.msra.mxu0 %v904
    %2421 = vmatprep.subr.mxu0 %v901
    %2422 = vmatpush2.msra.mxu0 %v900
    %2423 = vmatprep.subr.mxu0 %v897
    %2424 = vmatpush2.msra.mxu0 %v896
    %2425 = vmatprep.subr.mxu0 %v893
    %2426 = vmatpush2.msra.mxu0 %v892
    %2427 = vmatprep.subr.mxu0 %v889
    %2428 = vmatpush2.msra.mxu0 %v888
    %2429 = vmatprep.subr.mxu0 %v885
    %2430 = vmatpush2.msra.mxu0 %v884
    %2431 = vmatprep.subr.mxu0 %v881
    %2432 = vmatpush2.msra.mxu0 %v880
    %2433 = vmatprep.subr.mxu0 %v877
    %2434 = vmatpush2.msra.mxu0 %v876
    %2435 = vmatprep.subr.mxu0 %v873
    %2436 = vmatpush2.msra.mxu0 %v872
    %2437 = vmatprep.mubr.f32.mxu0 %v1713
    %2438 = vmatmul.mubr.f32.gmra.mxu0 %v159
    %v2439 = vpop.f32.mrf.mxu0
    %v2440 = vadd.f32 %v2369, %v2439
    %v2441 = vpop.f32.mrf.mxu0
    %v2442 = vadd.f32 %v2371, %v2441
    %2443 = vdwg.mxu0
    %2444 = vmatprep.subr.mxu0 %v997
    %2445 = vmatpush1.msra.mxu0 %v996
    %2446 = vmatprep.subr.mxu0 %v993
    %2447 = vmatpush1.msra.mxu0 %v992
    %2448 = vmatprep.subr.mxu0 %v989
    %2449 = vmatpush1.msra.mxu0 %v988
    %2450 = vmatprep.subr.mxu0 %v985
    %2451 = vmatpush1.msra.mxu0 %v984
    %2452 = vmatprep.subr.mxu0 %v981
    %2453 = vmatpush1.msra.mxu0 %v980
    %2454 = vmatprep.subr.mxu0 %v977
    %2455 = vmatpush1.msra.mxu0 %v976
    %2456 = vmatprep.subr.mxu0 %v973
    %2457 = vmatpush1.msra.mxu0 %v972
    %2458 = vmatprep.subr.mxu0 %v969
    %2459 = vmatpush1.msra.mxu0 %v968
    %2460 = vmatprep.subr.mxu0 %v965
    %2461 = vmatpush1.msra.mxu0 %v964
    %2462 = vmatprep.subr.mxu0 %v961
    %2463 = vmatpush1.msra.mxu0 %v960
    %2464 = vmatprep.subr.mxu0 %v957
    %2465 = vmatpush1.msra.mxu0 %v956
    %2466 = vmatprep.subr.mxu0 %v953
    %2467 = vmatpush1.msra.mxu0 %v952
    %2468 = vmatprep.subr.mxu0 %v949
    %2469 = vmatpush1.msra.mxu0 %v948
    %2470 = vmatprep.subr.mxu0 %v945
    %2471 = vmatpush1.msra.mxu0 %v944
    %2472 = vmatprep.subr.mxu0 %v941
    %2473 = vmatpush1.msra.mxu0 %v940
    %2474 = vmatprep.subr.mxu0 %v937
    %2475 = vmatpush1.msra.mxu0 %v936
    %2476 = vmatprep.subr.mxu0 %v1061
    %2477 = vmatpush2.msra.mxu0 %v1060
    %2478 = vmatprep.subr.mxu0 %v1057
    %2479 = vmatpush2.msra.mxu0 %v1056
    %2480 = vmatprep.subr.mxu0 %v1053
    %2481 = vmatpush2.msra.mxu0 %v1052
    %2482 = vmatprep.subr.mxu0 %v1049
    %2483 = vmatpush2.msra.mxu0 %v1048
    %2484 = vmatprep.subr.mxu0 %v1045
    %2485 = vmatpush2.msra.mxu0 %v1044
    %2486 = vmatprep.subr.mxu0 %v1041
    %2487 = vmatpush2.msra.mxu0 %v1040
    %2488 = vmatprep.subr.mxu0 %v1037
    %2489 = vmatpush2.msra.mxu0 %v1036
    %2490 = vmatprep.subr.mxu0 %v1033
    %2491 = vmatpush2.msra.mxu0 %v1032
    %2492 = vmatprep.subr.mxu0 %v1029
    %2493 = vmatpush2.msra.mxu0 %v1028
    %2494 = vmatprep.subr.mxu0 %v1025
    %2495 = vmatpush2.msra.mxu0 %v1024
    %2496 = vmatprep.subr.mxu0 %v1021
    %2497 = vmatpush2.msra.mxu0 %v1020
    %2498 = vmatprep.subr.mxu0 %v1017
    %2499 = vmatpush2.msra.mxu0 %v1016
    %2500 = vmatprep.subr.mxu0 %v1013
    %2501 = vmatpush2.msra.mxu0 %v1012
    %2502 = vmatprep.subr.mxu0 %v1009
    %2503 = vmatpush2.msra.mxu0 %v1008
    %2504 = vmatprep.subr.mxu0 %v1005
    %2505 = vmatpush2.msra.mxu0 %v1004
    %2506 = vmatprep.subr.mxu0 %v1001
    %2507 = vmatpush2.msra.mxu0 %v1000
    %2508 = vmatprep.mubr.f32.mxu0 %v1714
    %2509 = vmatmul.mubr.f32.gmra.mxu0 %v160
    %v2510 = vpop.f32.mrf.mxu0
    %v2511 = vadd.f32 %v2440, %v2510
    %v2512 = vpop.f32.mrf.mxu0
    %v2513 = vadd.f32 %v2442, %v2512
    %2514 = vdwg.mxu0
    %2515 = vmatprep.subr.mxu0 %v1125
    %2516 = vmatpush1.msra.mxu0 %v1124
    %2517 = vmatprep.subr.mxu0 %v1121
    %2518 = vmatpush1.msra.mxu0 %v1120
    %2519 = vmatprep.subr.mxu0 %v1117
    %2520 = vmatpush1.msra.mxu0 %v1116
    %2521 = vmatprep.subr.mxu0 %v1113
    %2522 = vmatpush1.msra.mxu0 %v1112
    %2523 = vmatprep.subr.mxu0 %v1109
    %2524 = vmatpush1.msra.mxu0 %v1108
    %2525 = vmatprep.subr.mxu0 %v1105
    %2526 = vmatpush1.msra.mxu0 %v1104
    %2527 = vmatprep.subr.mxu0 %v1101
    %2528 = vmatpush1.msra.mxu0 %v1100
    %2529 = vmatprep.subr.mxu0 %v1097
    %2530 = vmatpush1.msra.mxu0 %v1096
    %2531 = vmatprep.subr.mxu0 %v1093
    %2532 = vmatpush1.msra.mxu0 %v1092
    %2533 = vmatprep.subr.mxu0 %v1089
    %2534 = vmatpush1.msra.mxu0 %v1088
    %2535 = vmatprep.subr.mxu0 %v1085
    %2536 = vmatpush1.msra.mxu0 %v1084
    %2537 = vmatprep.subr.mxu0 %v1081
    %2538 = vmatpush1.msra.mxu0 %v1080
    %2539 = vmatprep.subr.mxu0 %v1077
    %2540 = vmatpush1.msra.mxu0 %v1076
    %2541 = vmatprep.subr.mxu0 %v1073
    %2542 = vmatpush1.msra.mxu0 %v1072
    %2543 = vmatprep.subr.mxu0 %v1069
    %2544 = vmatpush1.msra.mxu0 %v1068
    %2545 = vmatprep.subr.mxu0 %v1065
    %2546 = vmatpush1.msra.mxu0 %v1064
    %2547 = vmatprep.subr.mxu0 %v1189
    %2548 = vmatpush2.msra.mxu0 %v1188
    %2549 = vmatprep.subr.mxu0 %v1185
    %2550 = vmatpush2.msra.mxu0 %v1184
    %2551 = vmatprep.subr.mxu0 %v1181
    %2552 = vmatpush2.msra.mxu0 %v1180
    %2553 = vmatprep.subr.mxu0 %v1177
    %2554 = vmatpush2.msra.mxu0 %v1176
    %2555 = vmatprep.subr.mxu0 %v1173
    %2556 = vmatpush2.msra.mxu0 %v1172
    %2557 = vmatprep.subr.mxu0 %v1169
    %2558 = vmatpush2.msra.mxu0 %v1168
    %2559 = vmatprep.subr.mxu0 %v1165
    %2560 = vmatpush2.msra.mxu0 %v1164
    %2561 = vmatprep.subr.mxu0 %v1161
    %2562 = vmatpush2.msra.mxu0 %v1160
    %2563 = vmatprep.subr.mxu0 %v1157
    %2564 = vmatpush2.msra.mxu0 %v1156
    %2565 = vmatprep.subr.mxu0 %v1153
    %2566 = vmatpush2.msra.mxu0 %v1152
    %2567 = vmatprep.subr.mxu0 %v1149
    %2568 = vmatpush2.msra.mxu0 %v1148
    %2569 = vmatprep.subr.mxu0 %v1145
    %2570 = vmatpush2.msra.mxu0 %v1144
    %2571 = vmatprep.subr.mxu0 %v1141
    %2572 = vmatpush2.msra.mxu0 %v1140
    %2573 = vmatprep.subr.mxu0 %v1137
    %2574 = vmatpush2.msra.mxu0 %v1136
    %2575 = vmatprep.subr.mxu0 %v1133
    %2576 = vmatpush2.msra.mxu0 %v1132
    %2577 = vmatprep.subr.mxu0 %v1129
    %2578 = vmatpush2.msra.mxu0 %v1128
    %2579 = vmatprep.mubr.f32.mxu0 %v1715
    %2580 = vmatmul.mubr.f32.gmra.mxu0 %v161
    %v2581 = vpop.f32.mrf.mxu0
    %v2582 = vadd.f32 %v2511, %v2581
    %v2583 = vpop.f32.mrf.mxu0
    %v2584 = vadd.f32 %v2513, %v2583
    %2585 = vdwg.mxu0
    %2586 = vmatprep.subr.mxu0 %v1253
    %2587 = vmatpush1.msra.mxu0 %v1252
    %2588 = vmatprep.subr.mxu0 %v1249
    %2589 = vmatpush1.msra.mxu0 %v1248
    %2590 = vmatprep.subr.mxu0 %v1245
    %2591 = vmatpush1.msra.mxu0 %v1244
    %2592 = vmatprep.subr.mxu0 %v1241
    %2593 = vmatpush1.msra.mxu0 %v1240
    %2594 = vmatprep.subr.mxu0 %v1237
    %2595 = vmatpush1.msra.mxu0 %v1236
    %2596 = vmatprep.subr.mxu0 %v1233
    %2597 = vmatpush1.msra.mxu0 %v1232
    %2598 = vmatprep.subr.mxu0 %v1229
    %2599 = vmatpush1.msra.mxu0 %v1228
    %2600 = vmatprep.subr.mxu0 %v1225
    %2601 = vmatpush1.msra.mxu0 %v1224
    %2602 = vmatprep.subr.mxu0 %v1221
    %2603 = vmatpush1.msra.mxu0 %v1220
    %2604 = vmatprep.subr.mxu0 %v1217
    %2605 = vmatpush1.msra.mxu0 %v1216
    %2606 = vmatprep.subr.mxu0 %v1213
    %2607 = vmatpush1.msra.mxu0 %v1212
    %2608 = vmatprep.subr.mxu0 %v1209
    %2609 = vmatpush1.msra.mxu0 %v1208
    %2610 = vmatprep.subr.mxu0 %v1205
    %2611 = vmatpush1.msra.mxu0 %v1204
    %2612 = vmatprep.subr.mxu0 %v1201
    %2613 = vmatpush1.msra.mxu0 %v1200
    %2614 = vmatprep.subr.mxu0 %v1197
    %2615 = vmatpush1.msra.mxu0 %v1196
    %2616 = vmatprep.subr.mxu0 %v1193
    %2617 = vmatpush1.msra.mxu0 %v1192
    %2618 = vmatprep.subr.mxu0 %v1317
    %2619 = vmatpush2.msra.mxu0 %v1316
    %2620 = vmatprep.subr.mxu0 %v1313
    %2621 = vmatpush2.msra.mxu0 %v1312
    %2622 = vmatprep.subr.mxu0 %v1309
    %2623 = vmatpush2.msra.mxu0 %v1308
    %2624 = vmatprep.subr.mxu0 %v1305
    %2625 = vmatpush2.msra.mxu0 %v1304
    %2626 = vmatprep.subr.mxu0 %v1301
    %2627 = vmatpush2.msra.mxu0 %v1300
    %2628 = vmatprep.subr.mxu0 %v1297
    %2629 = vmatpush2.msra.mxu0 %v1296
    %2630 = vmatprep.subr.mxu0 %v1293
    %2631 = vmatpush2.msra.mxu0 %v1292
    %2632 = vmatprep.subr.mxu0 %v1289
    %2633 = vmatpush2.msra.mxu0 %v1288
    %2634 = vmatprep.subr.mxu0 %v1285
    %2635 = vmatpush2.msra.mxu0 %v1284
    %2636 = vmatprep.subr.mxu0 %v1281
    %2637 = vmatpush2.msra.mxu0 %v1280
    %2638 = vmatprep.subr.mxu0 %v1277
    %2639 = vmatpush2.msra.mxu0 %v1276
    %2640 = vmatprep.subr.mxu0 %v1273
    %2641 = vmatpush2.msra.mxu0 %v1272
    %2642 = vmatprep.subr.mxu0 %v1269
    %2643 = vmatpush2.msra.mxu0 %v1268
    %2644 = vmatprep.subr.mxu0 %v1265
    %2645 = vmatpush2.msra.mxu0 %v1264
    %2646 = vmatprep.subr.mxu0 %v1261
    %2647 = vmatpush2.msra.mxu0 %v1260
    %2648 = vmatprep.subr.mxu0 %v1257
    %2649 = vmatpush2.msra.mxu0 %v1256
    %2650 = vmatprep.mubr.f32.mxu0 %v1716
    %2651 = vmatmul.mubr.f32.gmra.mxu0 %v162
    %v2652 = vpop.f32.mrf.mxu0
    %v2653 = vadd.f32 %v2582, %v2652
    %v2654 = vpop.f32.mrf.mxu0
    %v2655 = vadd.f32 %v2584, %v2654
    %2656 = vdwg.mxu0
    %2657 = vmatprep.subr.mxu0 %v1381
    %2658 = vmatpush1.msra.mxu0 %v1380
    %2659 = vmatprep.subr.mxu0 %v1377
    %2660 = vmatpush1.msra.mxu0 %v1376
    %2661 = vmatprep.subr.mxu0 %v1373
    %2662 = vmatpush1.msra.mxu0 %v1372
    %2663 = vmatprep.subr.mxu0 %v1369
    %2664 = vmatpush1.msra.mxu0 %v1368
    %2665 = vmatprep.subr.mxu0 %v1365
    %2666 = vmatpush1.msra.mxu0 %v1364
    %2667 = vmatprep.subr.mxu0 %v1361
    %2668 = vmatpush1.msra.mxu0 %v1360
    %2669 = vmatprep.subr.mxu0 %v1357
    %2670 = vmatpush1.msra.mxu0 %v1356
    %2671 = vmatprep.subr.mxu0 %v1353
    %2672 = vmatpush1.msra.mxu0 %v1352
    %2673 = vmatprep.subr.mxu0 %v1349
    %2674 = vmatpush1.msra.mxu0 %v1348
    %2675 = vmatprep.subr.mxu0 %v1345
    %2676 = vmatpush1.msra.mxu0 %v1344
    %2677 = vmatprep.subr.mxu0 %v1341
    %2678 = vmatpush1.msra.mxu0 %v1340
    %2679 = vmatprep.subr.mxu0 %v1337
    %2680 = vmatpush1.msra.mxu0 %v1336
    %2681 = vmatprep.subr.mxu0 %v1333
    %2682 = vmatpush1.msra.mxu0 %v1332
    %2683 = vmatprep.subr.mxu0 %v1329
    %2684 = vmatpush1.msra.mxu0 %v1328
    %2685 = vmatprep.subr.mxu0 %v1325
    %2686 = vmatpush1.msra.mxu0 %v1324
    %2687 = vmatprep.subr.mxu0 %v1321
    %2688 = vmatpush1.msra.mxu0 %v1320
    %2689 = vmatprep.subr.mxu0 %v1445
    %2690 = vmatpush2.msra.mxu0 %v1444
    %2691 = vmatprep.subr.mxu0 %v1441
    %2692 = vmatpush2.msra.mxu0 %v1440
    %2693 = vmatprep.subr.mxu0 %v1437
    %2694 = vmatpush2.msra.mxu0 %v1436
    %2695 = vmatprep.subr.mxu0 %v1433
    %2696 = vmatpush2.msra.mxu0 %v1432
    %2697 = vmatprep.subr.mxu0 %v1429
    %2698 = vmatpush2.msra.mxu0 %v1428
    %2699 = vmatprep.subr.mxu0 %v1425
    %2700 = vmatpush2.msra.mxu0 %v1424
    %2701 = vmatprep.subr.mxu0 %v1421
    %2702 = vmatpush2.msra.mxu0 %v1420
    %2703 = vmatprep.subr.mxu0 %v1417
    %2704 = vmatpush2.msra.mxu0 %v1416
    %2705 = vmatprep.subr.mxu0 %v1413
    %2706 = vmatpush2.msra.mxu0 %v1412
    %2707 = vmatprep.subr.mxu0 %v1409
    %2708 = vmatpush2.msra.mxu0 %v1408
    %2709 = vmatprep.subr.mxu0 %v1405
    %2710 = vmatpush2.msra.mxu0 %v1404
    %2711 = vmatprep.subr.mxu0 %v1401
    %2712 = vmatpush2.msra.mxu0 %v1400
    %2713 = vmatprep.subr.mxu0 %v1397
    %2714 = vmatpush2.msra.mxu0 %v1396
    %2715 = vmatprep.subr.mxu0 %v1393
    %2716 = vmatpush2.msra.mxu0 %v1392
    %2717 = vmatprep.subr.mxu0 %v1389
    %2718 = vmatpush2.msra.mxu0 %v1388
    %2719 = vmatprep.subr.mxu0 %v1385
    %2720 = vmatpush2.msra.mxu0 %v1384
    %2721 = vmatprep.mubr.f32.mxu0 %v1717
    %2722 = vmatmul.mubr.f32.gmra.mxu0 %v163
    %v2723 = vpop.f32.mrf.mxu0
    %v2724 = vadd.f32 %v2653, %v2723
    %v2725 = vpop.f32.mrf.mxu0
    %v2726 = vadd.f32 %v2655, %v2725
    %2727 = vdwg.mxu0
    %2728 = vmatprep.subr.mxu0 %v1509
    %2729 = vmatpush1.msra.mxu0 %v1508
    %2730 = vmatprep.subr.mxu0 %v1505
    %2731 = vmatpush1.msra.mxu0 %v1504
    %2732 = vmatprep.subr.mxu0 %v1501
    %2733 = vmatpush1.msra.mxu0 %v1500
    %2734 = vmatprep.subr.mxu0 %v1497
    %2735 = vmatpush1.msra.mxu0 %v1496
    %2736 = vmatprep.subr.mxu0 %v1493
    %2737 = vmatpush1.msra.mxu0 %v1492
    %2738 = vmatprep.subr.mxu0 %v1489
    %2739 = vmatpush1.msra.mxu0 %v1488
    %2740 = vmatprep.subr.mxu0 %v1485
    %2741 = vmatpush1.msra.mxu0 %v1484
    %2742 = vmatprep.subr.mxu0 %v1481
    %2743 = vmatpush1.msra.mxu0 %v1480
    %2744 = vmatprep.subr.mxu0 %v1477
    %2745 = vmatpush1.msra.mxu0 %v1476
    %2746 = vmatprep.subr.mxu0 %v1473
    %2747 = vmatpush1.msra.mxu0 %v1472
    %2748 = vmatprep.subr.mxu0 %v1469
    %2749 = vmatpush1.msra.mxu0 %v1468
    %2750 = vmatprep.subr.mxu0 %v1465
    %2751 = vmatpush1.msra.mxu0 %v1464
    %2752 = vmatprep.subr.mxu0 %v1461
    %2753 = vmatpush1.msra.mxu0 %v1460
    %2754 = vmatprep.subr.mxu0 %v1457
    %2755 = vmatpush1.msra.mxu0 %v1456
    %2756 = vmatprep.subr.mxu0 %v1453
    %2757 = vmatpush1.msra.mxu0 %v1452
    %2758 = vmatprep.subr.mxu0 %v1449
    %2759 = vmatpush1.msra.mxu0 %v1448
    %2760 = vmatprep.subr.mxu0 %v1573
    %2761 = vmatpush2.msra.mxu0 %v1572
    %2762 = vmatprep.subr.mxu0 %v1569
    %2763 = vmatpush2.msra.mxu0 %v1568
    %2764 = vmatprep.subr.mxu0 %v1565
    %2765 = vmatpush2.msra.mxu0 %v1564
    %2766 = vmatprep.subr.mxu0 %v1561
    %2767 = vmatpush2.msra.mxu0 %v1560
    %2768 = vmatprep.subr.mxu0 %v1557
    %2769 = vmatpush2.msra.mxu0 %v1556
    %2770 = vmatprep.subr.mxu0 %v1553
    %2771 = vmatpush2.msra.mxu0 %v1552
    %2772 = vmatprep.subr.mxu0 %v1549
    %2773 = vmatpush2.msra.mxu0 %v1548
    %2774 = vmatprep.subr.mxu0 %v1545
    %2775 = vmatpush2.msra.mxu0 %v1544
    %2776 = vmatprep.subr.mxu0 %v1541
    %2777 = vmatpush2.msra.mxu0 %v1540
    %2778 = vmatprep.subr.mxu0 %v1537
    %2779 = vmatpush2.msra.mxu0 %v1536
    %2780 = vmatprep.subr.mxu0 %v1533
    %2781 = vmatpush2.msra.mxu0 %v1532
    %2782 = vmatprep.subr.mxu0 %v1529
    %2783 = vmatpush2.msra.mxu0 %v1528
    %2784 = vmatprep.subr.mxu0 %v1525
    %2785 = vmatpush2.msra.mxu0 %v1524
    %2786 = vmatprep.subr.mxu0 %v1521
    %2787 = vmatpush2.msra.mxu0 %v1520
    %2788 = vmatprep.subr.mxu0 %v1517
    %2789 = vmatpush2.msra.mxu0 %v1516
    %2790 = vmatprep.subr.mxu0 %v1513
    %2791 = vmatpush2.msra.mxu0 %v1512
    %2792 = vmatprep.mubr.f32.mxu0 %v1718
    %2793 = vmatmul.mubr.f32.gmra.mxu0 %v164
    %v2794 = vpop.f32.mrf.mxu0
    %v2795 = vadd.f32 %v2724, %v2794
    %v2796 = vpop.f32.mrf.mxu0
    %v2797 = vadd.f32 %v2726, %v2796
    %2798 = vdwg.mxu0
    %2799 = vmatprep.subr.mxu0 %v1637
    %2800 = vmatpush1.msra.mxu0 %v1636
    %2801 = vmatprep.subr.mxu0 %v1633
    %2802 = vmatpush1.msra.mxu0 %v1632
    %2803 = vmatprep.subr.mxu0 %v1629
    %2804 = vmatpush1.msra.mxu0 %v1628
    %2805 = vmatprep.subr.mxu0 %v1625
    %2806 = vmatpush1.msra.mxu0 %v1624
    %2807 = vmatprep.subr.mxu0 %v1621
    %2808 = vmatpush1.msra.mxu0 %v1620
    %2809 = vmatprep.subr.mxu0 %v1617
    %2810 = vmatpush1.msra.mxu0 %v1616
    %2811 = vmatprep.subr.mxu0 %v1613
    %2812 = vmatpush1.msra.mxu0 %v1612
    %2813 = vmatprep.subr.mxu0 %v1609
    %2814 = vmatpush1.msra.mxu0 %v1608
    %2815 = vmatprep.subr.mxu0 %v1605
    %2816 = vmatpush1.msra.mxu0 %v1604
    %2817 = vmatprep.subr.mxu0 %v1601
    %2818 = vmatpush1.msra.mxu0 %v1600
    %2819 = vmatprep.subr.mxu0 %v1597
    %2820 = vmatpush1.msra.mxu0 %v1596
    %2821 = vmatprep.subr.mxu0 %v1593
    %2822 = vmatpush1.msra.mxu0 %v1592
    %2823 = vmatprep.subr.mxu0 %v1589
    %2824 = vmatpush1.msra.mxu0 %v1588
    %2825 = vmatprep.subr.mxu0 %v1585
    %2826 = vmatpush1.msra.mxu0 %v1584
    %2827 = vmatprep.subr.mxu0 %v1581
    %2828 = vmatpush1.msra.mxu0 %v1580
    %2829 = vmatprep.subr.mxu0 %v1577
    %2830 = vmatpush1.msra.mxu0 %v1576
    %2831 = vmatprep.subr.mxu0 %v1701
    %2832 = vmatpush2.msra.mxu0 %v1700
    %2833 = vmatprep.subr.mxu0 %v1697
    %2834 = vmatpush2.msra.mxu0 %v1696
    %2835 = vmatprep.subr.mxu0 %v1693
    %2836 = vmatpush2.msra.mxu0 %v1692
    %2837 = vmatprep.subr.mxu0 %v1689
    %2838 = vmatpush2.msra.mxu0 %v1688
    %2839 = vmatprep.subr.mxu0 %v1685
    %2840 = vmatpush2.msra.mxu0 %v1684
    %2841 = vmatprep.subr.mxu0 %v1681
    %2842 = vmatpush2.msra.mxu0 %v1680
    %2843 = vmatprep.subr.mxu0 %v1677
    %2844 = vmatpush2.msra.mxu0 %v1676
    %2845 = vmatprep.subr.mxu0 %v1673
    %2846 = vmatpush2.msra.mxu0 %v1672
    %2847 = vmatprep.subr.mxu0 %v1669
    %2848 = vmatpush2.msra.mxu0 %v1668
    %2849 = vmatprep.subr.mxu0 %v1665
    %2850 = vmatpush2.msra.mxu0 %v1664
    %2851 = vmatprep.subr.mxu0 %v1661
    %2852 = vmatpush2.msra.mxu0 %v1660
    %2853 = vmatprep.subr.mxu0 %v1657
    %2854 = vmatpush2.msra.mxu0 %v1656
    %2855 = vmatprep.subr.mxu0 %v1653
    %2856 = vmatpush2.msra.mxu0 %v1652
    %2857 = vmatprep.subr.mxu0 %v1649
    %2858 = vmatpush2.msra.mxu0 %v1648
    %2859 = vmatprep.subr.mxu0 %v1645
    %2860 = vmatpush2.msra.mxu0 %v1644
    %2861 = vmatprep.subr.mxu0 %v1641
    %2862 = vmatpush2.msra.mxu0 %v1640
    %2863 = vmatprep.mubr.f32.mxu0 %v1719
    %2864 = vmatmul.mubr.f32.gmra.mxu0 %v165
    %v2865 = vpop.f32.mrf.mxu0
    %v2866 = vadd.f32 %v2795, %v2865
    %v2867 = vpop.f32.mrf.mxu0
    %v2868 = vadd.f32 %v2797, %v2867
    %2869 = vdwg.mxu0
    %v2870 = vld [vmem:[#allocation8] sm:$0xf]
    %v2872 = vlaneseq
    %v2873 = vshrl.u32 %v2872, 7
    %v2874 = vsub.s32 0, %v2873
    %v2875 = vrot.slane %v2870, %v2874
    %v2876 = vlaneseq
    %v2877 = vshrl.u32 %v2876, 7
    %v2878 = vsub.s32 1, %v2877
    %v2879 = vrot.slane %v2870, %v2878
    %v2880 = vlaneseq
    %v2881 = vshrl.u32 %v2880, 7
    %v2882 = vsub.s32 2, %v2881
    %v2883 = vrot.slane %v2870, %v2882
    %v2884 = vlaneseq
    %v2885 = vshrl.u32 %v2884, 7
    %v2886 = vsub.s32 3, %v2885
    %v2887 = vrot.slane %v2870, %v2886
    %v2892 = vadd.f32 %v2298, %v2875
    %v2893 = vadd.f32 %v2300, %v2879
    %v2894 = vadd.f32 %v2866, %v2883
    %v2895 = vadd.f32 %v2868, %v2887
    %vm2896 = vcmp.gt.f32.partialorder %v2892, 0.0
    %vm2897 = vcmp.gt.f32.partialorder %v2893, 0.0
    %vm2898 = vcmp.gt.f32.partialorder %v2894, 0.0
    %vm2899 = vcmp.gt.f32.partialorder %v2895, 0.0
    %v2900 = vmul.f32 %v2892, 0.2
    %v2901 = vmul.f32 %v2893, 0.2
    %v2902 = vmul.f32 %v2894, 0.2
    %v2903 = vmul.f32 %v2895, 0.2
    %v2904 = vsel %vm2896, %v2892, %v2900
    %v2905 = vsel %vm2897, %v2893, %v2901
    %v2906 = vsel %vm2898, %v2894, %v2902
    %v2907 = vsel %vm2899, %v2895, %v2903
    %v2908 = vld [vmem:[#allocation10] sm:$0xff]
    %v2909 = vld [vmem:[#allocation10 + $0x8] sm:$0xff]
    %v2910 = vld [vmem:[#allocation10 + $0x10] sm:$0xff]
    %v2911 = vld [vmem:[#allocation10 + $0x18] sm:$0xff]
    %v2912 = vld [vmem:[#allocation10 + $0x20] sm:$0xff]
    %v2913 = vld [vmem:[#allocation10 + $0x28] sm:$0xff]
    %v2914 = vld [vmem:[#allocation10 + $0x30] sm:$0xff]
    %v2915 = vld [vmem:[#allocation10 + $0x38] sm:$0xff]
    %v2916 = vld [vmem:[#allocation10 + $0x40] sm:$0xff]
    %v2917 = vld [vmem:[#allocation10 + $0x48] sm:$0xff]
    %v2918 = vld [vmem:[#allocation10 + $0x50] sm:$0xff]
    %v2919 = vld [vmem:[#allocation10 + $0x58] sm:$0xff]
    %v2920 = vld [vmem:[#allocation10 + $0x60] sm:$0xff]
    %v2921 = vld [vmem:[#allocation10 + $0x68] sm:$0xff]
    %v2922 = vld [vmem:[#allocation10 + $0x70] sm:$0xff]
    %v2923 = vld [vmem:[#allocation10 + $0x78] sm:$0xff]
    %v2924 = vld [vmem:[#allocation10 + $0x80] sm:$0xff]
    %v2925 = vld [vmem:[#allocation10 + $0x88] sm:$0xff]
    %v2926 = vld [vmem:[#allocation10 + $0x90] sm:$0xff]
    %v2927 = vld [vmem:[#allocation10 + $0x98] sm:$0xff]
    %v2928 = vld [vmem:[#allocation10 + $0xa0] sm:$0xff]
    %v2929 = vld [vmem:[#allocation10 + $0xa8] sm:$0xff]
    %v2930 = vld [vmem:[#allocation10 + $0xb0] sm:$0xff]
    %v2931 = vld [vmem:[#allocation10 + $0xb8] sm:$0xff]
    %v2932 = vld [vmem:[#allocation10 + $0xc0] sm:$0xff]
    %v2933 = vld [vmem:[#allocation10 + $0xc8] sm:$0xff]
    %v2934 = vld [vmem:[#allocation10 + $0xd0] sm:$0xff]
    %v2935 = vld [vmem:[#allocation10 + $0xd8] sm:$0xff]
    %v2936 = vld [vmem:[#allocation10 + $0xe0] sm:$0xff]
    %v2937 = vld [vmem:[#allocation10 + $0xe8] sm:$0xff]
    %v2938 = vld [vmem:[#allocation10 + $0xf0] sm:$0xff]
    %v2939 = vld [vmem:[#allocation10 + $0xf8] sm:$0xff]
    %v2940 = vld [vmem:[#allocation10 + $0x100] sm:$0xff]
    %v2941 = vld [vmem:[#allocation10 + $0x108] sm:$0xff]
    %v2942 = vld [vmem:[#allocation10 + $0x110] sm:$0xff]
    %v2943 = vld [vmem:[#allocation10 + $0x118] sm:$0xff]
    %v2944 = vld [vmem:[#allocation10 + $0x120] sm:$0xff]
    %v2945 = vld [vmem:[#allocation10 + $0x128] sm:$0xff]
    %v2946 = vld [vmem:[#allocation10 + $0x130] sm:$0xff]
    %v2947 = vld [vmem:[#allocation10 + $0x138] sm:$0xff]
    %v2948 = vld [vmem:[#allocation10 + $0x140] sm:$0xff]
    %v2949 = vld [vmem:[#allocation10 + $0x148] sm:$0xff]
    %v2950 = vld [vmem:[#allocation10 + $0x150] sm:$0xff]
    %v2951 = vld [vmem:[#allocation10 + $0x158] sm:$0xff]
    %v2952 = vld [vmem:[#allocation10 + $0x160] sm:$0xff]
    %v2953 = vld [vmem:[#allocation10 + $0x168] sm:$0xff]
    %v2954 = vld [vmem:[#allocation10 + $0x170] sm:$0xff]
    %v2955 = vld [vmem:[#allocation10 + $0x178] sm:$0xff]
    %v2956 = vld [vmem:[#allocation10 + $0x180] sm:$0xff]
    %v2957 = vld [vmem:[#allocation10 + $0x188] sm:$0xff]
    %v2958 = vld [vmem:[#allocation10 + $0x190] sm:$0xff]
    %v2959 = vld [vmem:[#allocation10 + $0x198] sm:$0xff]
    %v2960 = vld [vmem:[#allocation10 + $0x1a0] sm:$0xff]
    %v2961 = vld [vmem:[#allocation10 + $0x1a8] sm:$0xff]
    %v2962 = vld [vmem:[#allocation10 + $0x1b0] sm:$0xff]
    %v2963 = vld [vmem:[#allocation10 + $0x1b8] sm:$0xff]
    %v2964 = vld [vmem:[#allocation10 + $0x1c0] sm:$0xff]
    %v2965 = vld [vmem:[#allocation10 + $0x1c8] sm:$0xff]
    %v2966 = vld [vmem:[#allocation10 + $0x1d0] sm:$0xff]
    %v2967 = vld [vmem:[#allocation10 + $0x1d8] sm:$0xff]
    %v2968 = vld [vmem:[#allocation10 + $0x1e0] sm:$0xff]
    %v2969 = vld [vmem:[#allocation10 + $0x1e8] sm:$0xff]
    %v2970 = vld [vmem:[#allocation10 + $0x1f0] sm:$0xff]
    %v2971 = vld [vmem:[#allocation10 + $0x1f8] sm:$0xff]
    %v2972 = vld [vmem:[#allocation10 + $0x200] sm:$0xff]
    %v2973 = vld [vmem:[#allocation10 + $0x208] sm:$0xff]
    %v2974 = vld [vmem:[#allocation10 + $0x210] sm:$0xff]
    %v2975 = vld [vmem:[#allocation10 + $0x218] sm:$0xff]
    %v2976 = vld [vmem:[#allocation10 + $0x220] sm:$0xff]
    %v2977 = vld [vmem:[#allocation10 + $0x228] sm:$0xff]
    %v2978 = vld [vmem:[#allocation10 + $0x230] sm:$0xff]
    %v2979 = vld [vmem:[#allocation10 + $0x238] sm:$0xff]
    %v2980 = vld [vmem:[#allocation10 + $0x240] sm:$0xff]
    %v2981 = vld [vmem:[#allocation10 + $0x248] sm:$0xff]
    %v2982 = vld [vmem:[#allocation10 + $0x250] sm:$0xff]
    %v2983 = vld [vmem:[#allocation10 + $0x258] sm:$0xff]
    %v2984 = vld [vmem:[#allocation10 + $0x260] sm:$0xff]
    %v2985 = vld [vmem:[#allocation10 + $0x268] sm:$0xff]
    %v2986 = vld [vmem:[#allocation10 + $0x270] sm:$0xff]
    %v2987 = vld [vmem:[#allocation10 + $0x278] sm:$0xff]
    %v2988 = vld [vmem:[#allocation10 + $0x280] sm:$0xff]
    %v2989 = vld [vmem:[#allocation10 + $0x288] sm:$0xff]
    %v2990 = vld [vmem:[#allocation10 + $0x290] sm:$0xff]
    %v2991 = vld [vmem:[#allocation10 + $0x298] sm:$0xff]
    %v2992 = vld [vmem:[#allocation10 + $0x2a0] sm:$0xff]
    %v2993 = vld [vmem:[#allocation10 + $0x2a8] sm:$0xff]
    %v2994 = vld [vmem:[#allocation10 + $0x2b0] sm:$0xff]
    %v2995 = vld [vmem:[#allocation10 + $0x2b8] sm:$0xff]
    %v2996 = vld [vmem:[#allocation10 + $0x2c0] sm:$0xff]
    %v2997 = vld [vmem:[#allocation10 + $0x2c8] sm:$0xff]
    %v2998 = vld [vmem:[#allocation10 + $0x2d0] sm:$0xff]
    %v2999 = vld [vmem:[#allocation10 + $0x2d8] sm:$0xff]
    %v3000 = vld [vmem:[#allocation10 + $0x2e0] sm:$0xff]
    %v3001 = vld [vmem:[#allocation10 + $0x2e8] sm:$0xff]
    %v3002 = vld [vmem:[#allocation10 + $0x2f0] sm:$0xff]
    %v3003 = vld [vmem:[#allocation10 + $0x2f8] sm:$0xff]
    %v3004 = vld [vmem:[#allocation10 + $0x300] sm:$0xff]
    %v3005 = vld [vmem:[#allocation10 + $0x308] sm:$0xff]
    %v3006 = vld [vmem:[#allocation10 + $0x310] sm:$0xff]
    %v3007 = vld [vmem:[#allocation10 + $0x318] sm:$0xff]
    %v3008 = vld [vmem:[#allocation10 + $0x320] sm:$0xff]
    %v3009 = vld [vmem:[#allocation10 + $0x328] sm:$0xff]
    %v3010 = vld [vmem:[#allocation10 + $0x330] sm:$0xff]
    %v3011 = vld [vmem:[#allocation10 + $0x338] sm:$0xff]
    %v3012 = vld [vmem:[#allocation10 + $0x340] sm:$0xff]
    %v3013 = vld [vmem:[#allocation10 + $0x348] sm:$0xff]
    %v3014 = vld [vmem:[#allocation10 + $0x350] sm:$0xff]
    %v3015 = vld [vmem:[#allocation10 + $0x358] sm:$0xff]
    %v3016 = vld [vmem:[#allocation10 + $0x360] sm:$0xff]
    %v3017 = vld [vmem:[#allocation10 + $0x368] sm:$0xff]
    %v3018 = vld [vmem:[#allocation10 + $0x370] sm:$0xff]
    %v3019 = vld [vmem:[#allocation10 + $0x378] sm:$0xff]
    %v3020 = vld [vmem:[#allocation10 + $0x380] sm:$0xff]
    %v3021 = vld [vmem:[#allocation10 + $0x388] sm:$0xff]
    %v3022 = vld [vmem:[#allocation10 + $0x390] sm:$0xff]
    %v3023 = vld [vmem:[#allocation10 + $0x398] sm:$0xff]
    %v3024 = vld [vmem:[#allocation10 + $0x3a0] sm:$0xff]
    %v3025 = vld [vmem:[#allocation10 + $0x3a8] sm:$0xff]
    %v3026 = vld [vmem:[#allocation10 + $0x3b0] sm:$0xff]
    %v3027 = vld [vmem:[#allocation10 + $0x3b8] sm:$0xff]
    %v3028 = vld [vmem:[#allocation10 + $0x3c0] sm:$0xff]
    %v3029 = vld [vmem:[#allocation10 + $0x3c8] sm:$0xff]
    %v3030 = vld [vmem:[#allocation10 + $0x3d0] sm:$0xff]
    %v3031 = vld [vmem:[#allocation10 + $0x3d8] sm:$0xff]
    %v3032 = vld [vmem:[#allocation10 + $0x3e0] sm:$0xff]
    %v3033 = vld [vmem:[#allocation10 + $0x3e8] sm:$0xff]
    %v3034 = vld [vmem:[#allocation10 + $0x3f0] sm:$0xff]
    %v3035 = vld [vmem:[#allocation10 + $0x3f8] sm:$0xff]
    %v3036 = vunpack.c.l.bf16 %v2908
    %v3037 = vunpack.c.h.bf16 %v2908
    %v3038 = vunpack.c.l.bf16 %v2909
    %v3039 = vunpack.c.h.bf16 %v2909
    %v3040 = vunpack.c.l.bf16 %v2910
    %v3041 = vunpack.c.h.bf16 %v2910
    %v3042 = vunpack.c.l.bf16 %v2911
    %v3043 = vunpack.c.h.bf16 %v2911
    %v3044 = vunpack.c.l.bf16 %v2912
    %v3045 = vunpack.c.h.bf16 %v2912
    %v3046 = vunpack.c.l.bf16 %v2913
    %v3047 = vunpack.c.h.bf16 %v2913
    %v3048 = vunpack.c.l.bf16 %v2914
    %v3049 = vunpack.c.h.bf16 %v2914
    %v3050 = vunpack.c.l.bf16 %v2915
    %v3051 = vunpack.c.h.bf16 %v2915
    %v3052 = vunpack.c.l.bf16 %v2916
    %v3053 = vunpack.c.h.bf16 %v2916
    %v3054 = vunpack.c.l.bf16 %v2917
    %v3055 = vunpack.c.h.bf16 %v2917
    %v3056 = vunpack.c.l.bf16 %v2918
    %v3057 = vunpack.c.h.bf16 %v2918
    %v3058 = vunpack.c.l.bf16 %v2919
    %v3059 = vunpack.c.h.bf16 %v2919
    %v3060 = vunpack.c.l.bf16 %v2920
    %v3061 = vunpack.c.h.bf16 %v2920
    %v3062 = vunpack.c.l.bf16 %v2921
    %v3063 = vunpack.c.h.bf16 %v2921
    %v3064 = vunpack.c.l.bf16 %v2922
    %v3065 = vunpack.c.h.bf16 %v2922
    %v3066 = vunpack.c.l.bf16 %v2923
    %v3067 = vunpack.c.h.bf16 %v2923
    %v3068 = vunpack.c.l.bf16 %v2924
    %v3069 = vunpack.c.h.bf16 %v2924
    %v3070 = vunpack.c.l.bf16 %v2925
    %v3071 = vunpack.c.h.bf16 %v2925
    %v3072 = vunpack.c.l.bf16 %v2926
    %v3073 = vunpack.c.h.bf16 %v2926
    %v3074 = vunpack.c.l.bf16 %v2927
    %v3075 = vunpack.c.h.bf16 %v2927
    %v3076 = vunpack.c.l.bf16 %v2928
    %v3077 = vunpack.c.h.bf16 %v2928
    %v3078 = vunpack.c.l.bf16 %v2929
    %v3079 = vunpack.c.h.bf16 %v2929
    %v3080 = vunpack.c.l.bf16 %v2930
    %v3081 = vunpack.c.h.bf16 %v2930
    %v3082 = vunpack.c.l.bf16 %v2931
    %v3083 = vunpack.c.h.bf16 %v2931
    %v3084 = vunpack.c.l.bf16 %v2932
    %v3085 = vunpack.c.h.bf16 %v2932
    %v3086 = vunpack.c.l.bf16 %v2933
    %v3087 = vunpack.c.h.bf16 %v2933
    %v3088 = vunpack.c.l.bf16 %v2934
    %v3089 = vunpack.c.h.bf16 %v2934
    %v3090 = vunpack.c.l.bf16 %v2935
    %v3091 = vunpack.c.h.bf16 %v2935
    %v3092 = vunpack.c.l.bf16 %v2936
    %v3093 = vunpack.c.h.bf16 %v2936
    %v3094 = vunpack.c.l.bf16 %v2937
    %v3095 = vunpack.c.h.bf16 %v2937
    %v3096 = vunpack.c.l.bf16 %v2938
    %v3097 = vunpack.c.h.bf16 %v2938
    %v3098 = vunpack.c.l.bf16 %v2939
    %v3099 = vunpack.c.h.bf16 %v2939
    %v3100 = vunpack.c.l.bf16 %v2940
    %v3101 = vunpack.c.h.bf16 %v2940
    %v3102 = vunpack.c.l.bf16 %v2941
    %v3103 = vunpack.c.h.bf16 %v2941
    %v3104 = vunpack.c.l.bf16 %v2942
    %v3105 = vunpack.c.h.bf16 %v2942
    %v3106 = vunpack.c.l.bf16 %v2943
    %v3107 = vunpack.c.h.bf16 %v2943
    %v3108 = vunpack.c.l.bf16 %v2944
    %v3109 = vunpack.c.h.bf16 %v2944
    %v3110 = vunpack.c.l.bf16 %v2945
    %v3111 = vunpack.c.h.bf16 %v2945
    %v3112 = vunpack.c.l.bf16 %v2946
    %v3113 = vunpack.c.h.bf16 %v2946
    %v3114 = vunpack.c.l.bf16 %v2947
    %v3115 = vunpack.c.h.bf16 %v2947
    %v3116 = vunpack.c.l.bf16 %v2948
    %v3117 = vunpack.c.h.bf16 %v2948
    %v3118 = vunpack.c.l.bf16 %v2949
    %v3119 = vunpack.c.h.bf16 %v2949
    %v3120 = vunpack.c.l.bf16 %v2950
    %v3121 = vunpack.c.h.bf16 %v2950
    %v3122 = vunpack.c.l.bf16 %v2951
    %v3123 = vunpack.c.h.bf16 %v2951
    %v3124 = vunpack.c.l.bf16 %v2952
    %v3125 = vunpack.c.h.bf16 %v2952
    %v3126 = vunpack.c.l.bf16 %v2953
    %v3127 = vunpack.c.h.bf16 %v2953
    %v3128 = vunpack.c.l.bf16 %v2954
    %v3129 = vunpack.c.h.bf16 %v2954
    %v3130 = vunpack.c.l.bf16 %v2955
    %v3131 = vunpack.c.h.bf16 %v2955
    %v3132 = vunpack.c.l.bf16 %v2956
    %v3133 = vunpack.c.h.bf16 %v2956
    %v3134 = vunpack.c.l.bf16 %v2957
    %v3135 = vunpack.c.h.bf16 %v2957
    %v3136 = vunpack.c.l.bf16 %v2958
    %v3137 = vunpack.c.h.bf16 %v2958
    %v3138 = vunpack.c.l.bf16 %v2959
    %v3139 = vunpack.c.h.bf16 %v2959
    %v3140 = vunpack.c.l.bf16 %v2960
    %v3141 = vunpack.c.h.bf16 %v2960
    %v3142 = vunpack.c.l.bf16 %v2961
    %v3143 = vunpack.c.h.bf16 %v2961
    %v3144 = vunpack.c.l.bf16 %v2962
    %v3145 = vunpack.c.h.bf16 %v2962
    %v3146 = vunpack.c.l.bf16 %v2963
    %v3147 = vunpack.c.h.bf16 %v2963
    %v3148 = vunpack.c.l.bf16 %v2964
    %v3149 = vunpack.c.h.bf16 %v2964
    %v3150 = vunpack.c.l.bf16 %v2965
    %v3151 = vunpack.c.h.bf16 %v2965
    %v3152 = vunpack.c.l.bf16 %v2966
    %v3153 = vunpack.c.h.bf16 %v2966
    %v3154 = vunpack.c.l.bf16 %v2967
    %v3155 = vunpack.c.h.bf16 %v2967
    %v3156 = vunpack.c.l.bf16 %v2968
    %v3157 = vunpack.c.h.bf16 %v2968
    %v3158 = vunpack.c.l.bf16 %v2969
    %v3159 = vunpack.c.h.bf16 %v2969
    %v3160 = vunpack.c.l.bf16 %v2970
    %v3161 = vunpack.c.h.bf16 %v2970
    %v3162 = vunpack.c.l.bf16 %v2971
    %v3163 = vunpack.c.h.bf16 %v2971
    %v3164 = vunpack.c.l.bf16 %v2972
    %v3165 = vunpack.c.h.bf16 %v2972
    %v3166 = vunpack.c.l.bf16 %v2973
    %v3167 = vunpack.c.h.bf16 %v2973
    %v3168 = vunpack.c.l.bf16 %v2974
    %v3169 = vunpack.c.h.bf16 %v2974
    %v3170 = vunpack.c.l.bf16 %v2975
    %v3171 = vunpack.c.h.bf16 %v2975
    %v3172 = vunpack.c.l.bf16 %v2976
    %v3173 = vunpack.c.h.bf16 %v2976
    %v3174 = vunpack.c.l.bf16 %v2977
    %v3175 = vunpack.c.h.bf16 %v2977
    %v3176 = vunpack.c.l.bf16 %v2978
    %v3177 = vunpack.c.h.bf16 %v2978
    %v3178 = vunpack.c.l.bf16 %v2979
    %v3179 = vunpack.c.h.bf16 %v2979
    %v3180 = vunpack.c.l.bf16 %v2980
    %v3181 = vunpack.c.h.bf16 %v2980
    %v3182 = vunpack.c.l.bf16 %v2981
    %v3183 = vunpack.c.h.bf16 %v2981
    %v3184 = vunpack.c.l.bf16 %v2982
    %v3185 = vunpack.c.h.bf16 %v2982
    %v3186 = vunpack.c.l.bf16 %v2983
    %v3187 = vunpack.c.h.bf16 %v2983
    %v3188 = vunpack.c.l.bf16 %v2984
    %v3189 = vunpack.c.h.bf16 %v2984
    %v3190 = vunpack.c.l.bf16 %v2985
    %v3191 = vunpack.c.h.bf16 %v2985
    %v3192 = vunpack.c.l.bf16 %v2986
    %v3193 = vunpack.c.h.bf16 %v2986
    %v3194 = vunpack.c.l.bf16 %v2987
    %v3195 = vunpack.c.h.bf16 %v2987
    %v3196 = vunpack.c.l.bf16 %v2988
    %v3197 = vunpack.c.h.bf16 %v2988
    %v3198 = vunpack.c.l.bf16 %v2989
    %v3199 = vunpack.c.h.bf16 %v2989
    %v3200 = vunpack.c.l.bf16 %v2990
    %v3201 = vunpack.c.h.bf16 %v2990
    %v3202 = vunpack.c.l.bf16 %v2991
    %v3203 = vunpack.c.h.bf16 %v2991
    %v3204 = vunpack.c.l.bf16 %v2992
    %v3205 = vunpack.c.h.bf16 %v2992
    %v3206 = vunpack.c.l.bf16 %v2993
    %v3207 = vunpack.c.h.bf16 %v2993
    %v3208 = vunpack.c.l.bf16 %v2994
    %v3209 = vunpack.c.h.bf16 %v2994
    %v3210 = vunpack.c.l.bf16 %v2995
    %v3211 = vunpack.c.h.bf16 %v2995
    %v3212 = vunpack.c.l.bf16 %v2996
    %v3213 = vunpack.c.h.bf16 %v2996
    %v3214 = vunpack.c.l.bf16 %v2997
    %v3215 = vunpack.c.h.bf16 %v2997
    %v3216 = vunpack.c.l.bf16 %v2998
    %v3217 = vunpack.c.h.bf16 %v2998
    %v3218 = vunpack.c.l.bf16 %v2999
    %v3219 = vunpack.c.h.bf16 %v2999
    %v3220 = vunpack.c.l.bf16 %v3000
    %v3221 = vunpack.c.h.bf16 %v3000
    %v3222 = vunpack.c.l.bf16 %v3001
    %v3223 = vunpack.c.h.bf16 %v3001
    %v3224 = vunpack.c.l.bf16 %v3002
    %v3225 = vunpack.c.h.bf16 %v3002
    %v3226 = vunpack.c.l.bf16 %v3003
    %v3227 = vunpack.c.h.bf16 %v3003
    %v3228 = vunpack.c.l.bf16 %v3004
    %v3229 = vunpack.c.h.bf16 %v3004
    %v3230 = vunpack.c.l.bf16 %v3005
    %v3231 = vunpack.c.h.bf16 %v3005
    %v3232 = vunpack.c.l.bf16 %v3006
    %v3233 = vunpack.c.h.bf16 %v3006
    %v3234 = vunpack.c.l.bf16 %v3007
    %v3235 = vunpack.c.h.bf16 %v3007
    %v3236 = vunpack.c.l.bf16 %v3008
    %v3237 = vunpack.c.h.bf16 %v3008
    %v3238 = vunpack.c.l.bf16 %v3009
    %v3239 = vunpack.c.h.bf16 %v3009
    %v3240 = vunpack.c.l.bf16 %v3010
    %v3241 = vunpack.c.h.bf16 %v3010
    %v3242 = vunpack.c.l.bf16 %v3011
    %v3243 = vunpack.c.h.bf16 %v3011
    %v3244 = vunpack.c.l.bf16 %v3012
    %v3245 = vunpack.c.h.bf16 %v3012
    %v3246 = vunpack.c.l.bf16 %v3013
    %v3247 = vunpack.c.h.bf16 %v3013
    %v3248 = vunpack.c.l.bf16 %v3014
    %v3249 = vunpack.c.h.bf16 %v3014
    %v3250 = vunpack.c.l.bf16 %v3015
    %v3251 = vunpack.c.h.bf16 %v3015
    %v3252 = vunpack.c.l.bf16 %v3016
    %v3253 = vunpack.c.h.bf16 %v3016
    %v3254 = vunpack.c.l.bf16 %v3017
    %v3255 = vunpack.c.h.bf16 %v3017
    %v3256 = vunpack.c.l.bf16 %v3018
    %v3257 = vunpack.c.h.bf16 %v3018
    %v3258 = vunpack.c.l.bf16 %v3019
    %v3259 = vunpack.c.h.bf16 %v3019
    %v3260 = vunpack.c.l.bf16 %v3020
    %v3261 = vunpack.c.h.bf16 %v3020
    %v3262 = vunpack.c.l.bf16 %v3021
    %v3263 = vunpack.c.h.bf16 %v3021
    %v3264 = vunpack.c.l.bf16 %v3022
    %v3265 = vunpack.c.h.bf16 %v3022
    %v3266 = vunpack.c.l.bf16 %v3023
    %v3267 = vunpack.c.h.bf16 %v3023
    %v3268 = vunpack.c.l.bf16 %v3024
    %v3269 = vunpack.c.h.bf16 %v3024
    %v3270 = vunpack.c.l.bf16 %v3025
    %v3271 = vunpack.c.h.bf16 %v3025
    %v3272 = vunpack.c.l.bf16 %v3026
    %v3273 = vunpack.c.h.bf16 %v3026
    %v3274 = vunpack.c.l.bf16 %v3027
    %v3275 = vunpack.c.h.bf16 %v3027
    %v3276 = vunpack.c.l.bf16 %v3028
    %v3277 = vunpack.c.h.bf16 %v3028
    %v3278 = vunpack.c.l.bf16 %v3029
    %v3279 = vunpack.c.h.bf16 %v3029
    %v3280 = vunpack.c.l.bf16 %v3030
    %v3281 = vunpack.c.h.bf16 %v3030
    %v3282 = vunpack.c.l.bf16 %v3031
    %v3283 = vunpack.c.h.bf16 %v3031
    %v3284 = vunpack.c.l.bf16 %v3032
    %v3285 = vunpack.c.h.bf16 %v3032
    %v3286 = vunpack.c.l.bf16 %v3033
    %v3287 = vunpack.c.h.bf16 %v3033
    %v3288 = vunpack.c.l.bf16 %v3034
    %v3289 = vunpack.c.h.bf16 %v3034
    %v3290 = vunpack.c.l.bf16 %v3035
    %v3291 = vunpack.c.h.bf16 %v3035
    %v3292 = vld [vmem:[#allocation11] sm:$0xf]
    %v3294 = vlaneseq
    %v3295 = vshrl.u32 %v3294, 7
    %v3296 = vsub.s32 0, %v3295
    %v3297 = vrot.slane %v3292, %v3296
    %v3298 = vlaneseq
    %v3299 = vshrl.u32 %v3298, 7
    %v3300 = vsub.s32 1, %v3299
    %v3301 = vrot.slane %v3292, %v3300
    %v3302 = vlaneseq
    %v3303 = vshrl.u32 %v3302, 7
    %v3304 = vsub.s32 2, %v3303
    %v3305 = vrot.slane %v3292, %v3304
    %v3306 = vlaneseq
    %v3307 = vshrl.u32 %v3306, 7
    %v3308 = vsub.s32 3, %v3307
    %v3309 = vrot.slane %v3292, %v3308
    %3314 = vmatprep.subr.mxu0 %v3097
    %3315 = vmatpush1.msra.mxu0 %v3096
    %3316 = vmatprep.subr.mxu0 %v3093
    %3317 = vmatpush1.msra.mxu0 %v3092
    %3318 = vmatprep.subr.mxu0 %v3089
    %3319 = vmatpush1.msra.mxu0 %v3088
    %3320 = vmatprep.subr.mxu0 %v3085
    %3321 = vmatpush1.msra.mxu0 %v3084
    %3322 = vmatprep.subr.mxu0 %v3081
    %3323 = vmatpush1.msra.mxu0 %v3080
    %3324 = vmatprep.subr.mxu0 %v3077
    %3325 = vmatpush1.msra.mxu0 %v3076
    %3326 = vmatprep.subr.mxu0 %v3073
    %3327 = vmatpush1.msra.mxu0 %v3072
    %3328 = vmatprep.subr.mxu0 %v3069
    %3329 = vmatpush1.msra.mxu0 %v3068
    %3330 = vmatprep.subr.mxu0 %v3065
    %3331 = vmatpush1.msra.mxu0 %v3064
    %3332 = vmatprep.subr.mxu0 %v3061
    %3333 = vmatpush1.msra.mxu0 %v3060
    %3334 = vmatprep.subr.mxu0 %v3057
    %3335 = vmatpush1.msra.mxu0 %v3056
    %3336 = vmatprep.subr.mxu0 %v3053
    %3337 = vmatpush1.msra.mxu0 %v3052
    %3338 = vmatprep.subr.mxu0 %v3049
    %3339 = vmatpush1.msra.mxu0 %v3048
    %3340 = vmatprep.subr.mxu0 %v3045
    %3341 = vmatpush1.msra.mxu0 %v3044
    %3342 = vmatprep.subr.mxu0 %v3041
    %3343 = vmatpush1.msra.mxu0 %v3040
    %3344 = vmatprep.subr.mxu0 %v3037
    %3345 = vmatpush1.msra.mxu0 %v3036
    %3346 = vmatprep.subr.mxu0 %v3161
    %3347 = vmatpush2.msra.mxu0 %v3160
    %3348 = vmatprep.subr.mxu0 %v3157
    %3349 = vmatpush2.msra.mxu0 %v3156
    %3350 = vmatprep.subr.mxu0 %v3153
    %3351 = vmatpush2.msra.mxu0 %v3152
    %3352 = vmatprep.subr.mxu0 %v3149
    %3353 = vmatpush2.msra.mxu0 %v3148
    %3354 = vmatprep.subr.mxu0 %v3145
    %3355 = vmatpush2.msra.mxu0 %v3144
    %3356 = vmatprep.subr.mxu0 %v3141
    %3357 = vmatpush2.msra.mxu0 %v3140
    %3358 = vmatprep.subr.mxu0 %v3137
    %3359 = vmatpush2.msra.mxu0 %v3136
    %3360 = vmatprep.subr.mxu0 %v3133
    %3361 = vmatpush2.msra.mxu0 %v3132
    %3362 = vmatprep.subr.mxu0 %v3129
    %3363 = vmatpush2.msra.mxu0 %v3128
    %3364 = vmatprep.subr.mxu0 %v3125
    %3365 = vmatpush2.msra.mxu0 %v3124
    %3366 = vmatprep.subr.mxu0 %v3121
    %3367 = vmatpush2.msra.mxu0 %v3120
    %3368 = vmatprep.subr.mxu0 %v3117
    %3369 = vmatpush2.msra.mxu0 %v3116
    %3370 = vmatprep.subr.mxu0 %v3113
    %3371 = vmatpush2.msra.mxu0 %v3112
    %3372 = vmatprep.subr.mxu0 %v3109
    %3373 = vmatpush2.msra.mxu0 %v3108
    %3374 = vmatprep.subr.mxu0 %v3105
    %3375 = vmatpush2.msra.mxu0 %v3104
    %3376 = vmatprep.subr.mxu0 %v3101
    %3377 = vmatpush2.msra.mxu0 %v3100
    %3378 = vmatprep.mubr.f32.mxu0 %v2905
    %3379 = vmatmul.mubr.f32.gmra.mxu0 %v2904
    %v3380 = vpop.f32.mrf.mxu0
    %v3381 = vadd.f32 %v3297, %v3380
    %v3382 = vpop.f32.mrf.mxu0
    %v3383 = vadd.f32 %v3301, %v3382
    %3384 = vdwg.mxu0
    %3385 = vmatprep.subr.mxu0 %v3225
    %3386 = vmatpush1.msra.mxu0 %v3224
    %3387 = vmatprep.subr.mxu0 %v3221
    %3388 = vmatpush1.msra.mxu0 %v3220
    %3389 = vmatprep.subr.mxu0 %v3217
    %3390 = vmatpush1.msra.mxu0 %v3216
    %3391 = vmatprep.subr.mxu0 %v3213
    %3392 = vmatpush1.msra.mxu0 %v3212
    %3393 = vmatprep.subr.mxu0 %v3209
    %3394 = vmatpush1.msra.mxu0 %v3208
    %3395 = vmatprep.subr.mxu0 %v3205
    %3396 = vmatpush1.msra.mxu0 %v3204
    %3397 = vmatprep.subr.mxu0 %v3201
    %3398 = vmatpush1.msra.mxu0 %v3200
    %3399 = vmatprep.subr.mxu0 %v3197
    %3400 = vmatpush1.msra.mxu0 %v3196
    %3401 = vmatprep.subr.mxu0 %v3193
    %3402 = vmatpush1.msra.mxu0 %v3192
    %3403 = vmatprep.subr.mxu0 %v3189
    %3404 = vmatpush1.msra.mxu0 %v3188
    %3405 = vmatprep.subr.mxu0 %v3185
    %3406 = vmatpush1.msra.mxu0 %v3184
    %3407 = vmatprep.subr.mxu0 %v3181
    %3408 = vmatpush1.msra.mxu0 %v3180
    %3409 = vmatprep.subr.mxu0 %v3177
    %3410 = vmatpush1.msra.mxu0 %v3176
    %3411 = vmatprep.subr.mxu0 %v3173
    %3412 = vmatpush1.msra.mxu0 %v3172
    %3413 = vmatprep.subr.mxu0 %v3169
    %3414 = vmatpush1.msra.mxu0 %v3168
    %3415 = vmatprep.subr.mxu0 %v3165
    %3416 = vmatpush1.msra.mxu0 %v3164
    %3417 = vmatprep.subr.mxu0 %v3289
    %3418 = vmatpush2.msra.mxu0 %v3288
    %3419 = vmatprep.subr.mxu0 %v3285
    %3420 = vmatpush2.msra.mxu0 %v3284
    %3421 = vmatprep.subr.mxu0 %v3281
    %3422 = vmatpush2.msra.mxu0 %v3280
    %3423 = vmatprep.subr.mxu0 %v3277
    %3424 = vmatpush2.msra.mxu0 %v3276
    %3425 = vmatprep.subr.mxu0 %v3273
    %3426 = vmatpush2.msra.mxu0 %v3272
    %3427 = vmatprep.subr.mxu0 %v3269
    %3428 = vmatpush2.msra.mxu0 %v3268
    %3429 = vmatprep.subr.mxu0 %v3265
    %3430 = vmatpush2.msra.mxu0 %v3264
    %3431 = vmatprep.subr.mxu0 %v3261
    %3432 = vmatpush2.msra.mxu0 %v3260
    %3433 = vmatprep.subr.mxu0 %v3257
    %3434 = vmatpush2.msra.mxu0 %v3256
    %3435 = vmatprep.subr.mxu0 %v3253
    %3436 = vmatpush2.msra.mxu0 %v3252
    %3437 = vmatprep.subr.mxu0 %v3249
    %3438 = vmatpush2.msra.mxu0 %v3248
    %3439 = vmatprep.subr.mxu0 %v3245
    %3440 = vmatpush2.msra.mxu0 %v3244
    %3441 = vmatprep.subr.mxu0 %v3241
    %3442 = vmatpush2.msra.mxu0 %v3240
    %3443 = vmatprep.subr.mxu0 %v3237
    %3444 = vmatpush2.msra.mxu0 %v3236
    %3445 = vmatprep.subr.mxu0 %v3233
    %3446 = vmatpush2.msra.mxu0 %v3232
    %3447 = vmatprep.subr.mxu0 %v3229
    %3448 = vmatpush2.msra.mxu0 %v3228
    %3449 = vmatprep.mubr.f32.mxu0 %v2907
    %3450 = vmatmul.mubr.f32.gmra.mxu0 %v2906
    %v3451 = vpop.f32.mrf.mxu0
    %v3452 = vadd.f32 %v3381, %v3451
    %v3453 = vpop.f32.mrf.mxu0
    %v3454 = vadd.f32 %v3383, %v3453
    %3455 = vdwg.mxu0
    %3456 = vmatprep.subr.mxu0 %v3099
    %3457 = vmatpush1.msra.mxu0 %v3098
    %3458 = vmatprep.subr.mxu0 %v3095
    %3459 = vmatpush1.msra.mxu0 %v3094
    %3460 = vmatprep.subr.mxu0 %v3091
    %3461 = vmatpush1.msra.mxu0 %v3090
    %3462 = vmatprep.subr.mxu0 %v3087
    %3463 = vmatpush1.msra.mxu0 %v3086
    %3464 = vmatprep.subr.mxu0 %v3083
    %3465 = vmatpush1.msra.mxu0 %v3082
    %3466 = vmatprep.subr.mxu0 %v3079
    %3467 = vmatpush1.msra.mxu0 %v3078
    %3468 = vmatprep.subr.mxu0 %v3075
    %3469 = vmatpush1.msra.mxu0 %v3074
    %3470 = vmatprep.subr.mxu0 %v3071
    %3471 = vmatpush1.msra.mxu0 %v3070
    %3472 = vmatprep.subr.mxu0 %v3067
    %3473 = vmatpush1.msra.mxu0 %v3066
    %3474 = vmatprep.subr.mxu0 %v3063
    %3475 = vmatpush1.msra.mxu0 %v3062
    %3476 = vmatprep.subr.mxu0 %v3059
    %3477 = vmatpush1.msra.mxu0 %v3058
    %3478 = vmatprep.subr.mxu0 %v3055
    %3479 = vmatpush1.msra.mxu0 %v3054
    %3480 = vmatprep.subr.mxu0 %v3051
    %3481 = vmatpush1.msra.mxu0 %v3050
    %3482 = vmatprep.subr.mxu0 %v3047
    %3483 = vmatpush1.msra.mxu0 %v3046
    %3484 = vmatprep.subr.mxu0 %v3043
    %3485 = vmatpush1.msra.mxu0 %v3042
    %3486 = vmatprep.subr.mxu0 %v3039
    %3487 = vmatpush1.msra.mxu0 %v3038
    %3488 = vmatprep.subr.mxu0 %v3163
    %3489 = vmatpush2.msra.mxu0 %v3162
    %3490 = vmatprep.subr.mxu0 %v3159
    %3491 = vmatpush2.msra.mxu0 %v3158
    %3492 = vmatprep.subr.mxu0 %v3155
    %3493 = vmatpush2.msra.mxu0 %v3154
    %3494 = vmatprep.subr.mxu0 %v3151
    %3495 = vmatpush2.msra.mxu0 %v3150
    %3496 = vmatprep.subr.mxu0 %v3147
    %3497 = vmatpush2.msra.mxu0 %v3146
    %3498 = vmatprep.subr.mxu0 %v3143
    %3499 = vmatpush2.msra.mxu0 %v3142
    %3500 = vmatprep.subr.mxu0 %v3139
    %3501 = vmatpush2.msra.mxu0 %v3138
    %3502 = vmatprep.subr.mxu0 %v3135
    %3503 = vmatpush2.msra.mxu0 %v3134
    %3504 = vmatprep.subr.mxu0 %v3131
    %3505 = vmatpush2.msra.mxu0 %v3130
    %3506 = vmatprep.subr.mxu0 %v3127
    %3507 = vmatpush2.msra.mxu0 %v3126
    %3508 = vmatprep.subr.mxu0 %v3123
    %3509 = vmatpush2.msra.mxu0 %v3122
    %3510 = vmatprep.subr.mxu0 %v3119
    %3511 = vmatpush2.msra.mxu0 %v3118
    %3512 = vmatprep.subr.mxu0 %v3115
    %3513 = vmatpush2.msra.mxu0 %v3114
    %3514 = vmatprep.subr.mxu0 %v3111
    %3515 = vmatpush2.msra.mxu0 %v3110
    %3516 = vmatprep.subr.mxu0 %v3107
    %3517 = vmatpush2.msra.mxu0 %v3106
    %3518 = vmatprep.subr.mxu0 %v3103
    %3519 = vmatpush2.msra.mxu0 %v3102
    %3520 = vmatprep.mubr.f32.mxu0 %v2905
    %3521 = vmatmul.mubr.f32.gmra.mxu0 %v2904
    %v3522 = vpop.f32.mrf.mxu0
    %v3523 = vadd.f32 %v3305, %v3522
    %v3524 = vpop.f32.mrf.mxu0
    %v3525 = vadd.f32 %v3309, %v3524
    %3526 = vdwg.mxu0
    %3527 = vmatprep.subr.mxu0 %v3227
    %3528 = vmatpush1.msra.mxu0 %v3226
    %3529 = vmatprep.subr.mxu0 %v3223
    %3530 = vmatpush1.msra.mxu0 %v3222
    %3531 = vmatprep.subr.mxu0 %v3219
    %3532 = vmatpush1.msra.mxu0 %v3218
    %3533 = vmatprep.subr.mxu0 %v3215
    %3534 = vmatpush1.msra.mxu0 %v3214
    %3535 = vmatprep.subr.mxu0 %v3211
    %3536 = vmatpush1.msra.mxu0 %v3210
    %3537 = vmatprep.subr.mxu0 %v3207
    %3538 = vmatpush1.msra.mxu0 %v3206
    %3539 = vmatprep.subr.mxu0 %v3203
    %3540 = vmatpush1.msra.mxu0 %v3202
    %3541 = vmatprep.subr.mxu0 %v3199
    %3542 = vmatpush1.msra.mxu0 %v3198
    %3543 = vmatprep.subr.mxu0 %v3195
    %3544 = vmatpush1.msra.mxu0 %v3194
    %3545 = vmatprep.subr.mxu0 %v3191
    %3546 = vmatpush1.msra.mxu0 %v3190
    %3547 = vmatprep.subr.mxu0 %v3187
    %3548 = vmatpush1.msra.mxu0 %v3186
    %3549 = vmatprep.subr.mxu0 %v3183
    %3550 = vmatpush1.msra.mxu0 %v3182
    %3551 = vmatprep.subr.mxu0 %v3179
    %3552 = vmatpush1.msra.mxu0 %v3178
    %3553 = vmatprep.subr.mxu0 %v3175
    %3554 = vmatpush1.msra.mxu0 %v3174
    %3555 = vmatprep.subr.mxu0 %v3171
    %3556 = vmatpush1.msra.mxu0 %v3170
    %3557 = vmatprep.subr.mxu0 %v3167
    %3558 = vmatpush1.msra.mxu0 %v3166
    %3559 = vmatprep.subr.mxu0 %v3291
    %3560 = vmatpush2.msra.mxu0 %v3290
    %3561 = vmatprep.subr.mxu0 %v3287
    %3562 = vmatpush2.msra.mxu0 %v3286
    %3563 = vmatprep.subr.mxu0 %v3283
    %3564 = vmatpush2.msra.mxu0 %v3282
    %3565 = vmatprep.subr.mxu0 %v3279
    %3566 = vmatpush2.msra.mxu0 %v3278
    %3567 = vmatprep.subr.mxu0 %v3275
    %3568 = vmatpush2.msra.mxu0 %v3274
    %3569 = vmatprep.subr.mxu0 %v3271
    %3570 = vmatpush2.msra.mxu0 %v3270
    %3571 = vmatprep.subr.mxu0 %v3267
    %3572 = vmatpush2.msra.mxu0 %v3266
    %3573 = vmatprep.subr.mxu0 %v3263
    %3574 = vmatpush2.msra.mxu0 %v3262
    %3575 = vmatprep.subr.mxu0 %v3259
    %3576 = vmatpush2.msra.mxu0 %v3258
    %3577 = vmatprep.subr.mxu0 %v3255
    %3578 = vmatpush2.msra.mxu0 %v3254
    %3579 = vmatprep.subr.mxu0 %v3251
    %3580 = vmatpush2.msra.mxu0 %v3250
    %3581 = vmatprep.subr.mxu0 %v3247
    %3582 = vmatpush2.msra.mxu0 %v3246
    %3583 = vmatprep.subr.mxu0 %v3243
    %3584 = vmatpush2.msra.mxu0 %v3242
    %3585 = vmatprep.subr.mxu0 %v3239
    %3586 = vmatpush2.msra.mxu0 %v3238
    %3587 = vmatprep.subr.mxu0 %v3235
    %3588 = vmatpush2.msra.mxu0 %v3234
    %3589 = vmatprep.subr.mxu0 %v3231
    %3590 = vmatpush2.msra.mxu0 %v3230
    %3591 = vmatprep.mubr.f32.mxu0 %v2907
    %3592 = vmatmul.mubr.f32.gmra.mxu0 %v2906
    %v3593 = vpop.f32.mrf.mxu0
    %v3594 = vadd.f32 %v3523, %v3593
    %v3595 = vpop.f32.mrf.mxu0
    %v3596 = vadd.f32 %v3525, %v3595
    %3597 = vdwg.mxu0
    %vm3598 = vcmp.gt.f32.partialorder %v3452, 0.0
    %vm3599 = vcmp.gt.f32.partialorder %v3454, 0.0
    %vm3600 = vcmp.gt.f32.partialorder %v3594, 0.0
    %vm3601 = vcmp.gt.f32.partialorder %v3596, 0.0
    %v3602 = vmul.f32 %v3452, 0.2
    %v3603 = vmul.f32 %v3454, 0.2
    %v3604 = vmul.f32 %v3594, 0.2
    %v3605 = vmul.f32 %v3596, 0.2
    %v3606 = vsel %vm3598, %v3452, %v3602
    %v3607 = vsel %vm3599, %v3454, %v3603
    %v3608 = vsel %vm3600, %v3594, %v3604
    %v3609 = vsel %vm3601, %v3596, %v3605
    %v3610 = vld [vmem:[#allocation13] sm:$0xff]
    %v3611 = vld [vmem:[#allocation13 + $0x8] sm:$0xff]
    %v3612 = vld [vmem:[#allocation13 + $0x10] sm:$0xff]
    %v3613 = vld [vmem:[#allocation13 + $0x18] sm:$0xff]
    %v3614 = vld [vmem:[#allocation13 + $0x20] sm:$0xff]
    %v3615 = vld [vmem:[#allocation13 + $0x28] sm:$0xff]
    %v3616 = vld [vmem:[#allocation13 + $0x30] sm:$0xff]
    %v3617 = vld [vmem:[#allocation13 + $0x38] sm:$0xff]
    %v3618 = vld [vmem:[#allocation13 + $0x40] sm:$0xff]
    %v3619 = vld [vmem:[#allocation13 + $0x48] sm:$0xff]
    %v3620 = vld [vmem:[#allocation13 + $0x50] sm:$0xff]
    %v3621 = vld [vmem:[#allocation13 + $0x58] sm:$0xff]
    %v3622 = vld [vmem:[#allocation13 + $0x60] sm:$0xff]
    %v3623 = vld [vmem:[#allocation13 + $0x68] sm:$0xff]
    %v3624 = vld [vmem:[#allocation13 + $0x70] sm:$0xff]
    %v3625 = vld [vmem:[#allocation13 + $0x78] sm:$0xff]
    %v3626 = vld [vmem:[#allocation13 + $0x80] sm:$0xff]
    %v3627 = vld [vmem:[#allocation13 + $0x88] sm:$0xff]
    %v3628 = vld [vmem:[#allocation13 + $0x90] sm:$0xff]
    %v3629 = vld [vmem:[#allocation13 + $0x98] sm:$0xff]
    %v3630 = vld [vmem:[#allocation13 + $0xa0] sm:$0xff]
    %v3631 = vld [vmem:[#allocation13 + $0xa8] sm:$0xff]
    %v3632 = vld [vmem:[#allocation13 + $0xb0] sm:$0xff]
    %v3633 = vld [vmem:[#allocation13 + $0xb8] sm:$0xff]
    %v3634 = vld [vmem:[#allocation13 + $0xc0] sm:$0xff]
    %v3635 = vld [vmem:[#allocation13 + $0xc8] sm:$0xff]
    %v3636 = vld [vmem:[#allocation13 + $0xd0] sm:$0xff]
    %v3637 = vld [vmem:[#allocation13 + $0xd8] sm:$0xff]
    %v3638 = vld [vmem:[#allocation13 + $0xe0] sm:$0xff]
    %v3639 = vld [vmem:[#allocation13 + $0xe8] sm:$0xff]
    %v3640 = vld [vmem:[#allocation13 + $0xf0] sm:$0xff]
    %v3641 = vld [vmem:[#allocation13 + $0xf8] sm:$0xff]
    %v3642 = vld [vmem:[#allocation13 + $0x100] sm:$0xff]
    %v3643 = vld [vmem:[#allocation13 + $0x108] sm:$0xff]
    %v3644 = vld [vmem:[#allocation13 + $0x110] sm:$0xff]
    %v3645 = vld [vmem:[#allocation13 + $0x118] sm:$0xff]
    %v3646 = vld [vmem:[#allocation13 + $0x120] sm:$0xff]
    %v3647 = vld [vmem:[#allocation13 + $0x128] sm:$0xff]
    %v3648 = vld [vmem:[#allocation13 + $0x130] sm:$0xff]
    %v3649 = vld [vmem:[#allocation13 + $0x138] sm:$0xff]
    %v3650 = vld [vmem:[#allocation13 + $0x140] sm:$0xff]
    %v3651 = vld [vmem:[#allocation13 + $0x148] sm:$0xff]
    %v3652 = vld [vmem:[#allocation13 + $0x150] sm:$0xff]
    %v3653 = vld [vmem:[#allocation13 + $0x158] sm:$0xff]
    %v3654 = vld [vmem:[#allocation13 + $0x160] sm:$0xff]
    %v3655 = vld [vmem:[#allocation13 + $0x168] sm:$0xff]
    %v3656 = vld [vmem:[#allocation13 + $0x170] sm:$0xff]
    %v3657 = vld [vmem:[#allocation13 + $0x178] sm:$0xff]
    %v3658 = vld [vmem:[#allocation13 + $0x180] sm:$0xff]
    %v3659 = vld [vmem:[#allocation13 + $0x188] sm:$0xff]
    %v3660 = vld [vmem:[#allocation13 + $0x190] sm:$0xff]
    %v3661 = vld [vmem:[#allocation13 + $0x198] sm:$0xff]
    %v3662 = vld [vmem:[#allocation13 + $0x1a0] sm:$0xff]
    %v3663 = vld [vmem:[#allocation13 + $0x1a8] sm:$0xff]
    %v3664 = vld [vmem:[#allocation13 + $0x1b0] sm:$0xff]
    %v3665 = vld [vmem:[#allocation13 + $0x1b8] sm:$0xff]
    %v3666 = vld [vmem:[#allocation13 + $0x1c0] sm:$0xff]
    %v3667 = vld [vmem:[#allocation13 + $0x1c8] sm:$0xff]
    %v3668 = vld [vmem:[#allocation13 + $0x1d0] sm:$0xff]
    %v3669 = vld [vmem:[#allocation13 + $0x1d8] sm:$0xff]
    %v3670 = vld [vmem:[#allocation13 + $0x1e0] sm:$0xff]
    %v3671 = vld [vmem:[#allocation13 + $0x1e8] sm:$0xff]
    %v3672 = vld [vmem:[#allocation13 + $0x1f0] sm:$0xff]
    %v3673 = vld [vmem:[#allocation13 + $0x1f8] sm:$0xff]
    %v3674 = vld [vmem:[#allocation13 + $0x200] sm:$0xff]
    %v3675 = vld [vmem:[#allocation13 + $0x208] sm:$0xff]
    %v3676 = vld [vmem:[#allocation13 + $0x210] sm:$0xff]
    %v3677 = vld [vmem:[#allocation13 + $0x218] sm:$0xff]
    %v3678 = vld [vmem:[#allocation13 + $0x220] sm:$0xff]
    %v3679 = vld [vmem:[#allocation13 + $0x228] sm:$0xff]
    %v3680 = vld [vmem:[#allocation13 + $0x230] sm:$0xff]
    %v3681 = vld [vmem:[#allocation13 + $0x238] sm:$0xff]
    %v3682 = vld [vmem:[#allocation13 + $0x240] sm:$0xff]
    %v3683 = vld [vmem:[#allocation13 + $0x248] sm:$0xff]
    %v3684 = vld [vmem:[#allocation13 + $0x250] sm:$0xff]
    %v3685 = vld [vmem:[#allocation13 + $0x258] sm:$0xff]
    %v3686 = vld [vmem:[#allocation13 + $0x260] sm:$0xff]
    %v3687 = vld [vmem:[#allocation13 + $0x268] sm:$0xff]
    %v3688 = vld [vmem:[#allocation13 + $0x270] sm:$0xff]
    %v3689 = vld [vmem:[#allocation13 + $0x278] sm:$0xff]
    %v3690 = vld [vmem:[#allocation13 + $0x280] sm:$0xff]
    %v3691 = vld [vmem:[#allocation13 + $0x288] sm:$0xff]
    %v3692 = vld [vmem:[#allocation13 + $0x290] sm:$0xff]
    %v3693 = vld [vmem:[#allocation13 + $0x298] sm:$0xff]
    %v3694 = vld [vmem:[#allocation13 + $0x2a0] sm:$0xff]
    %v3695 = vld [vmem:[#allocation13 + $0x2a8] sm:$0xff]
    %v3696 = vld [vmem:[#allocation13 + $0x2b0] sm:$0xff]
    %v3697 = vld [vmem:[#allocation13 + $0x2b8] sm:$0xff]
    %v3698 = vld [vmem:[#allocation13 + $0x2c0] sm:$0xff]
    %v3699 = vld [vmem:[#allocation13 + $0x2c8] sm:$0xff]
    %v3700 = vld [vmem:[#allocation13 + $0x2d0] sm:$0xff]
    %v3701 = vld [vmem:[#allocation13 + $0x2d8] sm:$0xff]
    %v3702 = vld [vmem:[#allocation13 + $0x2e0] sm:$0xff]
    %v3703 = vld [vmem:[#allocation13 + $0x2e8] sm:$0xff]
    %v3704 = vld [vmem:[#allocation13 + $0x2f0] sm:$0xff]
    %v3705 = vld [vmem:[#allocation13 + $0x2f8] sm:$0xff]
    %v3706 = vld [vmem:[#allocation13 + $0x300] sm:$0xff]
    %v3707 = vld [vmem:[#allocation13 + $0x308] sm:$0xff]
    %v3708 = vld [vmem:[#allocation13 + $0x310] sm:$0xff]
    %v3709 = vld [vmem:[#allocation13 + $0x318] sm:$0xff]
    %v3710 = vld [vmem:[#allocation13 + $0x320] sm:$0xff]
    %v3711 = vld [vmem:[#allocation13 + $0x328] sm:$0xff]
    %v3712 = vld [vmem:[#allocation13 + $0x330] sm:$0xff]
    %v3713 = vld [vmem:[#allocation13 + $0x338] sm:$0xff]
    %v3714 = vld [vmem:[#allocation13 + $0x340] sm:$0xff]
    %v3715 = vld [vmem:[#allocation13 + $0x348] sm:$0xff]
    %v3716 = vld [vmem:[#allocation13 + $0x350] sm:$0xff]
    %v3717 = vld [vmem:[#allocation13 + $0x358] sm:$0xff]
    %v3718 = vld [vmem:[#allocation13 + $0x360] sm:$0xff]
    %v3719 = vld [vmem:[#allocation13 + $0x368] sm:$0xff]
    %v3720 = vld [vmem:[#allocation13 + $0x370] sm:$0xff]
    %v3721 = vld [vmem:[#allocation13 + $0x378] sm:$0xff]
    %v3722 = vld [vmem:[#allocation13 + $0x380] sm:$0xff]
    %v3723 = vld [vmem:[#allocation13 + $0x388] sm:$0xff]
    %v3724 = vld [vmem:[#allocation13 + $0x390] sm:$0xff]
    %v3725 = vld [vmem:[#allocation13 + $0x398] sm:$0xff]
    %v3726 = vld [vmem:[#allocation13 + $0x3a0] sm:$0xff]
    %v3727 = vld [vmem:[#allocation13 + $0x3a8] sm:$0xff]
    %v3728 = vld [vmem:[#allocation13 + $0x3b0] sm:$0xff]
    %v3729 = vld [vmem:[#allocation13 + $0x3b8] sm:$0xff]
    %v3730 = vld [vmem:[#allocation13 + $0x3c0] sm:$0xff]
    %v3731 = vld [vmem:[#allocation13 + $0x3c8] sm:$0xff]
    %v3732 = vld [vmem:[#allocation13 + $0x3d0] sm:$0xff]
    %v3733 = vld [vmem:[#allocation13 + $0x3d8] sm:$0xff]
    %v3734 = vld [vmem:[#allocation13 + $0x3e0] sm:$0xff]
    %v3735 = vld [vmem:[#allocation13 + $0x3e8] sm:$0xff]
    %v3736 = vld [vmem:[#allocation13 + $0x3f0] sm:$0xff]
    %v3737 = vld [vmem:[#allocation13 + $0x3f8] sm:$0xff]
    %v3738 = vunpack.c.l.bf16 %v3610
    %v3739 = vunpack.c.h.bf16 %v3610
    %v3740 = vunpack.c.l.bf16 %v3611
    %v3741 = vunpack.c.h.bf16 %v3611
    %v3742 = vunpack.c.l.bf16 %v3612
    %v3743 = vunpack.c.h.bf16 %v3612
    %v3744 = vunpack.c.l.bf16 %v3613
    %v3745 = vunpack.c.h.bf16 %v3613
    %v3746 = vunpack.c.l.bf16 %v3614
    %v3747 = vunpack.c.h.bf16 %v3614
    %v3748 = vunpack.c.l.bf16 %v3615
    %v3749 = vunpack.c.h.bf16 %v3615
    %v3750 = vunpack.c.l.bf16 %v3616
    %v3751 = vunpack.c.h.bf16 %v3616
    %v3752 = vunpack.c.l.bf16 %v3617
    %v3753 = vunpack.c.h.bf16 %v3617
    %v3754 = vunpack.c.l.bf16 %v3618
    %v3755 = vunpack.c.h.bf16 %v3618
    %v3756 = vunpack.c.l.bf16 %v3619
    %v3757 = vunpack.c.h.bf16 %v3619
    %v3758 = vunpack.c.l.bf16 %v3620
    %v3759 = vunpack.c.h.bf16 %v3620
    %v3760 = vunpack.c.l.bf16 %v3621
    %v3761 = vunpack.c.h.bf16 %v3621
    %v3762 = vunpack.c.l.bf16 %v3622
    %v3763 = vunpack.c.h.bf16 %v3622
    %v3764 = vunpack.c.l.bf16 %v3623
    %v3765 = vunpack.c.h.bf16 %v3623
    %v3766 = vunpack.c.l.bf16 %v3624
    %v3767 = vunpack.c.h.bf16 %v3624
    %v3768 = vunpack.c.l.bf16 %v3625
    %v3769 = vunpack.c.h.bf16 %v3625
    %v3770 = vunpack.c.l.bf16 %v3626
    %v3771 = vunpack.c.h.bf16 %v3626
    %v3772 = vunpack.c.l.bf16 %v3627
    %v3773 = vunpack.c.h.bf16 %v3627
    %v3774 = vunpack.c.l.bf16 %v3628
    %v3775 = vunpack.c.h.bf16 %v3628
    %v3776 = vunpack.c.l.bf16 %v3629
    %v3777 = vunpack.c.h.bf16 %v3629
    %v3778 = vunpack.c.l.bf16 %v3630
    %v3779 = vunpack.c.h.bf16 %v3630
    %v3780 = vunpack.c.l.bf16 %v3631
    %v3781 = vunpack.c.h.bf16 %v3631
    %v3782 = vunpack.c.l.bf16 %v3632
    %v3783 = vunpack.c.h.bf16 %v3632
    %v3784 = vunpack.c.l.bf16 %v3633
    %v3785 = vunpack.c.h.bf16 %v3633
    %v3786 = vunpack.c.l.bf16 %v3634
    %v3787 = vunpack.c.h.bf16 %v3634
    %v3788 = vunpack.c.l.bf16 %v3635
    %v3789 = vunpack.c.h.bf16 %v3635
    %v3790 = vunpack.c.l.bf16 %v3636
    %v3791 = vunpack.c.h.bf16 %v3636
    %v3792 = vunpack.c.l.bf16 %v3637
    %v3793 = vunpack.c.h.bf16 %v3637
    %v3794 = vunpack.c.l.bf16 %v3638
    %v3795 = vunpack.c.h.bf16 %v3638
    %v3796 = vunpack.c.l.bf16 %v3639
    %v3797 = vunpack.c.h.bf16 %v3639
    %v3798 = vunpack.c.l.bf16 %v3640
    %v3799 = vunpack.c.h.bf16 %v3640
    %v3800 = vunpack.c.l.bf16 %v3641
    %v3801 = vunpack.c.h.bf16 %v3641
    %v3802 = vunpack.c.l.bf16 %v3642
    %v3803 = vunpack.c.h.bf16 %v3642
    %v3804 = vunpack.c.l.bf16 %v3643
    %v3805 = vunpack.c.h.bf16 %v3643
    %v3806 = vunpack.c.l.bf16 %v3644
    %v3807 = vunpack.c.h.bf16 %v3644
    %v3808 = vunpack.c.l.bf16 %v3645
    %v3809 = vunpack.c.h.bf16 %v3645
    %v3810 = vunpack.c.l.bf16 %v3646
    %v3811 = vunpack.c.h.bf16 %v3646
    %v3812 = vunpack.c.l.bf16 %v3647
    %v3813 = vunpack.c.h.bf16 %v3647
    %v3814 = vunpack.c.l.bf16 %v3648
    %v3815 = vunpack.c.h.bf16 %v3648
    %v3816 = vunpack.c.l.bf16 %v3649
    %v3817 = vunpack.c.h.bf16 %v3649
    %v3818 = vunpack.c.l.bf16 %v3650
    %v3819 = vunpack.c.h.bf16 %v3650
    %v3820 = vunpack.c.l.bf16 %v3651
    %v3821 = vunpack.c.h.bf16 %v3651
    %v3822 = vunpack.c.l.bf16 %v3652
    %v3823 = vunpack.c.h.bf16 %v3652
    %v3824 = vunpack.c.l.bf16 %v3653
    %v3825 = vunpack.c.h.bf16 %v3653
    %v3826 = vunpack.c.l.bf16 %v3654
    %v3827 = vunpack.c.h.bf16 %v3654
    %v3828 = vunpack.c.l.bf16 %v3655
    %v3829 = vunpack.c.h.bf16 %v3655
    %v3830 = vunpack.c.l.bf16 %v3656
    %v3831 = vunpack.c.h.bf16 %v3656
    %v3832 = vunpack.c.l.bf16 %v3657
    %v3833 = vunpack.c.h.bf16 %v3657
    %v3834 = vunpack.c.l.bf16 %v3658
    %v3835 = vunpack.c.h.bf16 %v3658
    %v3836 = vunpack.c.l.bf16 %v3659
    %v3837 = vunpack.c.h.bf16 %v3659
    %v3838 = vunpack.c.l.bf16 %v3660
    %v3839 = vunpack.c.h.bf16 %v3660
    %v3840 = vunpack.c.l.bf16 %v3661
    %v3841 = vunpack.c.h.bf16 %v3661
    %v3842 = vunpack.c.l.bf16 %v3662
    %v3843 = vunpack.c.h.bf16 %v3662
    %v3844 = vunpack.c.l.bf16 %v3663
    %v3845 = vunpack.c.h.bf16 %v3663
    %v3846 = vunpack.c.l.bf16 %v3664
    %v3847 = vunpack.c.h.bf16 %v3664
    %v3848 = vunpack.c.l.bf16 %v3665
    %v3849 = vunpack.c.h.bf16 %v3665
    %v3850 = vunpack.c.l.bf16 %v3666
    %v3851 = vunpack.c.h.bf16 %v3666
    %v3852 = vunpack.c.l.bf16 %v3667
    %v3853 = vunpack.c.h.bf16 %v3667
    %v3854 = vunpack.c.l.bf16 %v3668
    %v3855 = vunpack.c.h.bf16 %v3668
    %v3856 = vunpack.c.l.bf16 %v3669
    %v3857 = vunpack.c.h.bf16 %v3669
    %v3858 = vunpack.c.l.bf16 %v3670
    %v3859 = vunpack.c.h.bf16 %v3670
    %v3860 = vunpack.c.l.bf16 %v3671
    %v3861 = vunpack.c.h.bf16 %v3671
    %v3862 = vunpack.c.l.bf16 %v3672
    %v3863 = vunpack.c.h.bf16 %v3672
    %v3864 = vunpack.c.l.bf16 %v3673
    %v3865 = vunpack.c.h.bf16 %v3673
    %v3866 = vunpack.c.l.bf16 %v3674
    %v3867 = vunpack.c.h.bf16 %v3674
    %v3868 = vunpack.c.l.bf16 %v3675
    %v3869 = vunpack.c.h.bf16 %v3675
    %v3870 = vunpack.c.l.bf16 %v3676
    %v3871 = vunpack.c.h.bf16 %v3676
    %v3872 = vunpack.c.l.bf16 %v3677
    %v3873 = vunpack.c.h.bf16 %v3677
    %v3874 = vunpack.c.l.bf16 %v3678
    %v3875 = vunpack.c.h.bf16 %v3678
    %v3876 = vunpack.c.l.bf16 %v3679
    %v3877 = vunpack.c.h.bf16 %v3679
    %v3878 = vunpack.c.l.bf16 %v3680
    %v3879 = vunpack.c.h.bf16 %v3680
    %v3880 = vunpack.c.l.bf16 %v3681
    %v3881 = vunpack.c.h.bf16 %v3681
    %v3882 = vunpack.c.l.bf16 %v3682
    %v3883 = vunpack.c.h.bf16 %v3682
    %v3884 = vunpack.c.l.bf16 %v3683
    %v3885 = vunpack.c.h.bf16 %v3683
    %v3886 = vunpack.c.l.bf16 %v3684
    %v3887 = vunpack.c.h.bf16 %v3684
    %v3888 = vunpack.c.l.bf16 %v3685
    %v3889 = vunpack.c.h.bf16 %v3685
    %v3890 = vunpack.c.l.bf16 %v3686
    %v3891 = vunpack.c.h.bf16 %v3686
    %v3892 = vunpack.c.l.bf16 %v3687
    %v3893 = vunpack.c.h.bf16 %v3687
    %v3894 = vunpack.c.l.bf16 %v3688
    %v3895 = vunpack.c.h.bf16 %v3688
    %v3896 = vunpack.c.l.bf16 %v3689
    %v3897 = vunpack.c.h.bf16 %v3689
    %v3898 = vunpack.c.l.bf16 %v3690
    %v3899 = vunpack.c.h.bf16 %v3690
    %v3900 = vunpack.c.l.bf16 %v3691
    %v3901 = vunpack.c.h.bf16 %v3691
    %v3902 = vunpack.c.l.bf16 %v3692
    %v3903 = vunpack.c.h.bf16 %v3692
    %v3904 = vunpack.c.l.bf16 %v3693
    %v3905 = vunpack.c.h.bf16 %v3693
    %v3906 = vunpack.c.l.bf16 %v3694
    %v3907 = vunpack.c.h.bf16 %v3694
    %v3908 = vunpack.c.l.bf16 %v3695
    %v3909 = vunpack.c.h.bf16 %v3695
    %v3910 = vunpack.c.l.bf16 %v3696
    %v3911 = vunpack.c.h.bf16 %v3696
    %v3912 = vunpack.c.l.bf16 %v3697
    %v3913 = vunpack.c.h.bf16 %v3697
    %v3914 = vunpack.c.l.bf16 %v3698
    %v3915 = vunpack.c.h.bf16 %v3698
    %v3916 = vunpack.c.l.bf16 %v3699
    %v3917 = vunpack.c.h.bf16 %v3699
    %v3918 = vunpack.c.l.bf16 %v3700
    %v3919 = vunpack.c.h.bf16 %v3700
    %v3920 = vunpack.c.l.bf16 %v3701
    %v3921 = vunpack.c.h.bf16 %v3701
    %v3922 = vunpack.c.l.bf16 %v3702
    %v3923 = vunpack.c.h.bf16 %v3702
    %v3924 = vunpack.c.l.bf16 %v3703
    %v3925 = vunpack.c.h.bf16 %v3703
    %v3926 = vunpack.c.l.bf16 %v3704
    %v3927 = vunpack.c.h.bf16 %v3704
    %v3928 = vunpack.c.l.bf16 %v3705
    %v3929 = vunpack.c.h.bf16 %v3705
    %v3930 = vunpack.c.l.bf16 %v3706
    %v3931 = vunpack.c.h.bf16 %v3706
    %v3932 = vunpack.c.l.bf16 %v3707
    %v3933 = vunpack.c.h.bf16 %v3707
    %v3934 = vunpack.c.l.bf16 %v3708
    %v3935 = vunpack.c.h.bf16 %v3708
    %v3936 = vunpack.c.l.bf16 %v3709
    %v3937 = vunpack.c.h.bf16 %v3709
    %v3938 = vunpack.c.l.bf16 %v3710
    %v3939 = vunpack.c.h.bf16 %v3710
    %v3940 = vunpack.c.l.bf16 %v3711
    %v3941 = vunpack.c.h.bf16 %v3711
    %v3942 = vunpack.c.l.bf16 %v3712
    %v3943 = vunpack.c.h.bf16 %v3712
    %v3944 = vunpack.c.l.bf16 %v3713
    %v3945 = vunpack.c.h.bf16 %v3713
    %v3946 = vunpack.c.l.bf16 %v3714
    %v3947 = vunpack.c.h.bf16 %v3714
    %v3948 = vunpack.c.l.bf16 %v3715
    %v3949 = vunpack.c.h.bf16 %v3715
    %v3950 = vunpack.c.l.bf16 %v3716
    %v3951 = vunpack.c.h.bf16 %v3716
    %v3952 = vunpack.c.l.bf16 %v3717
    %v3953 = vunpack.c.h.bf16 %v3717
    %v3954 = vunpack.c.l.bf16 %v3718
    %v3955 = vunpack.c.h.bf16 %v3718
    %v3956 = vunpack.c.l.bf16 %v3719
    %v3957 = vunpack.c.h.bf16 %v3719
    %v3958 = vunpack.c.l.bf16 %v3720
    %v3959 = vunpack.c.h.bf16 %v3720
    %v3960 = vunpack.c.l.bf16 %v3721
    %v3961 = vunpack.c.h.bf16 %v3721
    %v3962 = vunpack.c.l.bf16 %v3722
    %v3963 = vunpack.c.h.bf16 %v3722
    %v3964 = vunpack.c.l.bf16 %v3723
    %v3965 = vunpack.c.h.bf16 %v3723
    %v3966 = vunpack.c.l.bf16 %v3724
    %v3967 = vunpack.c.h.bf16 %v3724
    %v3968 = vunpack.c.l.bf16 %v3725
    %v3969 = vunpack.c.h.bf16 %v3725
    %v3970 = vunpack.c.l.bf16 %v3726
    %v3971 = vunpack.c.h.bf16 %v3726
    %v3972 = vunpack.c.l.bf16 %v3727
    %v3973 = vunpack.c.h.bf16 %v3727
    %v3974 = vunpack.c.l.bf16 %v3728
    %v3975 = vunpack.c.h.bf16 %v3728
    %v3976 = vunpack.c.l.bf16 %v3729
    %v3977 = vunpack.c.h.bf16 %v3729
    %v3978 = vunpack.c.l.bf16 %v3730
    %v3979 = vunpack.c.h.bf16 %v3730
    %v3980 = vunpack.c.l.bf16 %v3731
    %v3981 = vunpack.c.h.bf16 %v3731
    %v3982 = vunpack.c.l.bf16 %v3732
    %v3983 = vunpack.c.h.bf16 %v3732
    %v3984 = vunpack.c.l.bf16 %v3733
    %v3985 = vunpack.c.h.bf16 %v3733
    %v3986 = vunpack.c.l.bf16 %v3734
    %v3987 = vunpack.c.h.bf16 %v3734
    %v3988 = vunpack.c.l.bf16 %v3735
    %v3989 = vunpack.c.h.bf16 %v3735
    %v3990 = vunpack.c.l.bf16 %v3736
    %v3991 = vunpack.c.h.bf16 %v3736
    %v3992 = vunpack.c.l.bf16 %v3737
    %v3993 = vunpack.c.h.bf16 %v3737
    %v3994 = vld [vmem:[#allocation14] sm:$0xf]
    %v3996 = vlaneseq
    %v3997 = vshrl.u32 %v3996, 7
    %v3998 = vsub.s32 0, %v3997
    %v3999 = vrot.slane %v3994, %v3998
    %v4000 = vlaneseq
    %v4001 = vshrl.u32 %v4000, 7
    %v4002 = vsub.s32 1, %v4001
    %v4003 = vrot.slane %v3994, %v4002
    %v4004 = vlaneseq
    %v4005 = vshrl.u32 %v4004, 7
    %v4006 = vsub.s32 2, %v4005
    %v4007 = vrot.slane %v3994, %v4006
    %v4008 = vlaneseq
    %v4009 = vshrl.u32 %v4008, 7
    %v4010 = vsub.s32 3, %v4009
    %v4011 = vrot.slane %v3994, %v4010
    %4016 = vmatprep.subr.mxu0 %v3799
    %4017 = vmatpush1.msra.mxu0 %v3798
    %4018 = vmatprep.subr.mxu0 %v3795
    %4019 = vmatpush1.msra.mxu0 %v3794
    %4020 = vmatprep.subr.mxu0 %v3791
    %4021 = vmatpush1.msra.mxu0 %v3790
    %4022 = vmatprep.subr.mxu0 %v3787
    %4023 = vmatpush1.msra.mxu0 %v3786
    %4024 = vmatprep.subr.mxu0 %v3783
    %4025 = vmatpush1.msra.mxu0 %v3782
    %4026 = vmatprep.subr.mxu0 %v3779
    %4027 = vmatpush1.msra.mxu0 %v3778
    %4028 = vmatprep.subr.mxu0 %v3775
    %4029 = vmatpush1.msra.mxu0 %v3774
    %4030 = vmatprep.subr.mxu0 %v3771
    %4031 = vmatpush1.msra.mxu0 %v3770
    %4032 = vmatprep.subr.mxu0 %v3767
    %4033 = vmatpush1.msra.mxu0 %v3766
    %4034 = vmatprep.subr.mxu0 %v3763
    %4035 = vmatpush1.msra.mxu0 %v3762
    %4036 = vmatprep.subr.mxu0 %v3759
    %4037 = vmatpush1.msra.mxu0 %v3758
    %4038 = vmatprep.subr.mxu0 %v3755
    %4039 = vmatpush1.msra.mxu0 %v3754
    %4040 = vmatprep.subr.mxu0 %v3751
    %4041 = vmatpush1.msra.mxu0 %v3750
    %4042 = vmatprep.subr.mxu0 %v3747
    %4043 = vmatpush1.msra.mxu0 %v3746
    %4044 = vmatprep.subr.mxu0 %v3743
    %4045 = vmatpush1.msra.mxu0 %v3742
    %4046 = vmatprep.subr.mxu0 %v3739
    %4047 = vmatpush1.msra.mxu0 %v3738
    %4048 = vmatprep.subr.mxu0 %v3863
    %4049 = vmatpush2.msra.mxu0 %v3862
    %4050 = vmatprep.subr.mxu0 %v3859
    %4051 = vmatpush2.msra.mxu0 %v3858
    %4052 = vmatprep.subr.mxu0 %v3855
    %4053 = vmatpush2.msra.mxu0 %v3854
    %4054 = vmatprep.subr.mxu0 %v3851
    %4055 = vmatpush2.msra.mxu0 %v3850
    %4056 = vmatprep.subr.mxu0 %v3847
    %4057 = vmatpush2.msra.mxu0 %v3846
    %4058 = vmatprep.subr.mxu0 %v3843
    %4059 = vmatpush2.msra.mxu0 %v3842
    %4060 = vmatprep.subr.mxu0 %v3839
    %4061 = vmatpush2.msra.mxu0 %v3838
    %4062 = vmatprep.subr.mxu0 %v3835
    %4063 = vmatpush2.msra.mxu0 %v3834
    %4064 = vmatprep.subr.mxu0 %v3831
    %4065 = vmatpush2.msra.mxu0 %v3830
    %4066 = vmatprep.subr.mxu0 %v3827
    %4067 = vmatpush2.msra.mxu0 %v3826
    %4068 = vmatprep.subr.mxu0 %v3823
    %4069 = vmatpush2.msra.mxu0 %v3822
    %4070 = vmatprep.subr.mxu0 %v3819
    %4071 = vmatpush2.msra.mxu0 %v3818
    %4072 = vmatprep.subr.mxu0 %v3815
    %4073 = vmatpush2.msra.mxu0 %v3814
    %4074 = vmatprep.subr.mxu0 %v3811
    %4075 = vmatpush2.msra.mxu0 %v3810
    %4076 = vmatprep.subr.mxu0 %v3807
    %4077 = vmatpush2.msra.mxu0 %v3806
    %4078 = vmatprep.subr.mxu0 %v3803
    %4079 = vmatpush2.msra.mxu0 %v3802
    %4080 = vmatprep.mubr.f32.mxu0 %v3607
    %4081 = vmatmul.mubr.f32.gmra.mxu0 %v3606
    %v4082 = vpop.f32.mrf.mxu0
    %v4083 = vadd.f32 %v3999, %v4082
    %v4084 = vpop.f32.mrf.mxu0
    %v4085 = vadd.f32 %v4003, %v4084
    %4086 = vdwg.mxu0
    %4087 = vmatprep.subr.mxu0 %v3927
    %4088 = vmatpush1.msra.mxu0 %v3926
    %4089 = vmatprep.subr.mxu0 %v3923
    %4090 = vmatpush1.msra.mxu0 %v3922
    %4091 = vmatprep.subr.mxu0 %v3919
    %4092 = vmatpush1.msra.mxu0 %v3918
    %4093 = vmatprep.subr.mxu0 %v3915
    %4094 = vmatpush1.msra.mxu0 %v3914
    %4095 = vmatprep.subr.mxu0 %v3911
    %4096 = vmatpush1.msra.mxu0 %v3910
    %4097 = vmatprep.subr.mxu0 %v3907
    %4098 = vmatpush1.msra.mxu0 %v3906
    %4099 = vmatprep.subr.mxu0 %v3903
    %4100 = vmatpush1.msra.mxu0 %v3902
    %4101 = vmatprep.subr.mxu0 %v3899
    %4102 = vmatpush1.msra.mxu0 %v3898
    %4103 = vmatprep.subr.mxu0 %v3895
    %4104 = vmatpush1.msra.mxu0 %v3894
    %4105 = vmatprep.subr.mxu0 %v3891
    %4106 = vmatpush1.msra.mxu0 %v3890
    %4107 = vmatprep.subr.mxu0 %v3887
    %4108 = vmatpush1.msra.mxu0 %v3886
    %4109 = vmatprep.subr.mxu0 %v3883
    %4110 = vmatpush1.msra.mxu0 %v3882
    %4111 = vmatprep.subr.mxu0 %v3879
    %4112 = vmatpush1.msra.mxu0 %v3878
    %4113 = vmatprep.subr.mxu0 %v3875
    %4114 = vmatpush1.msra.mxu0 %v3874
    %4115 = vmatprep.subr.mxu0 %v3871
    %4116 = vmatpush1.msra.mxu0 %v3870
    %4117 = vmatprep.subr.mxu0 %v3867
    %4118 = vmatpush1.msra.mxu0 %v3866
    %4119 = vmatprep.subr.mxu0 %v3991
    %4120 = vmatpush2.msra.mxu0 %v3990
    %4121 = vmatprep.subr.mxu0 %v3987
    %4122 = vmatpush2.msra.mxu0 %v3986
    %4123 = vmatprep.subr.mxu0 %v3983
    %4124 = vmatpush2.msra.mxu0 %v3982
    %4125 = vmatprep.subr.mxu0 %v3979
    %4126 = vmatpush2.msra.mxu0 %v3978
    %4127 = vmatprep.subr.mxu0 %v3975
    %4128 = vmatpush2.msra.mxu0 %v3974
    %4129 = vmatprep.subr.mxu0 %v3971
    %4130 = vmatpush2.msra.mxu0 %v3970
    %4131 = vmatprep.subr.mxu0 %v3967
    %4132 = vmatpush2.msra.mxu0 %v3966
    %4133 = vmatprep.subr.mxu0 %v3963
    %4134 = vmatpush2.msra.mxu0 %v3962
    %4135 = vmatprep.subr.mxu0 %v3959
    %4136 = vmatpush2.msra.mxu0 %v3958
    %4137 = vmatprep.subr.mxu0 %v3955
    %4138 = vmatpush2.msra.mxu0 %v3954
    %4139 = vmatprep.subr.mxu0 %v3951
    %4140 = vmatpush2.msra.mxu0 %v3950
    %4141 = vmatprep.subr.mxu0 %v3947
    %4142 = vmatpush2.msra.mxu0 %v3946
    %4143 = vmatprep.subr.mxu0 %v3943
    %4144 = vmatpush2.msra.mxu0 %v3942
    %4145 = vmatprep.subr.mxu0 %v3939
    %4146 = vmatpush2.msra.mxu0 %v3938
    %4147 = vmatprep.subr.mxu0 %v3935
    %4148 = vmatpush2.msra.mxu0 %v3934
    %4149 = vmatprep.subr.mxu0 %v3931
    %4150 = vmatpush2.msra.mxu0 %v3930
    %4151 = vmatprep.mubr.f32.mxu0 %v3609
    %4152 = vmatmul.mubr.f32.gmra.mxu0 %v3608
    %v4153 = vpop.f32.mrf.mxu0
    %v4154 = vadd.f32 %v4083, %v4153
    %v4155 = vpop.f32.mrf.mxu0
    %v4156 = vadd.f32 %v4085, %v4155
    %4157 = vdwg.mxu0
    %4158 = vmatprep.subr.mxu0 %v3801
    %4159 = vmatpush1.msra.mxu0 %v3800
    %4160 = vmatprep.subr.mxu0 %v3797
    %4161 = vmatpush1.msra.mxu0 %v3796
    %4162 = vmatprep.subr.mxu0 %v3793
    %4163 = vmatpush1.msra.mxu0 %v3792
    %4164 = vmatprep.subr.mxu0 %v3789
    %4165 = vmatpush1.msra.mxu0 %v3788
    %4166 = vmatprep.subr.mxu0 %v3785
    %4167 = vmatpush1.msra.mxu0 %v3784
    %4168 = vmatprep.subr.mxu0 %v3781
    %4169 = vmatpush1.msra.mxu0 %v3780
    %4170 = vmatprep.subr.mxu0 %v3777
    %4171 = vmatpush1.msra.mxu0 %v3776
    %4172 = vmatprep.subr.mxu0 %v3773
    %4173 = vmatpush1.msra.mxu0 %v3772
    %4174 = vmatprep.subr.mxu0 %v3769
    %4175 = vmatpush1.msra.mxu0 %v3768
    %4176 = vmatprep.subr.mxu0 %v3765
    %4177 = vmatpush1.msra.mxu0 %v3764
    %4178 = vmatprep.subr.mxu0 %v3761
    %4179 = vmatpush1.msra.mxu0 %v3760
    %4180 = vmatprep.subr.mxu0 %v3757
    %4181 = vmatpush1.msra.mxu0 %v3756
    %4182 = vmatprep.subr.mxu0 %v3753
    %4183 = vmatpush1.msra.mxu0 %v3752
    %4184 = vmatprep.subr.mxu0 %v3749
    %4185 = vmatpush1.msra.mxu0 %v3748
    %4186 = vmatprep.subr.mxu0 %v3745
    %4187 = vmatpush1.msra.mxu0 %v3744
    %4188 = vmatprep.subr.mxu0 %v3741
    %4189 = vmatpush1.msra.mxu0 %v3740
    %4190 = vmatprep.subr.mxu0 %v3865
    %4191 = vmatpush2.msra.mxu0 %v3864
    %4192 = vmatprep.subr.mxu0 %v3861
    %4193 = vmatpush2.msra.mxu0 %v3860
    %4194 = vmatprep.subr.mxu0 %v3857
    %4195 = vmatpush2.msra.mxu0 %v3856
    %4196 = vmatprep.subr.mxu0 %v3853
    %4197 = vmatpush2.msra.mxu0 %v3852
    %4198 = vmatprep.subr.mxu0 %v3849
    %4199 = vmatpush2.msra.mxu0 %v3848
    %4200 = vmatprep.subr.mxu0 %v3845
    %4201 = vmatpush2.msra.mxu0 %v3844
    %4202 = vmatprep.subr.mxu0 %v3841
    %4203 = vmatpush2.msra.mxu0 %v3840
    %4204 = vmatprep.subr.mxu0 %v3837
    %4205 = vmatpush2.msra.mxu0 %v3836
    %4206 = vmatprep.subr.mxu0 %v3833
    %4207 = vmatpush2.msra.mxu0 %v3832
    %4208 = vmatprep.subr.mxu0 %v3829
    %4209 = vmatpush2.msra.mxu0 %v3828
    %4210 = vmatprep.subr.mxu0 %v3825
    %4211 = vmatpush2.msra.mxu0 %v3824
    %4212 = vmatprep.subr.mxu0 %v3821
    %4213 = vmatpush2.msra.mxu0 %v3820
    %4214 = vmatprep.subr.mxu0 %v3817
    %4215 = vmatpush2.msra.mxu0 %v3816
    %4216 = vmatprep.subr.mxu0 %v3813
    %4217 = vmatpush2.msra.mxu0 %v3812
    %4218 = vmatprep.subr.mxu0 %v3809
    %4219 = vmatpush2.msra.mxu0 %v3808
    %4220 = vmatprep.subr.mxu0 %v3805
    %4221 = vmatpush2.msra.mxu0 %v3804
    %4222 = vmatprep.mubr.f32.mxu0 %v3607
    %4223 = vmatmul.mubr.f32.gmra.mxu0 %v3606
    %v4224 = vpop.f32.mrf.mxu0
    %v4225 = vadd.f32 %v4007, %v4224
    %v4226 = vpop.f32.mrf.mxu0
    %v4227 = vadd.f32 %v4011, %v4226
    %4228 = vdwg.mxu0
    %4229 = vmatprep.subr.mxu0 %v3929
    %4230 = vmatpush1.msra.mxu0 %v3928
    %4231 = vmatprep.subr.mxu0 %v3925
    %4232 = vmatpush1.msra.mxu0 %v3924
    %4233 = vmatprep.subr.mxu0 %v3921
    %4234 = vmatpush1.msra.mxu0 %v3920
    %4235 = vmatprep.subr.mxu0 %v3917
    %4236 = vmatpush1.msra.mxu0 %v3916
    %4237 = vmatprep.subr.mxu0 %v3913
    %4238 = vmatpush1.msra.mxu0 %v3912
    %4239 = vmatprep.subr.mxu0 %v3909
    %4240 = vmatpush1.msra.mxu0 %v3908
    %4241 = vmatprep.subr.mxu0 %v3905
    %4242 = vmatpush1.msra.mxu0 %v3904
    %4243 = vmatprep.subr.mxu0 %v3901
    %4244 = vmatpush1.msra.mxu0 %v3900
    %4245 = vmatprep.subr.mxu0 %v3897
    %4246 = vmatpush1.msra.mxu0 %v3896
    %4247 = vmatprep.subr.mxu0 %v3893
    %4248 = vmatpush1.msra.mxu0 %v3892
    %4249 = vmatprep.subr.mxu0 %v3889
    %4250 = vmatpush1.msra.mxu0 %v3888
    %4251 = vmatprep.subr.mxu0 %v3885
    %4252 = vmatpush1.msra.mxu0 %v3884
    %4253 = vmatprep.subr.mxu0 %v3881
    %4254 = vmatpush1.msra.mxu0 %v3880
    %4255 = vmatprep.subr.mxu0 %v3877
    %4256 = vmatpush1.msra.mxu0 %v3876
    %4257 = vmatprep.subr.mxu0 %v3873
    %4258 = vmatpush1.msra.mxu0 %v3872
    %4259 = vmatprep.subr.mxu0 %v3869
    %4260 = vmatpush1.msra.mxu0 %v3868
    %4261 = vmatprep.subr.mxu0 %v3993
    %4262 = vmatpush2.msra.mxu0 %v3992
    %4263 = vmatprep.subr.mxu0 %v3989
    %4264 = vmatpush2.msra.mxu0 %v3988
    %4265 = vmatprep.subr.mxu0 %v3985
    %4266 = vmatpush2.msra.mxu0 %v3984
    %4267 = vmatprep.subr.mxu0 %v3981
    %4268 = vmatpush2.msra.mxu0 %v3980
    %4269 = vmatprep.subr.mxu0 %v3977
    %4270 = vmatpush2.msra.mxu0 %v3976
    %4271 = vmatprep.subr.mxu0 %v3973
    %4272 = vmatpush2.msra.mxu0 %v3972
    %4273 = vmatprep.subr.mxu0 %v3969
    %4274 = vmatpush2.msra.mxu0 %v3968
    %4275 = vmatprep.subr.mxu0 %v3965
    %4276 = vmatpush2.msra.mxu0 %v3964
    %4277 = vmatprep.subr.mxu0 %v3961
    %4278 = vmatpush2.msra.mxu0 %v3960
    %4279 = vmatprep.subr.mxu0 %v3957
    %4280 = vmatpush2.msra.mxu0 %v3956
    %4281 = vmatprep.subr.mxu0 %v3953
    %4282 = vmatpush2.msra.mxu0 %v3952
    %4283 = vmatprep.subr.mxu0 %v3949
    %4284 = vmatpush2.msra.mxu0 %v3948
    %4285 = vmatprep.subr.mxu0 %v3945
    %4286 = vmatpush2.msra.mxu0 %v3944
    %4287 = vmatprep.subr.mxu0 %v3941
    %4288 = vmatpush2.msra.mxu0 %v3940
    %4289 = vmatprep.subr.mxu0 %v3937
    %4290 = vmatpush2.msra.mxu0 %v3936
    %4291 = vmatprep.subr.mxu0 %v3933
    %4292 = vmatpush2.msra.mxu0 %v3932
    %4293 = vmatprep.mubr.f32.mxu0 %v3609
    %4294 = vmatmul.mubr.f32.gmra.mxu0 %v3608
    %v4295 = vpop.f32.mrf.mxu0
    %v4296 = vadd.f32 %v4225, %v4295
    %v4297 = vpop.f32.mrf.mxu0
    %v4298 = vadd.f32 %v4227, %v4297
    %4299 = vdwg.mxu0
    %vm4300 = vcmp.gt.f32.partialorder %v4154, 0.0
    %vm4301 = vcmp.gt.f32.partialorder %v4156, 0.0
    %vm4302 = vcmp.gt.f32.partialorder %v4296, 0.0
    %vm4303 = vcmp.gt.f32.partialorder %v4298, 0.0
    %v4304 = vmul.f32 %v4154, 0.2
    %v4305 = vmul.f32 %v4156, 0.2
    %v4306 = vmul.f32 %v4296, 0.2
    %v4307 = vmul.f32 %v4298, 0.2
    %v4308 = vsel %vm4300, %v4154, %v4304
    %v4309 = vsel %vm4301, %v4156, %v4305
    %v4310 = vsel %vm4302, %v4296, %v4306
    %v4311 = vsel %vm4303, %v4298, %v4307
    %v4312 = vld [vmem:[#allocation16] sm:$0xf]
    %v4313 = vunpack.c.l.bf16 %v4312
    %v4315 = vlaneseq
    %v4316 = vshrl.u32 %v4315, 7
    %v4317 = vsub.s32 0, %v4316
    %v4318 = vrot.slane %v4313, %v4317
    %v4319 = vlaneseq
    %v4320 = vshrl.u32 %v4319, 7
    %v4321 = vsub.s32 2, %v4320
    %v4322 = vrot.slane %v4313, %v4321
    %v4323 = vlaneseq
    %v4324 = vshrl.u32 %v4323, 7
    %v4325 = vsub.s32 4, %v4324
    %v4326 = vrot.slane %v4313, %v4325
    %v4327 = vlaneseq
    %v4328 = vshrl.u32 %v4327, 7
    %v4329 = vsub.s32 6, %v4328
    %v4330 = vrot.slane %v4313, %v4329
    %v4335 = vlaneseq
    %v4336 = vshrl.u32 %v4335, 7
    %v4337 = vsub.s32 0, %v4336
    %v4338 = vrot.slane %v4318, %v4337
    %v4339 = vlaneseq
    %v4340 = vshrl.u32 %v4339, 7
    %v4341 = vsub.s32 0, %v4340
    %v4342 = vrot.slane %v4322, %v4341
    %v4343 = vlaneseq
    %v4344 = vshrl.u32 %v4343, 7
    %v4345 = vsub.s32 0, %v4344
    %v4346 = vrot.slane %v4326, %v4345
    %v4347 = vlaneseq
    %v4348 = vshrl.u32 %v4347, 7
    %v4349 = vsub.s32 0, %v4348
    %v4350 = vrot.slane %v4330, %v4349
    %v4351 = vmul.f32 %v4308, %v4338
    %v4352 = vmul.f32 %v4309, %v4342
    %v4353 = vmul.f32 %v4310, %v4346
    %v4354 = vmul.f32 %v4311, %v4350
    %vm4355 = vcmask 1043456
    %v4356 = vsel %vm4355, %v4351, 0.0
    %v4357 = vsel %vm4355, %v4352, 0.0
    %v4358 = vadd.f32 %v4356, %v4357
    %v4359 = vsel %vm4355, %v4353, 0.0
    %v4360 = vadd.f32 %v4358, %v4359
    %v4361 = vsel %vm4355, %v4354, 0.0
    %v4362 = vadd.f32 %v4360, %v4361
    %4363 = vadd.xlane.f32.xlu0 %v4362
    %v4364 = vpop.xlane.xlu0 %4363
    %v4365 = vld [vmem:[#allocation17] sm:$0x1]
    %v4367 = vlaneseq
    %v4368 = vshrl.u32 %v4367, 7
    %v4369 = vsub.s32 0, %v4368
    %v4370 = vrot.slane %v4365, %v4369
    %v4372 = vadd.f32 %v4364, %v4370
    %4373 = vst [vmem:[#allocation19] sm:$0xf] %v4372
    // Predicated region
    $region82: #{tpu_custom_call.1} parent=1 // pred_check
      _
    $region83: #{tpu_custom_call.1} parent=1 // pred_check_branch
      %4375 = sbr.rel (0) target = $region85
    $region84: #{tpu_custom_call.1} parent=1 // pred_region
      %s4377 = ssub.s32 64, 64
      %4378 = vsyncadd [#allocation4], %s4377
      %s4380 = sshll.u32 [#allocation19], 4
      %s4381 = int_to_ptr.vmem [resolvable:$true] %s4380
      %4383 = dma.vmem_to_hbm [thread:$0]  %s4381, 64, %s10, [#allocation4]
    $region85: #{tpu_custom_call.1} parent=1 // pred_fallthru
      _
    // Predicated region
    $region86: #{tpu_custom_call.1} parent=1 // pred_check
      _
    $region87: #{tpu_custom_call.1} parent=1 // pred_check_branch
      %4385 = sbr.rel (0) target = $region89
    $region88: #{tpu_custom_call.1} parent=1 // pred_region
      %4386 = dma.done [#allocation4], 64
    $region89: #{tpu_custom_call.1} parent=1 // pred_fallthru
      _
    %4387 = vsyncpa [#allocation3], 1
    %4388 = vsyncpa [#allocation6], 1
    %4389 = vsyncpa [#allocation9], 1
    %4390 = vsyncpa [#allocation12], 1
    %4391 = vsyncpa [#allocation15], 1
    %4392 = vsyncpa [#allocation18], 1
    %4393 = vsyncpa [#allocation4], 1

</llo_original>
